<compile_context>
chip_gen: v5e
topology: v5e:2x2
jax: 0.10.0
libtpu: 0.0.40
codegen_flags: <defaults>
</compile_context>

<pallas_src>
import functools
import math

import jax
import jax.numpy as jnp
from jax.experimental import pallas as pl
from jax.experimental.pallas import tpu as pltpu


# M-tile for the conv-as-matmul kernels.  256 keeps tiles tiny in VMEM on all
# generations (v7x has only 64 MiB physical); 512-1024 is better for very
# large batches on v5e/v6e but 256 already gives pipelined DMA/MXU overlap.
TM_MAX = 256


def _round_up(x, m):
    return (x + m - 1) // m * m


# ----------------------------- Pallas kernels ------------------------------ #

def _mm_shift_kernel(a_ref, w_ref, b_ref, o_ref, *, relu):
    """out = relu?( a @ w_folded + shift );  a/w bf16, f32 accumulate."""
    acc = jnp.dot(a_ref[...], w_ref[...], preferred_element_type=jnp.float32)
    out = acc + b_ref[...]
    if relu:
        out = jnp.maximum(out, 0.0)
    o_ref[...] = out.astype(o_ref.dtype)


def _mm_shift_res_kernel(a_ref, w_ref, b_ref, r_ref, o_ref):
    """out = relu( a @ w_folded + shift + residual )  (DomainBlock tail).
    ReLU is unconditional here, matching BasicBlock/DomainBlock.forward."""
    acc = jnp.dot(a_ref[...], w_ref[...], preferred_element_type=jnp.float32)
    out = acc + b_ref[...] + r_ref[...].astype(jnp.float32)
    o_ref[...] = jnp.maximum(out, 0.0).astype(o_ref.dtype)


def _dual_mm_shift_kernel(a_ref, w_ref, b_ref, ad_ref, wd_ref, bd_ref, o_ref):
    """out = relu( a@w + shift + a_ds@w_ds + shift_ds ).
    Fuses conv2+GraphBN with the 1x1-stride-2 downsample+GraphBN residual."""
    acc = jnp.dot(a_ref[...], w_ref[...], preferred_element_type=jnp.float32)
    acc = acc + jnp.dot(ad_ref[...], wd_ref[...],
                        preferred_element_type=jnp.float32)
    out = acc + b_ref[...] + bd_ref[...]
    o_ref[...] = jnp.maximum(out, 0.0).astype(o_ref.dtype)


def _pool_fc_kernel(x_ref, w_ref, b_ref, o_ref):
    """logits = mean_S(x) @ W + b  (AvgPool2d(7) on a 7x7 map == global mean)."""
    pooled = jnp.mean(x_ref[...].astype(jnp.float32), axis=1)
    out = jnp.dot(pooled, w_ref[...], preferred_element_type=jnp.float32)
    o_ref[...] = (out + b_ref[...]).astype(o_ref.dtype)


# ---------------------------- pallas_call wrappers -------------------------- #

def matmul_shift_act(a, w, shift, *, residual=None, relu=True,
                     out_dtype=jnp.bfloat16):
    """M-tiled fused matmul + per-channel shift [+ residual] [+ ReLU]."""
    M, K = a.shape
    K2, N = w.shape
    assert K == K2
    TM = min(TM_MAX, _round_up(M, 8))
    Mp = _round_up(M, TM)
    if Mp != M:                                   # zero-pad ragged M tail
        a = jnp.pad(a, ((0, Mp - M), (0, 0)))
        if residual is not None:
            residual = jnp.pad(residual, ((0, Mp - M), (0, 0)))
    shift2 = shift.reshape(1, N).astype(jnp.float32)

    a_spec = pl.BlockSpec((TM, K), lambda i: (i, 0))
    w_spec = pl.BlockSpec((K, N), lambda i: (0, 0))   # constant map -> hoisted
    b_spec = pl.BlockSpec((1, N), lambda i: (0, 0))
    o_spec = pl.BlockSpec((TM, N), lambda i: (i, 0))
    cparams = pltpu.CompilerParams(dimension_semantics=("parallel",))
    out_shape = jax.ShapeDtypeStruct((Mp, N), out_dtype)

    if residual is None:
        out = pl.pallas_call(
            functools.partial(_mm_shift_kernel, relu=relu),
            out_shape=out_shape, grid=(Mp // TM,),
            in_specs=[a_spec, w_spec, b_spec], out_specs=o_spec,
            compiler_params=cparams,
        )(a, w, shift2)
    else:
        r_spec = pl.BlockSpec((TM, N), lambda i: (i, 0))
        out = pl.pallas_call(
            _mm_shift_res_kernel,
            out_shape=out_shape, grid=(Mp // TM,),
            in_specs=[a_spec, w_spec, b_spec, r_spec], out_specs=o_spec,
            compiler_params=cparams,
        )(a, w, shift2, residual)
    return out[:M] if Mp != M else out


def dual_matmul_shift_relu(a1, w1, s1, a2, w2, s2, *, out_dtype=jnp.bfloat16):
    """out = relu(a1@w1 + s1 + a2@w2 + s2), M-tiled; a1/a2 share the row index."""
    M, K1 = a1.shape
    M2, K2 = a2.shape
    assert M == M2
    N = w1.shape[1]
    TM = min(TM_MAX, _round_up(M, 8))
    Mp = _round_up(M, TM)
    if Mp != M:
        a1 = jnp.pad(a1, ((0, Mp - M), (0, 0)))
        a2 = jnp.pad(a2, ((0, Mp - M), (0, 0)))
    s1v = s1.reshape(1, N).astype(jnp.float32)
    s2v = s2.reshape(1, N).astype(jnp.float32)

    out = pl.pallas_call(
        _dual_mm_shift_kernel,
        out_shape=jax.ShapeDtypeStruct((Mp, N), out_dtype),
        grid=(Mp // TM,),
        in_specs=[pl.BlockSpec((TM, K1), lambda i: (i, 0)),
                  pl.BlockSpec((K1, N), lambda i: (0, 0)),
                  pl.BlockSpec((1, N), lambda i: (0, 0)),
                  pl.BlockSpec((TM, K2), lambda i: (i, 0)),
                  pl.BlockSpec((K2, N), lambda i: (0, 0)),
                  pl.BlockSpec((1, N), lambda i: (0, 0))],
        out_specs=pl.BlockSpec((TM, N), lambda i: (i, 0)),
        compiler_params=pltpu.CompilerParams(
            dimension_semantics=("parallel",)),
    )(a1, w1, s1v, a2, w2, s2v)
    return out[:M] if Mp != M else out


def avgpool_fc(x_nsc, fc_w, fc_b):
    """Fused AvgPool2d(7) + Linear: [N, S, C] -> [N, num_classes] (f32)."""
    Nb, S, C = x_nsc.shape
    num_classes = fc_w.shape[1]
    return pl.pallas_call(
        _pool_fc_kernel,
        out_shape=jax.ShapeDtypeStruct((Nb, num_classes), jnp.float32),
        grid=(1,),
        in_specs=[pl.BlockSpec((Nb, S, C), lambda i: (0, 0, 0)),
                  pl.BlockSpec((C, num_classes), lambda i: (0, 0)),
                  pl.BlockSpec((1, num_classes), lambda i: (0, 0))],
        out_specs=pl.BlockSpec((Nb, num_classes), lambda i: (0, 0)),
    )(x_nsc, fc_w.astype(jnp.float32),
      fc_b.reshape(1, num_classes).astype(jnp.float32))


# ------------------------------- JAX glue ---------------------------------- #

def im2col(x, kh, kw, stride, pad):
    """x: [N, H, W, C] (bf16) -> patches [N*OH*OW, kh*kw*C], row-major (kh,kw,C)."""
    # TODO(synk): build the kh*kw taps inside the kernel (shifted-matmul
    # accumulation over a VMEM-resident activation tile) to remove the 9x/49x
    # im2col HBM amplification; kept in XLA here for lowering robustness.
    Nb, H, W, C = x.shape
    xp = jnp.pad(x, ((0, 0), (pad, pad), (pad, pad), (0, 0)))
    OH = (H + 2 * pad - kh) // stride + 1
    OW = (W + 2 * pad - kw) // stride + 1
    cols = []
    for i in range(kh):
        for j in range(kw):
            cols.append(xp[:, i:i + stride * OH:stride, j:j + stride * OW:stride, :])
    patches = jnp.stack(cols, axis=3)                 # [N, OH, OW, kh*kw, C]
    return patches.reshape(Nb * OH * OW, kh * kw * C), OH, OW, Nb


def gbn_scale_shift(p, t, eps=1e-5):
    """GraphBN (eval): per-domain BN params folded to scale/shift."""
    w, b = p["weight"][t], p["bias"][t]
    m, v = p["mean"][t], p["var"][t]
    scale = w * jax.lax.rsqrt(v + eps)
    shift = b - m * scale
    return scale, shift


def fold_conv_gbn(w_hwio, gbn, t):
    """Fold the GraphBN scale into the flattened HWIO conv weight -> bf16."""
    kh, kw, cin, cout = w_hwio.shape
    scale, shift = gbn_scale_shift(gbn, t)
    wmat = (w_hwio.reshape(kh * kw * cin, cout) * scale[None, :])
    return wmat.astype(jnp.bfloat16), shift


def conv_gbn(x, w_hwio, gbn, t, stride, pad, *, relu=True, residual=None):
    """conv2d (no bias) + GraphBN [+ residual] [+ ReLU] in one pallas_call."""
    kh, kw, cin, cout = w_hwio.shape
    patches, OH, OW, Nb = im2col(x, kh, kw, stride, pad)
    wmat, shift = fold_conv_gbn(w_hwio, gbn, t)
    K = kh * kw * cin
    Kp = _round_up(K, 16)                       # bf16 sublane-pack alignment
    if Kp != K:                                 # conv1: 147 -> 160
        patches = jnp.pad(patches, ((0, 0), (0, Kp - K)))
        wmat = jnp.pad(wmat, ((0, Kp - K), (0, 0)))
    res = None if residual is None else residual.reshape(-1, cout)
    out = matmul_shift_act(patches, wmat, shift, residual=res, relu=relu)
    return out.reshape(Nb, OH, OW, cout)


def block_tail_with_downsample(out_act, w2_hwio, bn2, x_in, wds_hwio, bnds, t,
                               ds_stride):
    """relu( conv3x3s1p1(out)+GraphBN  +  (1x1 s2 conv(x)+GraphBN) )  fused."""
    kh, kw, cin2, cout = w2_hwio.shape
    patches, OH, OW, Nb = im2col(out_act, kh, kw, 1, 1)
    w2, shift2 = fold_conv_gbn(w2_hwio, bn2, t)
    # 1x1 stride-s conv "im2col" is just the strided spatial subsample.
    a_ds = x_in[:, ::ds_stride, ::ds_stride, :].reshape(-1, wds_hwio.shape[2])
    wds, shiftd = fold_conv_gbn(wds_hwio, bnds, t)
    out = dual_matmul_shift_relu(patches, w2, shift2, a_ds, wds, shiftd)
    return out.reshape(Nb, OH, OW, cout)


# ------------------------- parameter initialization ------------------------ #

def kaiming_conv(key, kh, kw, cin, cout):
    # kaiming_normal_(mode='fan_out', nonlinearity='relu')
    std = math.sqrt(2.0 / (kh * kw * cout))
    return std * jax.random.normal(key, (kh, kw, cin, cout), jnp.float32)


def init_gbn(key, c, domains):
    k1, k2, k3 = jax.random.split(key, 3)
    return {
        "weight": 1.0 + 0.1 * jax.random.normal(k1, (domains, c), jnp.float32),
        "bias": 0.1 * jax.random.normal(k2, (domains, c), jnp.float32),
        "mean": 0.05 * jax.random.normal(k3, (domains, c), jnp.float32),
        "var": jnp.ones((domains, c), jnp.float32),
    }


def init_params(key, domains=4, num_classes=10):
    keys = iter(jax.random.split(key, 20))
    p = {}
    p["conv1"] = kaiming_conv(next(keys), 7, 7, 3, 64)
    p["bn1"] = init_gbn(next(keys), 64, domains)
    # layer1: one DomainBlock(64 -> 64, stride 1, identity residual)
    p["l1_conv1"] = kaiming_conv(next(keys), 3, 3, 64, 64)
    p["l1_bn1"] = init_gbn(next(keys), 64, domains)
    p["l1_conv2"] = kaiming_conv(next(keys), 3, 3, 64, 64)
    p["l1_bn2"] = init_gbn(next(keys), 64, domains)
    # layer2: one DomainBlock(64 -> 128, stride 2, downsample)
    p["l2_conv1"] = kaiming_conv(next(keys), 3, 3, 64, 128)
    p["l2_bn1"] = init_gbn(next(keys), 128, domains)
    p["l2_conv2"] = kaiming_conv(next(keys), 3, 3, 128, 128)
    p["l2_bn2"] = init_gbn(next(keys), 128, domains)
    p["l2_ds_conv"] = kaiming_conv(next(keys), 1, 1, 64, 128)
    p["l2_ds_bn"] = init_gbn(next(keys), 128, domains)
    # fc: Linear(128 * expansion, num_classes), expansion = 1
    fan_in = 128
    bound = 1.0 / math.sqrt(fan_in)
    p["fc_w"] = jax.random.uniform(next(keys), (fan_in, num_classes),
                                   minval=-bound, maxval=bound,
                                   dtype=jnp.float32)
    p["fc_b"] = jax.random.uniform(next(keys), (num_classes,),
                                   minval=-bound, maxval=bound,
                                   dtype=jnp.float32)
    return p


# ------------------------------- forward ----------------------------------- #

def domain_resnet_forward(params, x_nchw, t):
    # NCHW -> NHWC; activations kept in bf16 (all matmuls accumulate in f32).
    x = jnp.transpose(x_nchw, (0, 2, 3, 1)).astype(jnp.bfloat16)

    # stem: conv 7x7 s2 p3 -> GraphBN -> ReLU
    x = conv_gbn(x, params["conv1"], params["bn1"], t, 2, 3, relu=True)

    # layer1 / DomainBlock (identity residual, fused into conv2's kernel)
    out = conv_gbn(x, params["l1_conv1"], params["l1_bn1"], t, 1, 1, relu=True)
    x = conv_gbn(out, params["l1_conv2"], params["l1_bn2"], t, 1, 1,
                 residual=x)

    # layer2 / DomainBlock (stride 2); downsample + conv2 + residual + ReLU
    # run as a single dual-matmul pallas_call (residual never hits HBM).
    out = conv_gbn(x, params["l2_conv1"], params["l2_bn1"], t, 2, 1, relu=True)
    x = block_tail_with_downsample(out, params["l2_conv2"], params["l2_bn2"],
                                   x, params["l2_ds_conv"], params["l2_ds_bn"],
                                   t, ds_stride=2)

    # AvgPool2d(7, stride=1) on the 7x7 map + fc, fused in one kernel.
    Nb, H, W, C = x.shape
    return avgpool_fc(x.reshape(Nb, H * W, C), params["fc_w"], params["fc_b"])


if __name__ == "__main__":
    key = jax.random.PRNGKey(0)
    kp, kx = jax.random.split(key)

    DOMAINS, NUM_CLASSES = 4, 10
    params = init_params(kp, domains=DOMAINS, num_classes=NUM_CLASSES)

    x = jax.random.normal(kx, (2, 3, 28, 28), jnp.float32)   # NCHW like PyTorch
    t = 1                                                     # domain index

    fwd = jax.jit(domain_resnet_forward, static_argnums=(2,))
    logits = fwd(params, x, t)
    jax.block_until_ready(logits)
    assert logits.shape == (2, NUM_CLASSES) and logits.dtype == jnp.float32
    print("KERNEL_OK")
</pallas_src>

<mosaic_0001>
module attributes {stable_mosaic.version = 11 : i64} {
  func.func @_mm_shift_kernel(%arg0: i32, %arg1: memref<256x160xbf16, #tpu.memory_space<vmem>>, %arg2: memref<160x64xbf16, #tpu.memory_space<vmem>>, %arg3: memref<1x64xf32, #tpu.memory_space<vmem>>, %arg4: memref<256x64xbf16, #tpu.memory_space<vmem>>) attributes {dimension_semantics = [#tpu.dimension_semantics<parallel>], iteration_bounds = array<i64: 2>, scalar_prefetch = 0 : i64, scratch_operands = 0 : i64, tpu.core_type = #tpu.core_type<tc>, window_params = [{transform_indices = @transform_0, window_bounds = array<i64: 256, 160>}, {pipeline_mode = #tpu.pipeline_mode<synchronous>, transform_indices = @transform_1, window_bounds = array<i64: 160, 64>}, {pipeline_mode = #tpu.pipeline_mode<synchronous>, transform_indices = @transform_2, window_bounds = array<i64: 1, 64>}, {transform_indices = @transform_3, window_bounds = array<i64: 256, 64>}]} {
    %c0 = arith.constant 0 : index
    %c0_0 = arith.constant 0 : index
    %0 = vector.load %arg1[%c0, %c0_0] : memref<256x160xbf16, #tpu.memory_space<vmem>>, vector<256x160xbf16>
    %c0_1 = arith.constant 0 : index
    %c0_2 = arith.constant 0 : index
    %1 = vector.load %arg2[%c0_1, %c0_2] : memref<160x64xbf16, #tpu.memory_space<vmem>>, vector<160x64xbf16>
    %cst = arith.constant dense<0.000000e+00> : vector<256x64xf32>
    %2 = tpu.matmul %0, %1, %cst {dimension_numbers = #tpu.dot_dimension_numbers<[1], [0], [0], [1], [0, 0, 1, 1], [], []>} : vector<256x160xbf16>, vector<160x64xbf16>, vector<256x64xf32> -> vector<256x64xf32>
    %c0_3 = arith.constant 0 : index
    %c0_4 = arith.constant 0 : index
    %3 = vector.load %arg3[%c0_3, %c0_4] : memref<1x64xf32, #tpu.memory_space<vmem>>, vector<1x64xf32>
    %4 = vector.broadcast %3 : vector<1x64xf32> to vector<256x64xf32>
    %5 = arith.addf %2, %4 : vector<256x64xf32>
    %cst_5 = arith.constant 0.000000e+00 : f32
    %6 = vector.broadcast %cst_5 : f32 to vector<256x64xf32>
    %7 = arith.maximumf %5, %6 : vector<256x64xf32>
    %8 = arith.truncf %7 : vector<256x64xf32> to vector<256x64xbf16>
    %c0_6 = arith.constant 0 : index
    %c0_7 = arith.constant 0 : index
    %9 = vector.load %arg4[%c0_6, %c0_7] : memref<256x64xbf16, #tpu.memory_space<vmem>>, vector<256x64xbf16>
    tpu.vector_store %arg4[%c0_6, %c0_7], %8 {strides = array<i32>} : memref<256x64xbf16, #tpu.memory_space<vmem>>, vector<256x64xbf16>,
    return
  }
  func.func @transform_0(%arg0: i32) -> (i32, i32) {
    %c0_i32 = arith.constant 0 : i32
    %c0_i32_0 = arith.constant 0 : i32
    return %arg0, %c0_i32 : i32, i32
  }
  func.func @transform_1(%arg0: i32) -> (i32, i32) {
    %c0_i32 = arith.constant 0 : i32
    %c0_i32_0 = arith.constant 0 : i32
    %c0_i32_1 = arith.constant 0 : i32
    return %c0_i32, %c0_i32_0 : i32, i32
  }
  func.func @transform_2(%arg0: i32) -> (i32, i32) {
    %c0_i32 = arith.constant 0 : i32
    %c0_i32_0 = arith.constant 0 : i32
    %c0_i32_1 = arith.constant 0 : i32
    return %c0_i32, %c0_i32_0 : i32, i32
  }
  func.func @transform_3(%arg0: i32) -> (i32, i32) {
    %c0_i32 = arith.constant 0 : i32
    %c0_i32_0 = arith.constant 0 : i32
    return %arg0, %c0_i32 : i32, i32
  }
}

module attributes {stable_mosaic.version = 11 : i64} {
  func.func @_mm_shift_kernel(%arg0: i32, %arg1: memref<256x576xbf16, #tpu.memory_space<vmem>>, %arg2: memref<576x64xbf16, #tpu.memory_space<vmem>>, %arg3: memref<1x64xf32, #tpu.memory_space<vmem>>, %arg4: memref<256x64xbf16, #tpu.memory_space<vmem>>) attributes {dimension_semantics = [#tpu.dimension_semantics<parallel>], iteration_bounds = array<i64: 2>, scalar_prefetch = 0 : i64, scratch_operands = 0 : i64, tpu.core_type = #tpu.core_type<tc>, window_params = [{transform_indices = @transform_0, window_bounds = array<i64: 256, 576>}, {pipeline_mode = #tpu.pipeline_mode<synchronous>, transform_indices = @transform_1, window_bounds = array<i64: 576, 64>}, {pipeline_mode = #tpu.pipeline_mode<synchronous>, transform_indices = @transform_2, window_bounds = array<i64: 1, 64>}, {transform_indices = @transform_3, window_bounds = array<i64: 256, 64>}]} {
    %c0 = arith.constant 0 : index
    %c0_0 = arith.constant 0 : index
    %0 = vector.load %arg1[%c0, %c0_0] : memref<256x576xbf16, #tpu.memory_space<vmem>>, vector<256x576xbf16>
    %c0_1 = arith.constant 0 : index
    %c0_2 = arith.constant 0 : index
    %1 = vector.load %arg2[%c0_1, %c0_2] : memref<576x64xbf16, #tpu.memory_space<vmem>>, vector<576x64xbf16>
    %cst = arith.constant dense<0.000000e+00> : vector<256x64xf32>
    %2 = tpu.matmul %0, %1, %cst {dimension_numbers = #tpu.dot_dimension_numbers<[1], [0], [0], [1], [0, 0, 1, 1], [], []>} : vector<256x576xbf16>, vector<576x64xbf16>, vector<256x64xf32> -> vector<256x64xf32>
    %c0_3 = arith.constant 0 : index
    %c0_4 = arith.constant 0 : index
    %3 = vector.load %arg3[%c0_3, %c0_4] : memref<1x64xf32, #tpu.memory_space<vmem>>, vector<1x64xf32>
    %4 = vector.broadcast %3 : vector<1x64xf32> to vector<256x64xf32>
    %5 = arith.addf %2, %4 : vector<256x64xf32>
    %cst_5 = arith.constant 0.000000e+00 : f32
    %6 = vector.broadcast %cst_5 : f32 to vector<256x64xf32>
    %7 = arith.maximumf %5, %6 : vector<256x64xf32>
    %8 = arith.truncf %7 : vector<256x64xf32> to vector<256x64xbf16>
    %c0_6 = arith.constant 0 : index
    %c0_7 = arith.constant 0 : index
    %9 = vector.load %arg4[%c0_6, %c0_7] : memref<256x64xbf16, #tpu.memory_space<vmem>>, vector<256x64xbf16>
    tpu.vector_store %arg4[%c0_6, %c0_7], %8 {strides = array<i32>} : memref<256x64xbf16, #tpu.memory_space<vmem>>, vector<256x64xbf16>,
    return
  }
  func.func @transform_0(%arg0: i32) -> (i32, i32) {
    %c0_i32 = arith.constant 0 : i32
    %c0_i32_0 = arith.constant 0 : i32
    return %arg0, %c0_i32 : i32, i32
  }
  func.func @transform_1(%arg0: i32) -> (i32, i32) {
    %c0_i32 = arith.constant 0 : i32
    %c0_i32_0 = arith.constant 0 : i32
    %c0_i32_1 = arith.constant 0 : i32
    return %c0_i32, %c0_i32_0 : i32, i32
  }
  func.func @transform_2(%arg0: i32) -> (i32, i32) {
    %c0_i32 = arith.constant 0 : i32
    %c0_i32_0 = arith.constant 0 : i32
    %c0_i32_1 = arith.constant 0 : i32
    return %c0_i32, %c0_i32_0 : i32, i32
  }
  func.func @transform_3(%arg0: i32) -> (i32, i32) {
    %c0_i32 = arith.constant 0 : i32
    %c0_i32_0 = arith.constant 0 : i32
    return %arg0, %c0_i32 : i32, i32
  }
}

module attributes {stable_mosaic.version = 11 : i64} {
  func.func @_mm_shift_res_kernel(%arg0: i32, %arg1: memref<256x576xbf16, #tpu.memory_space<vmem>>, %arg2: memref<576x64xbf16, #tpu.memory_space<vmem>>, %arg3: memref<1x64xf32, #tpu.memory_space<vmem>>, %arg4: memref<256x64xbf16, #tpu.memory_space<vmem>>, %arg5: memref<256x64xbf16, #tpu.memory_space<vmem>>) attributes {dimension_semantics = [#tpu.dimension_semantics<parallel>], iteration_bounds = array<i64: 2>, scalar_prefetch = 0 : i64, scratch_operands = 0 : i64, tpu.core_type = #tpu.core_type<tc>, window_params = [{transform_indices = @transform_0, window_bounds = array<i64: 256, 576>}, {pipeline_mode = #tpu.pipeline_mode<synchronous>, transform_indices = @transform_1, window_bounds = array<i64: 576, 64>}, {pipeline_mode = #tpu.pipeline_mode<synchronous>, transform_indices = @transform_2, window_bounds = array<i64: 1, 64>}, {transform_indices = @transform_3, window_bounds = array<i64: 256, 64>}, {transform_indices = @transform_4, window_bounds = array<i64: 256, 64>}]} {
    %c0 = arith.constant 0 : index
    %c0_0 = arith.constant 0 : index
    %0 = vector.load %arg1[%c0, %c0_0] : memref<256x576xbf16, #tpu.memory_space<vmem>>, vector<256x576xbf16>
    %c0_1 = arith.constant 0 : index
    %c0_2 = arith.constant 0 : index
    %1 = vector.load %arg2[%c0_1, %c0_2] : memref<576x64xbf16, #tpu.memory_space<vmem>>, vector<576x64xbf16>
    %cst = arith.constant dense<0.000000e+00> : vector<256x64xf32>
    %2 = tpu.matmul %0, %1, %cst {dimension_numbers = #tpu.dot_dimension_numbers<[1], [0], [0], [1], [0, 0, 1, 1], [], []>} : vector<256x576xbf16>, vector<576x64xbf16>, vector<256x64xf32> -> vector<256x64xf32>
    %c0_3 = arith.constant 0 : index
    %c0_4 = arith.constant 0 : index
    %3 = vector.load %arg3[%c0_3, %c0_4] : memref<1x64xf32, #tpu.memory_space<vmem>>, vector<1x64xf32>
    %4 = vector.broadcast %3 : vector<1x64xf32> to vector<256x64xf32>
    %5 = arith.addf %2, %4 : vector<256x64xf32>
    %c0_5 = arith.constant 0 : index
    %c0_6 = arith.constant 0 : index
    %6 = vector.load %arg4[%c0_5, %c0_6] : memref<256x64xbf16, #tpu.memory_space<vmem>>, vector<256x64xbf16>
    %7 = arith.extf %6 : vector<256x64xbf16> to vector<256x64xf32>
    %8 = arith.addf %5, %7 : vector<256x64xf32>
    %cst_7 = arith.constant 0.000000e+00 : f32
    %9 = vector.broadcast %cst_7 : f32 to vector<256x64xf32>
    %10 = arith.maximumf %8, %9 : vector<256x64xf32>
    %11 = arith.truncf %10 : vector<256x64xf32> to vector<256x64xbf16>
    %c0_8 = arith.constant 0 : index
    %c0_9 = arith.constant 0 : index
    %12 = vector.load %arg5[%c0_8, %c0_9] : memref<256x64xbf16, #tpu.memory_space<vmem>>, vector<256x64xbf16>
    tpu.vector_store %arg5[%c0_8, %c0_9], %11 {strides = array<i32>} : memref<256x64xbf16, #tpu.memory_space<vmem>>, vector<256x64xbf16>,
    return
  }
  func.func @transform_0(%arg0: i32) -> (i32, i32) {
    %c0_i32 = arith.constant 0 : i32
    %c0_i32_0 = arith.constant 0 : i32
    return %arg0, %c0_i32 : i32, i32
  }
  func.func @transform_1(%arg0: i32) -> (i32, i32) {
    %c0_i32 = arith.constant 0 : i32
    %c0_i32_0 = arith.constant 0 : i32
    %c0_i32_1 = arith.constant 0 : i32
    return %c0_i32, %c0_i32_0 : i32, i32
  }
  func.func @transform_2(%arg0: i32) -> (i32, i32) {
    %c0_i32 = arith.constant 0 : i32
    %c0_i32_0 = arith.constant 0 : i32
    %c0_i32_1 = arith.constant 0 : i32
    return %c0_i32, %c0_i32_0 : i32, i32
  }
  func.func @transform_3(%arg0: i32) -> (i32, i32) {
    %c0_i32 = arith.constant 0 : i32
    %c0_i32_0 = arith.constant 0 : i32
    return %arg0, %c0_i32 : i32, i32
  }
  func.func @transform_4(%arg0: i32) -> (i32, i32) {
    %c0_i32 = arith.constant 0 : i32
    %c0_i32_0 = arith.constant 0 : i32
    return %arg0, %c0_i32 : i32, i32
  }
}

module attributes {stable_mosaic.version = 11 : i64} {
  func.func @_mm_shift_kernel(%arg0: i32, %arg1: memref<104x576xbf16, #tpu.memory_space<vmem>>, %arg2: memref<576x128xbf16, #tpu.memory_space<vmem>>, %arg3: memref<1x128xf32, #tpu.memory_space<vmem>>, %arg4: memref<104x128xbf16, #tpu.memory_space<vmem>>) attributes {dimension_semantics = [#tpu.dimension_semantics<parallel>], iteration_bounds = array<i64: 1>, scalar_prefetch = 0 : i64, scratch_operands = 0 : i64, tpu.core_type = #tpu.core_type<tc>, window_params = [{transform_indices = @transform_0, window_bounds = array<i64: 104, 576>}, {pipeline_mode = #tpu.pipeline_mode<synchronous>, transform_indices = @transform_1, window_bounds = array<i64: 576, 128>}, {pipeline_mode = #tpu.pipeline_mode<synchronous>, transform_indices = @transform_2, window_bounds = array<i64: 1, 128>}, {transform_indices = @transform_3, window_bounds = array<i64: 104, 128>}]} {
    %c0 = arith.constant 0 : index
    %c0_0 = arith.constant 0 : index
    %0 = vector.load %arg1[%c0, %c0_0] : memref<104x576xbf16, #tpu.memory_space<vmem>>, vector<104x576xbf16>
    %c0_1 = arith.constant 0 : index
    %c0_2 = arith.constant 0 : index
    %1 = vector.load %arg2[%c0_1, %c0_2] : memref<576x128xbf16, #tpu.memory_space<vmem>>, vector<576x128xbf16>
    %cst = arith.constant dense<0.000000e+00> : vector<104x128xf32>
    %2 = tpu.matmul %0, %1, %cst {dimension_numbers = #tpu.dot_dimension_numbers<[1], [0], [0], [1], [0, 0, 1, 1], [], []>} : vector<104x576xbf16>, vector<576x128xbf16>, vector<104x128xf32> -> vector<104x128xf32>
    %c0_3 = arith.constant 0 : index
    %c0_4 = arith.constant 0 : index
    %3 = vector.load %arg3[%c0_3, %c0_4] : memref<1x128xf32, #tpu.memory_space<vmem>>, vector<1x128xf32>
    %4 = vector.broadcast %3 : vector<1x128xf32> to vector<104x128xf32>
    %5 = arith.addf %2, %4 : vector<104x128xf32>
    %cst_5 = arith.constant 0.000000e+00 : f32
    %6 = vector.broadcast %cst_5 : f32 to vector<104x128xf32>
    %7 = arith.maximumf %5, %6 : vector<104x128xf32>
    %8 = arith.truncf %7 : vector<104x128xf32> to vector<104x128xbf16>
    %c0_6 = arith.constant 0 : index
    %c0_7 = arith.constant 0 : index
    %9 = vector.load %arg4[%c0_6, %c0_7] : memref<104x128xbf16, #tpu.memory_space<vmem>>, vector<104x128xbf16>
    tpu.vector_store %arg4[%c0_6, %c0_7], %8 {strides = array<i32>} : memref<104x128xbf16, #tpu.memory_space<vmem>>, vector<104x128xbf16>,
    return
  }
  func.func @transform_0(%arg0: i32) -> (i32, i32) {
    %c0_i32 = arith.constant 0 : i32
    %c0_i32_0 = arith.constant 0 : i32
    return %arg0, %c0_i32 : i32, i32
  }
  func.func @transform_1(%arg0: i32) -> (i32, i32) {
    %c0_i32 = arith.constant 0 : i32
    %c0_i32_0 = arith.constant 0 : i32
    %c0_i32_1 = arith.constant 0 : i32
    return %c0_i32, %c0_i32_0 : i32, i32
  }
  func.func @transform_2(%arg0: i32) -> (i32, i32) {
    %c0_i32 = arith.constant 0 : i32
    %c0_i32_0 = arith.constant 0 : i32
    %c0_i32_1 = arith.constant 0 : i32
    return %c0_i32, %c0_i32_0 : i32, i32
  }
  func.func @transform_3(%arg0: i32) -> (i32, i32) {
    %c0_i32 = arith.constant 0 : i32
    %c0_i32_0 = arith.constant 0 : i32
    return %arg0, %c0_i32 : i32, i32
  }
}

module attributes {stable_mosaic.version = 11 : i64} {
  func.func @_pool_fc_kernel(%arg0: i32, %arg1: memref<2x49x128xbf16, #tpu.memory_space<vmem>>, %arg2: memref<128x10xf32, #tpu.memory_space<vmem>>, %arg3: memref<1x10xf32, #tpu.memory_space<vmem>>, %arg4: memref<2x10xf32, #tpu.memory_space<vmem>>) attributes {dimension_semantics = [#tpu.dimension_semantics<arbitrary>], iteration_bounds = array<i64: 1>, scalar_prefetch = 0 : i64, scratch_operands = 0 : i64, tpu.core_type = #tpu.core_type<tc>, window_params = [{pipeline_mode = #tpu.pipeline_mode<synchronous>, transform_indices = @transform_0, window_bounds = array<i64: 2, 49, 128>}, {pipeline_mode = #tpu.pipeline_mode<synchronous>, transform_indices = @transform_1, window_bounds = array<i64: 128, 10>}, {pipeline_mode = #tpu.pipeline_mode<synchronous>, transform_indices = @transform_2, window_bounds = array<i64: 1, 10>}, {pipeline_mode = #tpu.pipeline_mode<synchronous>, transform_indices = @transform_3, window_bounds = array<i64: 2, 10>}]} {
    %c0 = arith.constant 0 : index
    %c0_0 = arith.constant 0 : index
    %c0_1 = arith.constant 0 : index
    %0 = vector.load %arg1[%c0, %c0_0, %c0_1] : memref<2x49x128xbf16, #tpu.memory_space<vmem>>, vector<2x49x128xbf16>
    %1 = arith.extf %0 : vector<2x49x128xbf16> to vector<2x49x128xf32>
    %cst = arith.constant dense<0.000000e+00> : vector<2x128xf32>
    %2 = vector.multi_reduction <add>, %1, %cst [1] : vector<2x49x128xf32> to vector<2x128xf32>
    %cst_2 = arith.constant 4.900000e+01 : f32
    %3 = vector.broadcast %cst_2 : f32 to vector<2x128xf32>
    %4 = arith.divf %2, %3 : vector<2x128xf32>
    %c0_3 = arith.constant 0 : index
    %c0_4 = arith.constant 0 : index
    %5 = vector.load %arg2[%c0_3, %c0_4] : memref<128x10xf32, #tpu.memory_space<vmem>>, vector<128x10xf32>
    %cst_5 = arith.constant dense<0.000000e+00> : vector<2x10xf32>
    %6 = tpu.matmul %4, %5, %cst_5 {dimension_numbers = #tpu.dot_dimension_numbers<[1], [0], [0], [1], [0, 0, 1, 1], [], []>} : vector<2x128xf32>, vector<128x10xf32>, vector<2x10xf32> -> vector<2x10xf32>
    %c0_6 = arith.constant 0 : index
    %c0_7 = arith.constant 0 : index
    %7 = vector.load %arg3[%c0_6, %c0_7] : memref<1x10xf32, #tpu.memory_space<vmem>>, vector<1x10xf32>
    %8 = vector.broadcast %7 : vector<1x10xf32> to vector<2x10xf32>
    %9 = arith.addf %6, %8 : vector<2x10xf32>
    %c0_8 = arith.constant 0 : index
    %c0_9 = arith.constant 0 : index
    %10 = vector.load %arg4[%c0_8, %c0_9] : memref<2x10xf32, #tpu.memory_space<vmem>>, vector<2x10xf32>
    tpu.vector_store %arg4[%c0_8, %c0_9], %9 {strides = array<i32>} : memref<2x10xf32, #tpu.memory_space<vmem>>, vector<2x10xf32>,
    return
  }
  func.func @transform_0(%arg0: i32) -> (i32, i32, i32) {
    %c0_i32 = arith.constant 0 : i32
    %c0_i32_0 = arith.constant 0 : i32
    %c0_i32_1 = arith.constant 0 : i32
    %c0_i32_2 = arith.constant 0 : i32
    return %c0_i32, %c0_i32_0, %c0_i32_1 : i32, i32, i32
  }
  func.func @transform_1(%arg0: i32) -> (i32, i32) {
    %c0_i32 = arith.constant 0 : i32
    %c0_i32_0 = arith.constant 0 : i32
    %c0_i32_1 = arith.constant 0 : i32
    return %c0_i32, %c0_i32_0 : i32, i32
  }
  func.func @transform_2(%arg0: i32) -> (i32, i32) {
    %c0_i32 = arith.constant 0 : i32
    %c0_i32_0 = arith.constant 0 : i32
    %c0_i32_1 = arith.constant 0 : i32
    return %c0_i32, %c0_i32_0 : i32, i32
  }
  func.func @transform_3(%arg0: i32) -> (i32, i32) {
    %c0_i32 = arith.constant 0 : i32
    %c0_i32_0 = arith.constant 0 : i32
    %c0_i32_1 = arith.constant 0 : i32
    return %c0_i32, %c0_i32_0 : i32, i32
  }
}

module attributes {stable_mosaic.version = 11 : i64} {
  func.func @_dual_mm_shift_kernel(%arg0: i32, %arg1: memref<104x1152xbf16, #tpu.memory_space<vmem>>, %arg2: memref<1152x128xbf16, #tpu.memory_space<vmem>>, %arg3: memref<1x128xf32, #tpu.memory_space<vmem>>, %arg4: memref<104x64xbf16, #tpu.memory_space<vmem>>, %arg5: memref<64x128xbf16, #tpu.memory_space<vmem>>, %arg6: memref<1x128xf32, #tpu.memory_space<vmem>>, %arg7: memref<104x128xbf16, #tpu.memory_space<vmem>>) attributes {dimension_semantics = [#tpu.dimension_semantics<parallel>], iteration_bounds = array<i64: 1>, scalar_prefetch = 0 : i64, scratch_operands = 0 : i64, tpu.core_type = #tpu.core_type<tc>, window_params = [{transform_indices = @transform_0, window_bounds = array<i64: 104, 1152>}, {pipeline_mode = #tpu.pipeline_mode<synchronous>, transform_indices = @transform_1, window_bounds = array<i64: 1152, 128>}, {pipeline_mode = #tpu.pipeline_mode<synchronous>, transform_indices = @transform_2, window_bounds = array<i64: 1, 128>}, {transform_indices = @transform_3, window_bounds = array<i64: 104, 64>}, {pipeline_mode = #tpu.pipeline_mode<synchronous>, transform_indices = @transform_4, window_bounds = array<i64: 64, 128>}, {pipeline_mode = #tpu.pipeline_mode<synchronous>, transform_indices = @transform_5, window_bounds = array<i64: 1, 128>}, {transform_indices = @transform_6, window_bounds = array<i64: 104, 128>}]} {
    %c0 = arith.constant 0 : index
    %c0_0 = arith.constant 0 : index
    %0 = vector.load %arg1[%c0, %c0_0] : memref<104x1152xbf16, #tpu.memory_space<vmem>>, vector<104x1152xbf16>
    %c0_1 = arith.constant 0 : index
    %c0_2 = arith.constant 0 : index
    %1 = vector.load %arg2[%c0_1, %c0_2] : memref<1152x128xbf16, #tpu.memory_space<vmem>>, vector<1152x128xbf16>
    %cst = arith.constant dense<0.000000e+00> : vector<104x128xf32>
    %2 = tpu.matmul %0, %1, %cst {dimension_numbers = #tpu.dot_dimension_numbers<[1], [0], [0], [1], [0, 0, 1, 1], [], []>} : vector<104x1152xbf16>, vector<1152x128xbf16>, vector<104x128xf32> -> vector<104x128xf32>
    %c0_3 = arith.constant 0 : index
    %c0_4 = arith.constant 0 : index
    %3 = vector.load %arg4[%c0_3, %c0_4] : memref<104x64xbf16, #tpu.memory_space<vmem>>, vector<104x64xbf16>
    %c0_5 = arith.constant 0 : index
    %c0_6 = arith.constant 0 : index
    %4 = vector.load %arg5[%c0_5, %c0_6] : memref<64x128xbf16, #tpu.memory_space<vmem>>, vector<64x128xbf16>
    %cst_7 = arith.constant dense<0.000000e+00> : vector<104x128xf32>
    %5 = tpu.matmul %3, %4, %cst_7 {dimension_numbers = #tpu.dot_dimension_numbers<[1], [0], [0], [1], [0, 0, 1, 1], [], []>} : vector<104x64xbf16>, vector<64x128xbf16>, vector<104x128xf32> -> vector<104x128xf32>
    %6 = arith.addf %2, %5 : vector<104x128xf32>
    %c0_8 = arith.constant 0 : index
    %c0_9 = arith.constant 0 : index
    %7 = vector.load %arg3[%c0_8, %c0_9] : memref<1x128xf32, #tpu.memory_space<vmem>>, vector<1x128xf32>
    %8 = vector.broadcast %7 : vector<1x128xf32> to vector<104x128xf32>
    %9 = arith.addf %6, %8 : vector<104x128xf32>
    %c0_10 = arith.constant 0 : index
    %c0_11 = arith.constant 0 : index
    %10 = vector.load %arg6[%c0_10, %c0_11] : memref<1x128xf32, #tpu.memory_space<vmem>>, vector<1x128xf32>
    %11 = vector.broadcast %10 : vector<1x128xf32> to vector<104x128xf32>
    %12 = arith.addf %9, %11 : vector<104x128xf32>
    %cst_12 = arith.constant 0.000000e+00 : f32
    %13 = vector.broadcast %cst_12 : f32 to vector<104x128xf32>
    %14 = arith.maximumf %12, %13 : vector<104x128xf32>
    %15 = arith.truncf %14 : vector<104x128xf32> to vector<104x128xbf16>
    %c0_13 = arith.constant 0 : index
    %c0_14 = arith.constant 0 : index
    %16 = vector.load %arg7[%c0_13, %c0_14] : memref<104x128xbf16, #tpu.memory_space<vmem>>, vector<104x128xbf16>
    tpu.vector_store %arg7[%c0_13, %c0_14], %15 {strides = array<i32>} : memref<104x128xbf16, #tpu.memory_space<vmem>>, vector<104x128xbf16>,
    return
  }
  func.func @transform_0(%arg0: i32) -> (i32, i32) {
    %c0_i32 = arith.constant 0 : i32
    %c0_i32_0 = arith.constant 0 : i32
    return %arg0, %c0_i32 : i32, i32
  }
  func.func @transform_1(%arg0: i32) -> (i32, i32) {
    %c0_i32 = arith.constant 0 : i32
    %c0_i32_0 = arith.constant 0 : i32
    %c0_i32_1 = arith.constant 0 : i32
    return %c0_i32, %c0_i32_0 : i32, i32
  }
  func.func @transform_2(%arg0: i32) -> (i32, i32) {
    %c0_i32 = arith.constant 0 : i32
    %c0_i32_0 = arith.constant 0 : i32
    %c0_i32_1 = arith.constant 0 : i32
    return %c0_i32, %c0_i32_0 : i32, i32
  }
  func.func @transform_3(%arg0: i32) -> (i32, i32) {
    %c0_i32 = arith.constant 0 : i32
    %c0_i32_0 = arith.constant 0 : i32
    return %arg0, %c0_i32 : i32, i32
  }
  func.func @transform_4(%arg0: i32) -> (i32, i32) {
    %c0_i32 = arith.constant 0 : i32
    %c0_i32_0 = arith.constant 0 : i32
    %c0_i32_1 = arith.constant 0 : i32
    return %c0_i32, %c0_i32_0 : i32, i32
  }
  func.func @transform_5(%arg0: i32) -> (i32, i32) {
    %c0_i32 = arith.constant 0 : i32
    %c0_i32_0 = arith.constant 0 : i32
    %c0_i32_1 = arith.constant 0 : i32
    return %c0_i32, %c0_i32_0 : i32, i32
  }
  func.func @transform_6(%arg0: i32) -> (i32, i32) {
    %c0_i32 = arith.constant 0 : i32
    %c0_i32_0 = arith.constant 0 : i32
    return %arg0, %c0_i32 : i32, i32
  }
}

</mosaic_0001>

<llo_original>
// kernel: domain_resnet_forward.6
$region0: #{domain_resnet_forward.6}
  #allocation0 [shape = 'u32[]', space=smem, size = 0x4, offset = 0x4, fixed_abs, tag = 'smem constant byte address 0x4 - core index']
  #allocation1 [shape = 'u32[72,128]{1,0:T(1,128)}', space=vmem, size = 0x9000, scoped, tag = 'internal scratch']
  %s0 = inlined_call_operand.vmem [shape: bf16[512,160], index: 0, kind: input, shape index: {}]
  %s1 = inlined_call_operand.vmem [shape: bf16[160,64], index: 1, kind: input, shape index: {}]
  %s2 = inlined_call_operand.vmem [shape: f32[1,64], index: 2, kind: input, shape index: {}]
  %s3 = inlined_call_operand.vmem [shape: bf16[512,64], index: 3, kind: output, shape index: {}]
  %s4 = sld [smem:[#allocation0]]
  $region45: #{domain_resnet_forward.6} parent=0
    _
  %s6 = ssub.s32 1, %s4
  %s7 = scalar_select 0, %s6, %s4
  loop: start=0, step=1, limit=4
  $region2: #{domain_resnet_forward.6} parent=0 // loop_pre_header
    _
  $region3: #{domain_resnet_forward.6} parent=0 // loop_header
    %s9 = sphi 0, %s13
    %p10 = scmp.ge.s32.totalorder %s9, 4
    %s19 = sphi 0, %s21
    %s22 = sphi 0, %s19
    %s23 = sphi 0, %s22
    %s39 = sphi 0, %s23
    %s43 = sphi 0, %s43
    %s45 = sphi 0, %s43
    %s46 = sphi 0, %s45
    %s60 = sphi 0, %s46
    %s64 = sphi 0, %s64
    %s66 = sphi 0, %s64
    %s67 = sphi 0, %s66
    %s81 = sphi 0, %s67
    %s87 = sphi 0, %s89
    %s90 = sphi 0, %s87
    %s91 = sphi 0, %s90
    %s107 = sphi 0, %s91
  $region4: #{domain_resnet_forward.6} parent=0 // loop_header_branch
    %12 = sbr.rel (%p10) target = $region8
  $region5: #{domain_resnet_forward.6} parent=0 // loop_body
    %s14 = ssub.s32 %s9, 1
    %s15 = ssub.s32 %s9, 2
    %s16 = sadd.s32 %s9, 1
    %s17 = ssub.s32 %s9, %s16
    %p18 = scmp.eq.s32.totalorder %s17, 0
    %s20 = sadd.s32 %s19, 1
    %s21 = scalar_select %p18, %s19, %s20
    %p24 = pneg %p18
    %p25 = scmp.eq.s32.totalorder %s9, 1
    %p26 = por %p24, %p25
    %p27 = scmp.ne.s32.totalorder %s19, %s22
    %p28 = scmp.eq.s32.totalorder %s9, 0
    %p29 = por %p27, %p28
    %p30 = scmp.ne.s32.totalorder %s19, %s22
    %p31 = scmp.eq.s32.totalorder %s14, 1
    %p32 = por %p30, %p31
    %p33 = scmp.ne.s32.totalorder %s22, %s23
    %p34 = scmp.eq.s32.totalorder %s14, 0
    %p35 = por %p33, %p34
    %p36 = scmp.ne.s32.totalorder %s22, %s23
    %p37 = scmp.eq.s32.totalorder %s15, 1
    %p38 = por %p36, %p37
    %p40 = scmp.ne.s32.totalorder %s23, %s39
    %p41 = scmp.eq.s32.totalorder %s15, 0
    %p42 = por %p40, %p41
    %s44 = sadd.s32 %s43, 1
    %p47 = scmp.eq.s32.totalorder %s9, 1
    %p48 = scmp.ne.s32.totalorder %s43, %s45
    %p49 = scmp.eq.s32.totalorder %s9, 0
    %p50 = por %p48, %p49
    %p51 = scmp.ne.s32.totalorder %s43, %s45
    %p52 = scmp.eq.s32.totalorder %s14, 1
    %p53 = por %p51, %p52
    %p54 = scmp.ne.s32.totalorder %s45, %s46
    %p55 = scmp.eq.s32.totalorder %s14, 0
    %p56 = por %p54, %p55
    %p57 = scmp.ne.s32.totalorder %s45, %s46
    %p58 = scmp.eq.s32.totalorder %s15, 1
    %p59 = por %p57, %p58
    %p61 = scmp.ne.s32.totalorder %s46, %s60
    %p62 = scmp.eq.s32.totalorder %s15, 0
    %p63 = por %p61, %p62
    %s65 = sadd.s32 %s64, 1
    %p68 = scmp.eq.s32.totalorder %s9, 1
    %p69 = scmp.ne.s32.totalorder %s64, %s66
    %p70 = scmp.eq.s32.totalorder %s9, 0
    %p71 = por %p69, %p70
    %p72 = scmp.ne.s32.totalorder %s64, %s66
    %p73 = scmp.eq.s32.totalorder %s14, 1
    %p74 = por %p72, %p73
    %p75 = scmp.ne.s32.totalorder %s66, %s67
    %p76 = scmp.eq.s32.totalorder %s14, 0
    %p77 = por %p75, %p76
    %p78 = scmp.ne.s32.totalorder %s66, %s67
    %p79 = scmp.eq.s32.totalorder %s15, 1
    %p80 = por %p78, %p79
    %p82 = scmp.ne.s32.totalorder %s67, %s81
    %p83 = scmp.eq.s32.totalorder %s15, 0
    %p84 = por %p82, %p83
    %s85 = ssub.s32 %s9, %s16
    %p86 = scmp.eq.s32.totalorder %s85, 0
    %s88 = sadd.s32 %s87, 1
    %s89 = scalar_select %p86, %s87, %s88
    %p92 = pneg %p86
    %p93 = scmp.eq.s32.totalorder %s9, 1
    %p94 = por %p92, %p93
    %p95 = scmp.ne.s32.totalorder %s87, %s90
    %p96 = scmp.eq.s32.totalorder %s9, 0
    %p97 = por %p95, %p96
    %p98 = scmp.ne.s32.totalorder %s87, %s90
    %p99 = scmp.eq.s32.totalorder %s14, 1
    %p100 = por %p98, %p99
    %p101 = scmp.ne.s32.totalorder %s90, %s91
    %p102 = scmp.eq.s32.totalorder %s14, 0
    %p103 = por %p101, %p102
    %p104 = scmp.ne.s32.totalorder %s90, %s91
    %p105 = scmp.eq.s32.totalorder %s15, 1
    %p106 = por %p104, %p105
    %p108 = scmp.ne.s32.totalorder %s91, %s107
    %p109 = scmp.eq.s32.totalorder %s15, 0
    %p110 = por %p108, %p109
    %p111 = scmp.le.s32.totalorder 1, %s9
    %p112 = scmp.lt.s32.totalorder %s9, 3
    %p113 = pnand %p111, %p112
    %p114 = pneg %p113
    // Predicated region
    $region9: #{domain_resnet_forward.6} parent=5 // pred_check
      _
    $region10: #{domain_resnet_forward.6} parent=5 // pred_check_branch
      %116 = sbr.rel (%p113) target = $region12
    $region11: #{domain_resnet_forward.6} parent=5 // pred_region
      %s117 = ssub.s32 %s9, 1
      // Predicated region
      $region13: #{domain_resnet_forward.6} parent=11 // pred_check
        %p118 = pneg %p56
      $region14: #{domain_resnet_forward.6} parent=11 // pred_check_branch
        %120 = sbr.rel (%p118) target = $region16
      $region15: #{domain_resnet_forward.6} parent=11 // pred_region
        _
      $region16: #{domain_resnet_forward.6} parent=11 // pred_fallthru
        _
      // Predicated region
      $region17: #{domain_resnet_forward.6} parent=11 // pred_check
        %p121 = pneg %p77
      $region18: #{domain_resnet_forward.6} parent=11 // pred_check_branch
        %123 = sbr.rel (%p121) target = $region20
      $region19: #{domain_resnet_forward.6} parent=11 // pred_region
        _
      $region20: #{domain_resnet_forward.6} parent=11 // pred_fallthru
        _
    $region12: #{domain_resnet_forward.6} parent=5 // pred_fallthru
      _
    %p124 = scmp.lt.s32.totalorder %s9, 2
    // Predicated region
    $region21: #{domain_resnet_forward.6} parent=5 // pred_check
      %p125 = pneg %p124
    $region22: #{domain_resnet_forward.6} parent=5 // pred_check_branch
      %127 = sbr.rel (%p125) target = $region24
    $region23: #{domain_resnet_forward.6} parent=5 // pred_region
      // Predicated region
      $region25: #{domain_resnet_forward.6} parent=23 // pred_check
        %p128 = pneg %p29
      $region26: #{domain_resnet_forward.6} parent=23 // pred_check_branch
        %130 = sbr.rel (%p128) target = $region28
      $region27: #{domain_resnet_forward.6} parent=23 // pred_region
        %s131 = smul.u32 32, %s9
        %p132 = scmp.lt.s32.totalorder %s131, 63
        %s133 = scalar_select %p132, %s131, 63
        %s134 = smul.addr %s133, 2
        %s135 = smul.addr %s134, 4
        %s136 = scalar_lea.vmem %s0, %s135
        %s137 = smul.u32 32, %s9
      $region28: #{domain_resnet_forward.6} parent=23 // pred_fallthru
        _
    $region24: #{domain_resnet_forward.6} parent=5 // pred_fallthru
      _
    %p138 = scmp.le.s32.totalorder 1, %s9
    %p139 = scmp.lt.s32.totalorder %s9, 3
    %p140 = pnand %p138, %p139
    %p141 = pneg %p140
    // Predicated region
    $region29: #{domain_resnet_forward.6} parent=5 // pred_check
      _
    $region30: #{domain_resnet_forward.6} parent=5 // pred_check_branch
      %143 = sbr.rel (%p140) target = $region32
    $region31: #{domain_resnet_forward.6} parent=5 // pred_region
      %s144 = ssub.s32 %s9, 1
      %s145 = smul.u32 32, %s14
      %p146 = scmp.lt.s32.totalorder %s145, 63
      %s147 = scalar_select %p146, %s145, 63
      %s148 = smul.addr %s147, 2
      %s149 = smul.addr %s148, 4
      %s150 = scalar_lea.vmem %s0, %s149
      %p151 = pneg %p35
      %p152 = pneg %p32
      %p153 = pneg %p56
      %p154 = pneg %p53
      %p155 = pneg %p77
      %p156 = pneg %p74
      %p157 = pneg %p103
      %p158 = pneg %p100
      %s159 = smul.u32 32, %s14
      %p160 = scmp.lt.s32.totalorder %s159, 63
      %s161 = scalar_select %p160, %s159, 63
      %s162 = smul.addr %s161, 4
      %s163 = scalar_lea.vmem %s3, %s162
      %s164 = smul.u32 32, %s14
      %p165 = scmp.lt.s32.totalorder %s164, 63
      %s166 = scalar_select %p165, %s164, 63
      %s167 = smul.addr %s166, 2
      %s168 = smul.addr %s167, 4
      %s169 = scalar_lea.vmem %s0, %s168
      %s170 = smul.u32 32, %s14
      %s171 = smul.u32 32, %s14
      %p172 = scmp.lt.s32.totalorder %s171, 63
      %s173 = scalar_select %p172, %s171, 63
      %s174 = smul.addr %s173, 4
      %s175 = scalar_lea.vmem %s3, %s174
      %s176 = smul.u32 32, %s14
      %v178 = vld [vmem:[%s169] sm:$0xff]
      %v179 = vld [vmem:[%s169 + $0x8] sm:$0xff]
      %v180 = vld [vmem:[%s169 + $0x10] sm:$0xff]
      %v181 = vld [vmem:[%s169 + $0x18] sm:$0xff]
      %v182 = vld [vmem:[%s169 + $0x20] sm:$0xff]
      %v183 = vld [vmem:[%s169 + $0x28] sm:$0xff]
      %v184 = vld [vmem:[%s169 + $0x30] sm:$0xff]
      %v185 = vld [vmem:[%s169 + $0x38] sm:$0xff]
      %v186 = vld [vmem:[%s169 + $0x40] sm:$0xff]
      %v187 = vld [vmem:[%s169 + $0x48] sm:$0xff]
      %v188 = vld [vmem:[%s169 + $0x50] sm:$0xff]
      %v189 = vld [vmem:[%s169 + $0x58] sm:$0xff]
      %v190 = vld [vmem:[%s169 + $0x60] sm:$0xff]
      %v191 = vld [vmem:[%s169 + $0x68] sm:$0xff]
      %v192 = vld [vmem:[%s169 + $0x70] sm:$0xff]
      %v193 = vld [vmem:[%s169 + $0x78] sm:$0xff]
      %v194 = vld [vmem:[%s169 + $0x80] sm:$0xff]
      %v195 = vld [vmem:[%s169 + $0x88] sm:$0xff]
      %v196 = vld [vmem:[%s169 + $0x90] sm:$0xff]
      %v197 = vld [vmem:[%s169 + $0x98] sm:$0xff]
      %v198 = vld [vmem:[%s169 + $0xa0] sm:$0xff]
      %v199 = vld [vmem:[%s169 + $0xa8] sm:$0xff]
      %v200 = vld [vmem:[%s169 + $0xb0] sm:$0xff]
      %v201 = vld [vmem:[%s169 + $0xb8] sm:$0xff]
      %v202 = vld [vmem:[%s169 + $0xc0] sm:$0xff]
      %v203 = vld [vmem:[%s169 + $0xc8] sm:$0xff]
      %v204 = vld [vmem:[%s169 + $0xd0] sm:$0xff]
      %v205 = vld [vmem:[%s169 + $0xd8] sm:$0xff]
      %v206 = vld [vmem:[%s169 + $0xe0] sm:$0xff]
      %v207 = vld [vmem:[%s169 + $0xe8] sm:$0xff]
      %v208 = vld [vmem:[%s169 + $0xf0] sm:$0xff]
      %v209 = vld [vmem:[%s169 + $0xf8] sm:$0xff]
      %v210 = vld [vmem:[%s1] sm:$0xf]
      %v211 = vld [vmem:[%s1 + $0x4] sm:$0xf]
      %v212 = vld [vmem:[%s1 + $0x8] sm:$0xf]
      %v213 = vld [vmem:[%s1 + $0xc] sm:$0xf]
      %v214 = vld [vmem:[%s1 + $0x10] sm:$0xf]
      %v215 = vld [vmem:[%s1 + $0x14] sm:$0xf]
      %v216 = vld [vmem:[%s1 + $0x18] sm:$0xf]
      %v217 = vld [vmem:[%s1 + $0x1c] sm:$0xf]
      %v218 = vld [vmem:[%s1 + $0x20] sm:$0xf]
      %v219 = vld [vmem:[%s1 + $0x24] sm:$0xf]
      %v220 = vld [vmem:[%s1 + $0x28] sm:$0xf]
      %v221 = vld [vmem:[%s1 + $0x2c] sm:$0xf]
      %v222 = vld [vmem:[%s1 + $0x30] sm:$0xf]
      %v223 = vld [vmem:[%s1 + $0x34] sm:$0xf]
      %v224 = vld [vmem:[%s1 + $0x38] sm:$0xf]
      %v225 = vld [vmem:[%s1 + $0x3c] sm:$0xf]
      %v226 = vld [vmem:[%s1 + $0x40] sm:$0xf]
      %v227 = vld [vmem:[%s1 + $0x44] sm:$0xf]
      %v228 = vld [vmem:[%s1 + $0x48] sm:$0xf]
      %v229 = vld [vmem:[%s1 + $0x4c] sm:$0xf]
      %v230 = vld [vmem:[%s2] sm:$0x1]
      %v232 = vperm.slane %v230, 0
      %v266 = vunpack.c.l.b16 %v178
      %v267 = vunpack.c.h.b16 %v178
      %v268 = vunpack.c.l.b16 %v179
      %v269 = vunpack.c.h.b16 %v179
      %v270 = vunpack.c.l.b16 %v180
      %v271 = vunpack.c.h.b16 %v180
      %v272 = vunpack.c.l.b16 %v181
      %v273 = vunpack.c.h.b16 %v181
      %v274 = vunpack.c.l.b16 %v182
      %v275 = vunpack.c.h.b16 %v182
      %v276 = vunpack.c.l.b16 %v183
      %v277 = vunpack.c.h.b16 %v183
      %v278 = vunpack.c.l.b16 %v184
      %v279 = vunpack.c.h.b16 %v184
      %v280 = vunpack.c.l.b16 %v185
      %v281 = vunpack.c.h.b16 %v185
      %v282 = vunpack.c.l.b16 %v186
      %v283 = vunpack.c.h.b16 %v186
      %v284 = vunpack.c.l.b16 %v187
      %v285 = vunpack.c.h.b16 %v187
      %v286 = vunpack.c.l.b16 %v188
      %v287 = vunpack.c.h.b16 %v188
      %v288 = vunpack.c.l.b16 %v189
      %v289 = vunpack.c.h.b16 %v189
      %v290 = vunpack.c.l.b16 %v190
      %v291 = vunpack.c.h.b16 %v190
      %v292 = vunpack.c.l.b16 %v191
      %v293 = vunpack.c.h.b16 %v191
      %v294 = vunpack.c.l.b16 %v192
      %v295 = vunpack.c.h.b16 %v192
      %v296 = vunpack.c.l.b16 %v193
      %v297 = vunpack.c.h.b16 %v193
      %v298 = vunpack.c.l.b16 %v194
      %v299 = vunpack.c.h.b16 %v194
      %v300 = vunpack.c.l.b16 %v195
      %v301 = vunpack.c.h.b16 %v195
      %v302 = vunpack.c.l.b16 %v196
      %v303 = vunpack.c.h.b16 %v196
      %v304 = vunpack.c.l.b16 %v197
      %v305 = vunpack.c.h.b16 %v197
      %v306 = vunpack.c.l.b16 %v198
      %v307 = vunpack.c.h.b16 %v198
      %v308 = vunpack.c.l.b16 %v199
      %v309 = vunpack.c.h.b16 %v199
      %v310 = vunpack.c.l.b16 %v200
      %v311 = vunpack.c.h.b16 %v200
      %v312 = vunpack.c.l.b16 %v201
      %v313 = vunpack.c.h.b16 %v201
      %v314 = vunpack.c.l.b16 %v202
      %v315 = vunpack.c.h.b16 %v202
      %v316 = vunpack.c.l.b16 %v203
      %v317 = vunpack.c.h.b16 %v203
      %v318 = vunpack.c.l.b16 %v204
      %v319 = vunpack.c.h.b16 %v204
      %v320 = vunpack.c.l.b16 %v205
      %v321 = vunpack.c.h.b16 %v205
      %v322 = vunpack.c.l.b16 %v206
      %v323 = vunpack.c.h.b16 %v206
      %v324 = vunpack.c.l.b16 %v207
      %v325 = vunpack.c.h.b16 %v207
      %v326 = vunpack.c.l.b16 %v208
      %v327 = vunpack.c.h.b16 %v208
      %v328 = vunpack.c.l.b16 %v209
      %v329 = vunpack.c.h.b16 %v209
      %v330 = vpack.c.b16 %v268, %v266
      %v331 = vpack.c.b16 %v269, %v267
      %v332 = vpack.c.b16 %v272, %v270
      %v333 = vpack.c.b16 %v273, %v271
      %v334 = vpack.c.b16 %v276, %v274
      %v335 = vpack.c.b16 %v277, %v275
      %v336 = vpack.c.b16 %v280, %v278
      %v337 = vpack.c.b16 %v281, %v279
      %v338 = vpack.c.b16 %v284, %v282
      %v339 = vpack.c.b16 %v285, %v283
      %v340 = vpack.c.b16 %v288, %v286
      %v341 = vpack.c.b16 %v289, %v287
      %v342 = vpack.c.b16 %v292, %v290
      %v343 = vpack.c.b16 %v293, %v291
      %v344 = vpack.c.b16 %v296, %v294
      %v345 = vpack.c.b16 %v297, %v295
      %v346 = vpack.c.b16 %v300, %v298
      %v347 = vpack.c.b16 %v301, %v299
      %v348 = vpack.c.b16 %v304, %v302
      %v349 = vpack.c.b16 %v305, %v303
      %v350 = vpack.c.b16 %v308, %v306
      %v351 = vpack.c.b16 %v309, %v307
      %v352 = vpack.c.b16 %v312, %v310
      %v353 = vpack.c.b16 %v313, %v311
      %v354 = vpack.c.b16 %v316, %v314
      %v355 = vpack.c.b16 %v317, %v315
      %v356 = vpack.c.b16 %v320, %v318
      %v357 = vpack.c.b16 %v321, %v319
      %v358 = vpack.c.b16 %v324, %v322
      %v359 = vpack.c.b16 %v325, %v323
      %v360 = vpack.c.b16 %v328, %v326
      %v361 = vpack.c.b16 %v329, %v327
      %v398 = vunpack.c.l.b16 %v210
      %v399 = vunpack.c.l.b16 %v211
      %v400 = vunpack.c.l.b16 %v212
      %v401 = vunpack.c.l.b16 %v213
      %v402 = vunpack.c.l.b16 %v214
      %v403 = vunpack.c.l.b16 %v215
      %v404 = vunpack.c.l.b16 %v216
      %v405 = vunpack.c.l.b16 %v217
      %v406 = vunpack.c.l.b16 %v218
      %v407 = vunpack.c.l.b16 %v219
      %v408 = vunpack.c.l.b16 %v220
      %v409 = vunpack.c.l.b16 %v221
      %v410 = vunpack.c.l.b16 %v222
      %v411 = vunpack.c.l.b16 %v223
      %v412 = vunpack.c.l.b16 %v224
      %v413 = vunpack.c.l.b16 %v225
      %v414 = vunpack.c.l.b16 %v226
      %v415 = vunpack.c.l.b16 %v227
      %v416 = vunpack.c.l.b16 %v228
      %v417 = vunpack.c.l.b16 %v229
      %v418 = vpack.c.b16 %v399, %v398
      %v419 = vpack.c.b16 %v401, %v400
      %v420 = vpack.c.b16 %v403, %v402
      %v421 = vpack.c.b16 %v405, %v404
      %v422 = vpack.c.b16 %v407, %v406
      %v423 = vpack.c.b16 %v409, %v408
      %v424 = vpack.c.b16 %v411, %v410
      %v425 = vpack.c.b16 %v413, %v412
      %v426 = vpack.c.b16 %v415, %v414
      %v427 = vpack.c.b16 %v417, %v416
      %vm438 = vcmask 261120
      %v440 = vsel %vm438, %v331, 0
      %v443 = vsel %vm438, %v333, 0
      %v446 = vsel %vm438, %v335, 0
      %v449 = vsel %vm438, %v337, 0
      %v452 = vsel %vm438, %v339, 0
      %v455 = vsel %vm438, %v341, 0
      %v458 = vsel %vm438, %v343, 0
      %v461 = vsel %vm438, %v345, 0
      %v464 = vsel %vm438, %v347, 0
      %v467 = vsel %vm438, %v349, 0
      %v470 = vsel %vm438, %v351, 0
      %v473 = vsel %vm438, %v353, 0
      %v476 = vsel %vm438, %v355, 0
      %v479 = vsel %vm438, %v357, 0
      %v482 = vsel %vm438, %v359, 0
      %v485 = vsel %vm438, %v361, 0
      %487 = vmatpush.bf16.msra.mxu0 %v425
      %488 = vmatpush.bf16.msra.mxu0 %v424
      %489 = vmatpush.bf16.msra.mxu0 %v423
      %490 = vmatpush.bf16.msra.mxu0 %v422
      %491 = vmatpush.bf16.msra.mxu0 %v421
      %492 = vmatpush.bf16.msra.mxu0 %v420
      %493 = vmatpush.bf16.msra.mxu0 %v419
      %494 = vmatpush.bf16.msra.mxu0 %v418
      %495 = vmatmul.bf16.gmra.mxu0 %v330
      %v496 = vpop.f32.mrf.mxu0
      %v497 = vadd.f32 %v232, %v496
      %v498 = vpop.f32.mrf.mxu0
      %v499 = vadd.f32 %v232, %v498
      %500 = vmatmul.bf16.gmra.mxu0 %v332
      %v501 = vpop.f32.mrf.mxu0
      %v502 = vadd.f32 %v232, %v501
      %v503 = vpop.f32.mrf.mxu0
      %v504 = vadd.f32 %v232, %v503
      %505 = vmatmul.bf16.gmra.mxu0 %v334
      %v506 = vpop.f32.mrf.mxu0
      %v507 = vadd.f32 %v232, %v506
      %v508 = vpop.f32.mrf.mxu0
      %v509 = vadd.f32 %v232, %v508
      %510 = vmatmul.bf16.gmra.mxu0 %v336
      %v511 = vpop.f32.mrf.mxu0
      %v512 = vadd.f32 %v232, %v511
      %v513 = vpop.f32.mrf.mxu0
      %v514 = vadd.f32 %v232, %v513
      %515 = vmatmul.bf16.gmra.mxu0 %v338
      %v516 = vpop.f32.mrf.mxu0
      %v517 = vadd.f32 %v232, %v516
      %v518 = vpop.f32.mrf.mxu0
      %v519 = vadd.f32 %v232, %v518
      %520 = vmatmul.bf16.gmra.mxu0 %v340
      %v521 = vpop.f32.mrf.mxu0
      %v522 = vadd.f32 %v232, %v521
      %v523 = vpop.f32.mrf.mxu0
      %v524 = vadd.f32 %v232, %v523
      %525 = vmatmul.bf16.gmra.mxu0 %v342
      %v526 = vpop.f32.mrf.mxu0
      %v527 = vadd.f32 %v232, %v526
      %v528 = vpop.f32.mrf.mxu0
      %v529 = vadd.f32 %v232, %v528
      %530 = vmatmul.bf16.gmra.mxu0 %v344
      %v531 = vpop.f32.mrf.mxu0
      %v532 = vadd.f32 %v232, %v531
      %v533 = vpop.f32.mrf.mxu0
      %v534 = vadd.f32 %v232, %v533
      %535 = vmatmul.bf16.gmra.mxu0 %v346
      %v536 = vpop.f32.mrf.mxu0
      %v537 = vadd.f32 %v232, %v536
      %v538 = vpop.f32.mrf.mxu0
      %v539 = vadd.f32 %v232, %v538
      %540 = vmatmul.bf16.gmra.mxu0 %v348
      %v541 = vpop.f32.mrf.mxu0
      %v542 = vadd.f32 %v232, %v541
      %v543 = vpop.f32.mrf.mxu0
      %v544 = vadd.f32 %v232, %v543
      %545 = vmatmul.bf16.gmra.mxu0 %v350
      %v546 = vpop.f32.mrf.mxu0
      %v547 = vadd.f32 %v232, %v546
      %v548 = vpop.f32.mrf.mxu0
      %v549 = vadd.f32 %v232, %v548
      %550 = vmatmul.bf16.gmra.mxu0 %v352
      %v551 = vpop.f32.mrf.mxu0
      %v552 = vadd.f32 %v232, %v551
      %v553 = vpop.f32.mrf.mxu0
      %v554 = vadd.f32 %v232, %v553
      %555 = vmatmul.bf16.gmra.mxu0 %v354
      %v556 = vpop.f32.mrf.mxu0
      %v557 = vadd.f32 %v232, %v556
      %v558 = vpop.f32.mrf.mxu0
      %v559 = vadd.f32 %v232, %v558
      %560 = vmatmul.bf16.gmra.mxu0 %v356
      %v561 = vpop.f32.mrf.mxu0
      %v562 = vadd.f32 %v232, %v561
      %v563 = vpop.f32.mrf.mxu0
      %v564 = vadd.f32 %v232, %v563
      %565 = vmatmul.bf16.gmra.mxu0 %v358
      %v566 = vpop.f32.mrf.mxu0
      %v567 = vadd.f32 %v232, %v566
      %v568 = vpop.f32.mrf.mxu0
      %v569 = vadd.f32 %v232, %v568
      %570 = vmatmul.bf16.gmra.mxu0 %v360
      %v571 = vpop.f32.mrf.mxu0
      %v572 = vadd.f32 %v232, %v571
      %v573 = vpop.f32.mrf.mxu0
      %v574 = vadd.f32 %v232, %v573
      %575 = vdwg.mxu0
      %576 = vmatpush.bf16.msra.mxu0 0
      %577 = vmatpush.bf16.msra.mxu0 0
      %578 = vmatpush.bf16.msra.mxu0 0
      %579 = vmatpush.bf16.msra.mxu0 0
      %580 = vmatpush.bf16.msra.mxu0 0
      %581 = vmatpush.bf16.msra.mxu0 0
      %582 = vmatpush.bf16.msra.mxu0 %v427
      %583 = vmatpush.bf16.msra.mxu0 %v426
      %584 = vmatmul.bf16.gmra.mxu0 %v440
      %v585 = vpop.f32.mrf.mxu0
      %v586 = vadd.f32 %v497, %v585
      %v587 = vpop.f32.mrf.mxu0
      %v588 = vadd.f32 %v499, %v587
      %589 = vmatmul.bf16.gmra.mxu0 %v443
      %v590 = vpop.f32.mrf.mxu0
      %v591 = vadd.f32 %v502, %v590
      %v592 = vpop.f32.mrf.mxu0
      %v593 = vadd.f32 %v504, %v592
      %594 = vmatmul.bf16.gmra.mxu0 %v446
      %v595 = vpop.f32.mrf.mxu0
      %v596 = vadd.f32 %v507, %v595
      %v597 = vpop.f32.mrf.mxu0
      %v598 = vadd.f32 %v509, %v597
      %599 = vmatmul.bf16.gmra.mxu0 %v449
      %v600 = vpop.f32.mrf.mxu0
      %v601 = vadd.f32 %v512, %v600
      %v602 = vpop.f32.mrf.mxu0
      %v603 = vadd.f32 %v514, %v602
      %604 = vmatmul.bf16.gmra.mxu0 %v452
      %v605 = vpop.f32.mrf.mxu0
      %v606 = vadd.f32 %v517, %v605
      %v607 = vpop.f32.mrf.mxu0
      %v608 = vadd.f32 %v519, %v607
      %609 = vmatmul.bf16.gmra.mxu0 %v455
      %v610 = vpop.f32.mrf.mxu0
      %v611 = vadd.f32 %v522, %v610
      %v612 = vpop.f32.mrf.mxu0
      %v613 = vadd.f32 %v524, %v612
      %614 = vmatmul.bf16.gmra.mxu0 %v458
      %v615 = vpop.f32.mrf.mxu0
      %v616 = vadd.f32 %v527, %v615
      %v617 = vpop.f32.mrf.mxu0
      %v618 = vadd.f32 %v529, %v617
      %619 = vmatmul.bf16.gmra.mxu0 %v461
      %v620 = vpop.f32.mrf.mxu0
      %v621 = vadd.f32 %v532, %v620
      %v622 = vpop.f32.mrf.mxu0
      %v623 = vadd.f32 %v534, %v622
      %624 = vmatmul.bf16.gmra.mxu0 %v464
      %v625 = vpop.f32.mrf.mxu0
      %v626 = vadd.f32 %v537, %v625
      %v627 = vpop.f32.mrf.mxu0
      %v628 = vadd.f32 %v539, %v627
      %629 = vmatmul.bf16.gmra.mxu0 %v467
      %v630 = vpop.f32.mrf.mxu0
      %v631 = vadd.f32 %v542, %v630
      %v632 = vpop.f32.mrf.mxu0
      %v633 = vadd.f32 %v544, %v632
      %634 = vmatmul.bf16.gmra.mxu0 %v470
      %v635 = vpop.f32.mrf.mxu0
      %v636 = vadd.f32 %v547, %v635
      %v637 = vpop.f32.mrf.mxu0
      %v638 = vadd.f32 %v549, %v637
      %639 = vmatmul.bf16.gmra.mxu0 %v473
      %v640 = vpop.f32.mrf.mxu0
      %v641 = vadd.f32 %v552, %v640
      %v642 = vpop.f32.mrf.mxu0
      %v643 = vadd.f32 %v554, %v642
      %644 = vmatmul.bf16.gmra.mxu0 %v476
      %v645 = vpop.f32.mrf.mxu0
      %v646 = vadd.f32 %v557, %v645
      %v647 = vpop.f32.mrf.mxu0
      %v648 = vadd.f32 %v559, %v647
      %649 = vmatmul.bf16.gmra.mxu0 %v479
      %v650 = vpop.f32.mrf.mxu0
      %v651 = vadd.f32 %v562, %v650
      %v652 = vpop.f32.mrf.mxu0
      %v653 = vadd.f32 %v564, %v652
      %654 = vmatmul.bf16.gmra.mxu0 %v482
      %v655 = vpop.f32.mrf.mxu0
      %v656 = vadd.f32 %v567, %v655
      %v657 = vpop.f32.mrf.mxu0
      %v658 = vadd.f32 %v569, %v657
      %659 = vmatmul.bf16.gmra.mxu0 %v485
      %v660 = vpop.f32.mrf.mxu0
      %v661 = vadd.f32 %v572, %v660
      %v662 = vpop.f32.mrf.mxu0
      %v663 = vadd.f32 %v574, %v662
      %664 = vdwg.mxu0
      %v665 = vmax.f32 %v586, 0.0
      %v666 = vmax.f32 %v588, 0.0
      %v667 = vmax.f32 %v591, 0.0
      %v668 = vmax.f32 %v593, 0.0
      %v669 = vmax.f32 %v596, 0.0
      %v670 = vmax.f32 %v598, 0.0
      %v671 = vmax.f32 %v601, 0.0
      %v672 = vmax.f32 %v603, 0.0
      %v673 = vmax.f32 %v606, 0.0
      %v674 = vmax.f32 %v608, 0.0
      %v675 = vmax.f32 %v611, 0.0
      %v676 = vmax.f32 %v613, 0.0
      %v677 = vmax.f32 %v616, 0.0
      %v678 = vmax.f32 %v618, 0.0
      %v679 = vmax.f32 %v621, 0.0
      %v680 = vmax.f32 %v623, 0.0
      %v681 = vmax.f32 %v626, 0.0
      %v682 = vmax.f32 %v628, 0.0
      %v683 = vmax.f32 %v631, 0.0
      %v684 = vmax.f32 %v633, 0.0
      %v685 = vmax.f32 %v636, 0.0
      %v686 = vmax.f32 %v638, 0.0
      %v687 = vmax.f32 %v641, 0.0
      %v688 = vmax.f32 %v643, 0.0
      %v689 = vmax.f32 %v646, 0.0
      %v690 = vmax.f32 %v648, 0.0
      %v691 = vmax.f32 %v651, 0.0
      %v692 = vmax.f32 %v653, 0.0
      %v693 = vmax.f32 %v656, 0.0
      %v694 = vmax.f32 %v658, 0.0
      %v695 = vmax.f32 %v661, 0.0
      %v696 = vmax.f32 %v663, 0.0
      %v697 = vpack.c.bf16 %v665, %v665
      %v698 = vpack.c.bf16 %v666, %v666
      %v699 = vpack.c.bf16 %v667, %v667
      %v700 = vpack.c.bf16 %v668, %v668
      %v701 = vpack.c.bf16 %v669, %v669
      %v702 = vpack.c.bf16 %v670, %v670
      %v703 = vpack.c.bf16 %v671, %v671
      %v704 = vpack.c.bf16 %v672, %v672
      %v705 = vpack.c.bf16 %v673, %v673
      %v706 = vpack.c.bf16 %v674, %v674
      %v707 = vpack.c.bf16 %v675, %v675
      %v708 = vpack.c.bf16 %v676, %v676
      %v709 = vpack.c.bf16 %v677, %v677
      %v710 = vpack.c.bf16 %v678, %v678
      %v711 = vpack.c.bf16 %v679, %v679
      %v712 = vpack.c.bf16 %v680, %v680
      %v713 = vpack.c.bf16 %v681, %v681
      %v714 = vpack.c.bf16 %v682, %v682
      %v715 = vpack.c.bf16 %v683, %v683
      %v716 = vpack.c.bf16 %v684, %v684
      %v717 = vpack.c.bf16 %v685, %v685
      %v718 = vpack.c.bf16 %v686, %v686
      %v719 = vpack.c.bf16 %v687, %v687
      %v720 = vpack.c.bf16 %v688, %v688
      %v721 = vpack.c.bf16 %v689, %v689
      %v722 = vpack.c.bf16 %v690, %v690
      %v723 = vpack.c.bf16 %v691, %v691
      %v724 = vpack.c.bf16 %v692, %v692
      %v725 = vpack.c.bf16 %v693, %v693
      %v726 = vpack.c.bf16 %v694, %v694
      %v727 = vpack.c.bf16 %v695, %v695
      %v728 = vpack.c.bf16 %v696, %v696
      %vm729 = vcmask 519168
      %730 = vst.msk [vmem:[%s175] sm:$0xf] %vm729, %v697
      %731 = vst.msk [vmem:[%s175 + $0x4] sm:$0xf] %vm729, %v698
      %732 = vst.msk [vmem:[%s175 + $0x8] sm:$0xf] %vm729, %v699
      %733 = vst.msk [vmem:[%s175 + $0xc] sm:$0xf] %vm729, %v700
      %734 = vst.msk [vmem:[%s175 + $0x10] sm:$0xf] %vm729, %v701
      %735 = vst.msk [vmem:[%s175 + $0x14] sm:$0xf] %vm729, %v702
      %736 = vst.msk [vmem:[%s175 + $0x18] sm:$0xf] %vm729, %v703
      %737 = vst.msk [vmem:[%s175 + $0x1c] sm:$0xf] %vm729, %v704
      %738 = vst.msk [vmem:[%s175 + $0x20] sm:$0xf] %vm729, %v705
      %739 = vst.msk [vmem:[%s175 + $0x24] sm:$0xf] %vm729, %v706
      %740 = vst.msk [vmem:[%s175 + $0x28] sm:$0xf] %vm729, %v707
      %741 = vst.msk [vmem:[%s175 + $0x2c] sm:$0xf] %vm729, %v708
      %742 = vst.msk [vmem:[%s175 + $0x30] sm:$0xf] %vm729, %v709
      %743 = vst.msk [vmem:[%s175 + $0x34] sm:$0xf] %vm729, %v710
      %744 = vst.msk [vmem:[%s175 + $0x38] sm:$0xf] %vm729, %v711
      %745 = vst.msk [vmem:[%s175 + $0x3c] sm:$0xf] %vm729, %v712
      %746 = vst.msk [vmem:[%s175 + $0x40] sm:$0xf] %vm729, %v713
      %747 = vst.msk [vmem:[%s175 + $0x44] sm:$0xf] %vm729, %v714
      %748 = vst.msk [vmem:[%s175 + $0x48] sm:$0xf] %vm729, %v715
      %749 = vst.msk [vmem:[%s175 + $0x4c] sm:$0xf] %vm729, %v716
      %750 = vst.msk [vmem:[%s175 + $0x50] sm:$0xf] %vm729, %v717
      %751 = vst.msk [vmem:[%s175 + $0x54] sm:$0xf] %vm729, %v718
      %752 = vst.msk [vmem:[%s175 + $0x58] sm:$0xf] %vm729, %v719
      %753 = vst.msk [vmem:[%s175 + $0x5c] sm:$0xf] %vm729, %v720
      %754 = vst.msk [vmem:[%s175 + $0x60] sm:$0xf] %vm729, %v721
      %755 = vst.msk [vmem:[%s175 + $0x64] sm:$0xf] %vm729, %v722
      %756 = vst.msk [vmem:[%s175 + $0x68] sm:$0xf] %vm729, %v723
      %757 = vst.msk [vmem:[%s175 + $0x6c] sm:$0xf] %vm729, %v724
      %758 = vst.msk [vmem:[%s175 + $0x70] sm:$0xf] %vm729, %v725
      %759 = vst.msk [vmem:[%s175 + $0x74] sm:$0xf] %vm729, %v726
      %760 = vst.msk [vmem:[%s175 + $0x78] sm:$0xf] %vm729, %v727
      %761 = vst.msk [vmem:[%s175 + $0x7c] sm:$0xf] %vm729, %v728
      %s762 = smul.u32 32, %s14
      %p763 = scmp.lt.s32.totalorder %s762, 63
      %s764 = scalar_select %p763, %s762, 63
      %s765 = smul.addr %s764, 4
      %s766 = scalar_lea.vmem %s3, %s765
      // Predicated region
      $region33: #{domain_resnet_forward.6} parent=31 // pred_check
        %p767 = pneg %p100
      $region34: #{domain_resnet_forward.6} parent=31 // pred_check_branch
        %769 = sbr.rel (%p767) target = $region36
      $region35: #{domain_resnet_forward.6} parent=31 // pred_region
        %s770 = smul.u32 32, %s14
      $region36: #{domain_resnet_forward.6} parent=31 // pred_fallthru
        _
    $region32: #{domain_resnet_forward.6} parent=5 // pred_fallthru
      _
    %p771 = scmp.le.s32.totalorder 2, %s9
    // Predicated region
    $region37: #{domain_resnet_forward.6} parent=5 // pred_check
      %p772 = pneg %p771
    $region38: #{domain_resnet_forward.6} parent=5 // pred_check_branch
      %774 = sbr.rel (%p772) target = $region40
    $region39: #{domain_resnet_forward.6} parent=5 // pred_region
      %s775 = ssub.s32 %s9, 2
      // Predicated region
      $region41: #{domain_resnet_forward.6} parent=39 // pred_check
        %p776 = pneg %p106
      $region42: #{domain_resnet_forward.6} parent=39 // pred_check_branch
        %778 = sbr.rel (%p776) target = $region44
      $region43: #{domain_resnet_forward.6} parent=39 // pred_region
        %s779 = smul.u32 32, %s15
        %p780 = scmp.lt.s32.totalorder %s779, 63
        %s781 = scalar_select %p780, %s779, 63
        %s782 = smul.addr %s781, 4
        %s783 = scalar_lea.vmem %s3, %s782
      $region44: #{domain_resnet_forward.6} parent=39 // pred_fallthru
        _
    $region40: #{domain_resnet_forward.6} parent=5 // pred_fallthru
      _
  $region6: #{domain_resnet_forward.6} parent=0 // loop_footer
    %s13 = sadd.s32 1, %s9
  $region7: #{domain_resnet_forward.6} parent=0 // loop_footer_branch
    %8 = sbr.rel target = $region3
  $region8: #{domain_resnet_forward.6} parent=0 // loop_exit
    _

// kernel: domain_resnet_forward.7
$region0: #{domain_resnet_forward.7}
  #allocation0 [shape = 'u32[]', space=smem, size = 0x4, offset = 0x4, fixed_abs, tag = 'smem constant byte address 0x4 - core index']
  #allocation1 [shape = 'u32[72,128]{1,0:T(1,128)}', space=vmem, size = 0x9000, scoped, tag = 'internal scratch']
  %s0 = inlined_call_operand.vmem [shape: bf16[512,576], index: 0, kind: input, shape index: {}]
  %s1 = inlined_call_operand.vmem [shape: bf16[576,64], index: 1, kind: input, shape index: {}]
  %s2 = inlined_call_operand.vmem [shape: f32[1,64], index: 2, kind: input, shape index: {}]
  %s3 = inlined_call_operand.vmem [shape: bf16[512,64], index: 3, kind: output, shape index: {}]
  %s4 = sld [smem:[#allocation0]]
  $region45: #{domain_resnet_forward.7} parent=0
    _
  %s6 = ssub.s32 1, %s4
  %s7 = scalar_select 0, %s6, %s4
  loop: start=0, step=1, limit=4
  $region2: #{domain_resnet_forward.7} parent=0 // loop_pre_header
    _
  $region3: #{domain_resnet_forward.7} parent=0 // loop_header
    %s9 = sphi 0, %s13
    %p10 = scmp.ge.s32.totalorder %s9, 4
    %s19 = sphi 0, %s21
    %s22 = sphi 0, %s19
    %s23 = sphi 0, %s22
    %s39 = sphi 0, %s23
    %s43 = sphi 0, %s43
    %s45 = sphi 0, %s43
    %s46 = sphi 0, %s45
    %s60 = sphi 0, %s46
    %s64 = sphi 0, %s64
    %s66 = sphi 0, %s64
    %s67 = sphi 0, %s66
    %s81 = sphi 0, %s67
    %s87 = sphi 0, %s89
    %s90 = sphi 0, %s87
    %s91 = sphi 0, %s90
    %s107 = sphi 0, %s91
  $region4: #{domain_resnet_forward.7} parent=0 // loop_header_branch
    %12 = sbr.rel (%p10) target = $region8
  $region5: #{domain_resnet_forward.7} parent=0 // loop_body
    %s14 = ssub.s32 %s9, 1
    %s15 = ssub.s32 %s9, 2
    %s16 = sadd.s32 %s9, 1
    %s17 = ssub.s32 %s9, %s16
    %p18 = scmp.eq.s32.totalorder %s17, 0
    %s20 = sadd.s32 %s19, 1
    %s21 = scalar_select %p18, %s19, %s20
    %p24 = pneg %p18
    %p25 = scmp.eq.s32.totalorder %s9, 1
    %p26 = por %p24, %p25
    %p27 = scmp.ne.s32.totalorder %s19, %s22
    %p28 = scmp.eq.s32.totalorder %s9, 0
    %p29 = por %p27, %p28
    %p30 = scmp.ne.s32.totalorder %s19, %s22
    %p31 = scmp.eq.s32.totalorder %s14, 1
    %p32 = por %p30, %p31
    %p33 = scmp.ne.s32.totalorder %s22, %s23
    %p34 = scmp.eq.s32.totalorder %s14, 0
    %p35 = por %p33, %p34
    %p36 = scmp.ne.s32.totalorder %s22, %s23
    %p37 = scmp.eq.s32.totalorder %s15, 1
    %p38 = por %p36, %p37
    %p40 = scmp.ne.s32.totalorder %s23, %s39
    %p41 = scmp.eq.s32.totalorder %s15, 0
    %p42 = por %p40, %p41
    %s44 = sadd.s32 %s43, 1
    %p47 = scmp.eq.s32.totalorder %s9, 1
    %p48 = scmp.ne.s32.totalorder %s43, %s45
    %p49 = scmp.eq.s32.totalorder %s9, 0
    %p50 = por %p48, %p49
    %p51 = scmp.ne.s32.totalorder %s43, %s45
    %p52 = scmp.eq.s32.totalorder %s14, 1
    %p53 = por %p51, %p52
    %p54 = scmp.ne.s32.totalorder %s45, %s46
    %p55 = scmp.eq.s32.totalorder %s14, 0
    %p56 = por %p54, %p55
    %p57 = scmp.ne.s32.totalorder %s45, %s46
    %p58 = scmp.eq.s32.totalorder %s15, 1
    %p59 = por %p57, %p58
    %p61 = scmp.ne.s32.totalorder %s46, %s60
    %p62 = scmp.eq.s32.totalorder %s15, 0
    %p63 = por %p61, %p62
    %s65 = sadd.s32 %s64, 1
    %p68 = scmp.eq.s32.totalorder %s9, 1
    %p69 = scmp.ne.s32.totalorder %s64, %s66
    %p70 = scmp.eq.s32.totalorder %s9, 0
    %p71 = por %p69, %p70
    %p72 = scmp.ne.s32.totalorder %s64, %s66
    %p73 = scmp.eq.s32.totalorder %s14, 1
    %p74 = por %p72, %p73
    %p75 = scmp.ne.s32.totalorder %s66, %s67
    %p76 = scmp.eq.s32.totalorder %s14, 0
    %p77 = por %p75, %p76
    %p78 = scmp.ne.s32.totalorder %s66, %s67
    %p79 = scmp.eq.s32.totalorder %s15, 1
    %p80 = por %p78, %p79
    %p82 = scmp.ne.s32.totalorder %s67, %s81
    %p83 = scmp.eq.s32.totalorder %s15, 0
    %p84 = por %p82, %p83
    %s85 = ssub.s32 %s9, %s16
    %p86 = scmp.eq.s32.totalorder %s85, 0
    %s88 = sadd.s32 %s87, 1
    %s89 = scalar_select %p86, %s87, %s88
    %p92 = pneg %p86
    %p93 = scmp.eq.s32.totalorder %s9, 1
    %p94 = por %p92, %p93
    %p95 = scmp.ne.s32.totalorder %s87, %s90
    %p96 = scmp.eq.s32.totalorder %s9, 0
    %p97 = por %p95, %p96
    %p98 = scmp.ne.s32.totalorder %s87, %s90
    %p99 = scmp.eq.s32.totalorder %s14, 1
    %p100 = por %p98, %p99
    %p101 = scmp.ne.s32.totalorder %s90, %s91
    %p102 = scmp.eq.s32.totalorder %s14, 0
    %p103 = por %p101, %p102
    %p104 = scmp.ne.s32.totalorder %s90, %s91
    %p105 = scmp.eq.s32.totalorder %s15, 1
    %p106 = por %p104, %p105
    %p108 = scmp.ne.s32.totalorder %s91, %s107
    %p109 = scmp.eq.s32.totalorder %s15, 0
    %p110 = por %p108, %p109
    %p111 = scmp.le.s32.totalorder 1, %s9
    %p112 = scmp.lt.s32.totalorder %s9, 3
    %p113 = pnand %p111, %p112
    %p114 = pneg %p113
    // Predicated region
    $region9: #{domain_resnet_forward.7} parent=5 // pred_check
      _
    $region10: #{domain_resnet_forward.7} parent=5 // pred_check_branch
      %116 = sbr.rel (%p113) target = $region12
    $region11: #{domain_resnet_forward.7} parent=5 // pred_region
      %s117 = ssub.s32 %s9, 1
      // Predicated region
      $region13: #{domain_resnet_forward.7} parent=11 // pred_check
        %p118 = pneg %p56
      $region14: #{domain_resnet_forward.7} parent=11 // pred_check_branch
        %120 = sbr.rel (%p118) target = $region16
      $region15: #{domain_resnet_forward.7} parent=11 // pred_region
        _
      $region16: #{domain_resnet_forward.7} parent=11 // pred_fallthru
        _
      // Predicated region
      $region17: #{domain_resnet_forward.7} parent=11 // pred_check
        %p121 = pneg %p77
      $region18: #{domain_resnet_forward.7} parent=11 // pred_check_branch
        %123 = sbr.rel (%p121) target = $region20
      $region19: #{domain_resnet_forward.7} parent=11 // pred_region
        _
      $region20: #{domain_resnet_forward.7} parent=11 // pred_fallthru
        _
    $region12: #{domain_resnet_forward.7} parent=5 // pred_fallthru
      _
    %p124 = scmp.lt.s32.totalorder %s9, 2
    // Predicated region
    $region21: #{domain_resnet_forward.7} parent=5 // pred_check
      %p125 = pneg %p124
    $region22: #{domain_resnet_forward.7} parent=5 // pred_check_branch
      %127 = sbr.rel (%p125) target = $region24
    $region23: #{domain_resnet_forward.7} parent=5 // pred_region
      // Predicated region
      $region25: #{domain_resnet_forward.7} parent=23 // pred_check
        %p128 = pneg %p29
      $region26: #{domain_resnet_forward.7} parent=23 // pred_check_branch
        %130 = sbr.rel (%p128) target = $region28
      $region27: #{domain_resnet_forward.7} parent=23 // pred_region
        %s131 = smul.u32 32, %s9
        %p132 = scmp.lt.s32.totalorder %s131, 63
        %s133 = scalar_select %p132, %s131, 63
        %s134 = smul.addr %s133, 5
        %s135 = smul.addr %s134, 4
        %s136 = scalar_lea.vmem %s0, %s135
        %s137 = smul.u32 32, %s9
      $region28: #{domain_resnet_forward.7} parent=23 // pred_fallthru
        _
    $region24: #{domain_resnet_forward.7} parent=5 // pred_fallthru
      _
    %p138 = scmp.le.s32.totalorder 1, %s9
    %p139 = scmp.lt.s32.totalorder %s9, 3
    %p140 = pnand %p138, %p139
    %p141 = pneg %p140
    // Predicated region
    $region29: #{domain_resnet_forward.7} parent=5 // pred_check
      _
    $region30: #{domain_resnet_forward.7} parent=5 // pred_check_branch
      %143 = sbr.rel (%p140) target = $region32
    $region31: #{domain_resnet_forward.7} parent=5 // pred_region
      %s144 = ssub.s32 %s9, 1
      %s145 = smul.u32 32, %s14
      %p146 = scmp.lt.s32.totalorder %s145, 63
      %s147 = scalar_select %p146, %s145, 63
      %s148 = smul.addr %s147, 5
      %s149 = smul.addr %s148, 4
      %s150 = scalar_lea.vmem %s0, %s149
      %p151 = pneg %p35
      %p152 = pneg %p32
      %p153 = pneg %p56
      %p154 = pneg %p53
      %p155 = pneg %p77
      %p156 = pneg %p74
      %p157 = pneg %p103
      %p158 = pneg %p100
      %s159 = smul.u32 32, %s14
      %p160 = scmp.lt.s32.totalorder %s159, 63
      %s161 = scalar_select %p160, %s159, 63
      %s162 = smul.addr %s161, 4
      %s163 = scalar_lea.vmem %s3, %s162
      %s164 = smul.u32 32, %s14
      %p165 = scmp.lt.s32.totalorder %s164, 63
      %s166 = scalar_select %p165, %s164, 63
      %s167 = smul.addr %s166, 5
      %s168 = smul.addr %s167, 4
      %s169 = scalar_lea.vmem %s0, %s168
      %s170 = smul.u32 32, %s14
      %s171 = smul.u32 32, %s14
      %p172 = scmp.lt.s32.totalorder %s171, 63
      %s173 = scalar_select %p172, %s171, 63
      %s174 = smul.addr %s173, 4
      %s175 = scalar_lea.vmem %s3, %s174
      %s176 = smul.u32 32, %s14
      %v178 = vld [vmem:[%s169] sm:$0xff]
      %v179 = vld [vmem:[%s169 + $0x8] sm:$0xff]
      %v180 = vld [vmem:[%s169 + $0x10] sm:$0xf]
      %v181 = vld [vmem:[%s169 + $0x14] sm:$0xff]
      %v182 = vld [vmem:[%s169 + $0x1c] sm:$0xff]
      %v183 = vld [vmem:[%s169 + $0x24] sm:$0xf]
      %v184 = vld [vmem:[%s169 + $0x28] sm:$0xff]
      %v185 = vld [vmem:[%s169 + $0x30] sm:$0xff]
      %v186 = vld [vmem:[%s169 + $0x38] sm:$0xf]
      %v187 = vld [vmem:[%s169 + $0x3c] sm:$0xff]
      %v188 = vld [vmem:[%s169 + $0x44] sm:$0xff]
      %v189 = vld [vmem:[%s169 + $0x4c] sm:$0xf]
      %v190 = vld [vmem:[%s169 + $0x50] sm:$0xff]
      %v191 = vld [vmem:[%s169 + $0x58] sm:$0xff]
      %v192 = vld [vmem:[%s169 + $0x60] sm:$0xf]
      %v193 = vld [vmem:[%s169 + $0x64] sm:$0xff]
      %v194 = vld [vmem:[%s169 + $0x6c] sm:$0xff]
      %v195 = vld [vmem:[%s169 + $0x74] sm:$0xf]
      %v196 = vld [vmem:[%s169 + $0x78] sm:$0xff]
      %v197 = vld [vmem:[%s169 + $0x80] sm:$0xff]
      %v198 = vld [vmem:[%s169 + $0x88] sm:$0xf]
      %v199 = vld [vmem:[%s169 + $0x8c] sm:$0xff]
      %v200 = vld [vmem:[%s169 + $0x94] sm:$0xff]
      %v201 = vld [vmem:[%s169 + $0x9c] sm:$0xf]
      %v202 = vld [vmem:[%s169 + $0xa0] sm:$0xff]
      %v203 = vld [vmem:[%s169 + $0xa8] sm:$0xff]
      %v204 = vld [vmem:[%s169 + $0xb0] sm:$0xf]
      %v205 = vld [vmem:[%s169 + $0xb4] sm:$0xff]
      %v206 = vld [vmem:[%s169 + $0xbc] sm:$0xff]
      %v207 = vld [vmem:[%s169 + $0xc4] sm:$0xf]
      %v208 = vld [vmem:[%s169 + $0xc8] sm:$0xff]
      %v209 = vld [vmem:[%s169 + $0xd0] sm:$0xff]
      %v210 = vld [vmem:[%s169 + $0xd8] sm:$0xf]
      %v211 = vld [vmem:[%s169 + $0xdc] sm:$0xff]
      %v212 = vld [vmem:[%s169 + $0xe4] sm:$0xff]
      %v213 = vld [vmem:[%s169 + $0xec] sm:$0xf]
      %v214 = vld [vmem:[%s169 + $0xf0] sm:$0xff]
      %v215 = vld [vmem:[%s169 + $0xf8] sm:$0xff]
      %v216 = vld [vmem:[%s169 + $0x100] sm:$0xf]
      %v217 = vld [vmem:[%s169 + $0x104] sm:$0xff]
      %v218 = vld [vmem:[%s169 + $0x10c] sm:$0xff]
      %v219 = vld [vmem:[%s169 + $0x114] sm:$0xf]
      %v220 = vld [vmem:[%s169 + $0x118] sm:$0xff]
      %v221 = vld [vmem:[%s169 + $0x120] sm:$0xff]
      %v222 = vld [vmem:[%s169 + $0x128] sm:$0xf]
      %v223 = vld [vmem:[%s169 + $0x12c] sm:$0xff]
      %v224 = vld [vmem:[%s169 + $0x134] sm:$0xff]
      %v225 = vld [vmem:[%s169 + $0x13c] sm:$0xf]
      %v226 = vld [vmem:[%s169 + $0x140] sm:$0xff]
      %v227 = vld [vmem:[%s169 + $0x148] sm:$0xff]
      %v228 = vld [vmem:[%s169 + $0x150] sm:$0xf]
      %v229 = vld [vmem:[%s169 + $0x154] sm:$0xff]
      %v230 = vld [vmem:[%s169 + $0x15c] sm:$0xff]
      %v231 = vld [vmem:[%s169 + $0x164] sm:$0xf]
      %v232 = vld [vmem:[%s169 + $0x168] sm:$0xff]
      %v233 = vld [vmem:[%s169 + $0x170] sm:$0xff]
      %v234 = vld [vmem:[%s169 + $0x178] sm:$0xf]
      %v235 = vld [vmem:[%s169 + $0x17c] sm:$0xff]
      %v236 = vld [vmem:[%s169 + $0x184] sm:$0xff]
      %v237 = vld [vmem:[%s169 + $0x18c] sm:$0xf]
      %v238 = vld [vmem:[%s169 + $0x190] sm:$0xff]
      %v239 = vld [vmem:[%s169 + $0x198] sm:$0xff]
      %v240 = vld [vmem:[%s169 + $0x1a0] sm:$0xf]
      %v241 = vld [vmem:[%s169 + $0x1a4] sm:$0xff]
      %v242 = vld [vmem:[%s169 + $0x1ac] sm:$0xff]
      %v243 = vld [vmem:[%s169 + $0x1b4] sm:$0xf]
      %v244 = vld [vmem:[%s169 + $0x1b8] sm:$0xff]
      %v245 = vld [vmem:[%s169 + $0x1c0] sm:$0xff]
      %v246 = vld [vmem:[%s169 + $0x1c8] sm:$0xf]
      %v247 = vld [vmem:[%s169 + $0x1cc] sm:$0xff]
      %v248 = vld [vmem:[%s169 + $0x1d4] sm:$0xff]
      %v249 = vld [vmem:[%s169 + $0x1dc] sm:$0xf]
      %v250 = vld [vmem:[%s169 + $0x1e0] sm:$0xff]
      %v251 = vld [vmem:[%s169 + $0x1e8] sm:$0xff]
      %v252 = vld [vmem:[%s169 + $0x1f0] sm:$0xf]
      %v253 = vld [vmem:[%s169 + $0x1f4] sm:$0xff]
      %v254 = vld [vmem:[%s169 + $0x1fc] sm:$0xff]
      %v255 = vld [vmem:[%s169 + $0x204] sm:$0xf]
      %v256 = vld [vmem:[%s169 + $0x208] sm:$0xff]
      %v257 = vld [vmem:[%s169 + $0x210] sm:$0xff]
      %v258 = vld [vmem:[%s169 + $0x218] sm:$0xf]
      %v259 = vld [vmem:[%s169 + $0x21c] sm:$0xff]
      %v260 = vld [vmem:[%s169 + $0x224] sm:$0xff]
      %v261 = vld [vmem:[%s169 + $0x22c] sm:$0xf]
      %v262 = vld [vmem:[%s169 + $0x230] sm:$0xff]
      %v263 = vld [vmem:[%s169 + $0x238] sm:$0xff]
      %v264 = vld [vmem:[%s169 + $0x240] sm:$0xf]
      %v265 = vld [vmem:[%s169 + $0x244] sm:$0xff]
      %v266 = vld [vmem:[%s169 + $0x24c] sm:$0xff]
      %v267 = vld [vmem:[%s169 + $0x254] sm:$0xf]
      %v268 = vld [vmem:[%s169 + $0x258] sm:$0xff]
      %v269 = vld [vmem:[%s169 + $0x260] sm:$0xff]
      %v270 = vld [vmem:[%s169 + $0x268] sm:$0xf]
      %v271 = vld [vmem:[%s169 + $0x26c] sm:$0xff]
      %v272 = vld [vmem:[%s169 + $0x274] sm:$0xff]
      %v273 = vld [vmem:[%s169 + $0x27c] sm:$0xf]
      %v274 = vld [vmem:[%s1] sm:$0xf]
      %v275 = vld [vmem:[%s1 + $0x4] sm:$0xf]
      %v276 = vld [vmem:[%s1 + $0x8] sm:$0xf]
      %v277 = vld [vmem:[%s1 + $0xc] sm:$0xf]
      %v278 = vld [vmem:[%s1 + $0x10] sm:$0xf]
      %v279 = vld [vmem:[%s1 + $0x14] sm:$0xf]
      %v280 = vld [vmem:[%s1 + $0x18] sm:$0xf]
      %v281 = vld [vmem:[%s1 + $0x1c] sm:$0xf]
      %v282 = vld [vmem:[%s1 + $0x20] sm:$0xf]
      %v283 = vld [vmem:[%s1 + $0x24] sm:$0xf]
      %v284 = vld [vmem:[%s1 + $0x28] sm:$0xf]
      %v285 = vld [vmem:[%s1 + $0x2c] sm:$0xf]
      %v286 = vld [vmem:[%s1 + $0x30] sm:$0xf]
      %v287 = vld [vmem:[%s1 + $0x34] sm:$0xf]
      %v288 = vld [vmem:[%s1 + $0x38] sm:$0xf]
      %v289 = vld [vmem:[%s1 + $0x3c] sm:$0xf]
      %v290 = vld [vmem:[%s1 + $0x40] sm:$0xf]
      %v291 = vld [vmem:[%s1 + $0x44] sm:$0xf]
      %v292 = vld [vmem:[%s1 + $0x48] sm:$0xf]
      %v293 = vld [vmem:[%s1 + $0x4c] sm:$0xf]
      %v294 = vld [vmem:[%s1 + $0x50] sm:$0xf]
      %v295 = vld [vmem:[%s1 + $0x54] sm:$0xf]
      %v296 = vld [vmem:[%s1 + $0x58] sm:$0xf]
      %v297 = vld [vmem:[%s1 + $0x5c] sm:$0xf]
      %v298 = vld [vmem:[%s1 + $0x60] sm:$0xf]
      %v299 = vld [vmem:[%s1 + $0x64] sm:$0xf]
      %v300 = vld [vmem:[%s1 + $0x68] sm:$0xf]
      %v301 = vld [vmem:[%s1 + $0x6c] sm:$0xf]
      %v302 = vld [vmem:[%s1 + $0x70] sm:$0xf]
      %v303 = vld [vmem:[%s1 + $0x74] sm:$0xf]
      %v304 = vld [vmem:[%s1 + $0x78] sm:$0xf]
      %v305 = vld [vmem:[%s1 + $0x7c] sm:$0xf]
      %v306 = vld [vmem:[%s1 + $0x80] sm:$0xf]
      %v307 = vld [vmem:[%s1 + $0x84] sm:$0xf]
      %v308 = vld [vmem:[%s1 + $0x88] sm:$0xf]
      %v309 = vld [vmem:[%s1 + $0x8c] sm:$0xf]
      %v310 = vld [vmem:[%s1 + $0x90] sm:$0xf]
      %v311 = vld [vmem:[%s1 + $0x94] sm:$0xf]
      %v312 = vld [vmem:[%s1 + $0x98] sm:$0xf]
      %v313 = vld [vmem:[%s1 + $0x9c] sm:$0xf]
      %v314 = vld [vmem:[%s1 + $0xa0] sm:$0xf]
      %v315 = vld [vmem:[%s1 + $0xa4] sm:$0xf]
      %v316 = vld [vmem:[%s1 + $0xa8] sm:$0xf]
      %v317 = vld [vmem:[%s1 + $0xac] sm:$0xf]
      %v318 = vld [vmem:[%s1 + $0xb0] sm:$0xf]
      %v319 = vld [vmem:[%s1 + $0xb4] sm:$0xf]
      %v320 = vld [vmem:[%s1 + $0xb8] sm:$0xf]
      %v321 = vld [vmem:[%s1 + $0xbc] sm:$0xf]
      %v322 = vld [vmem:[%s1 + $0xc0] sm:$0xf]
      %v323 = vld [vmem:[%s1 + $0xc4] sm:$0xf]
      %v324 = vld [vmem:[%s1 + $0xc8] sm:$0xf]
      %v325 = vld [vmem:[%s1 + $0xcc] sm:$0xf]
      %v326 = vld [vmem:[%s1 + $0xd0] sm:$0xf]
      %v327 = vld [vmem:[%s1 + $0xd4] sm:$0xf]
      %v328 = vld [vmem:[%s1 + $0xd8] sm:$0xf]
      %v329 = vld [vmem:[%s1 + $0xdc] sm:$0xf]
      %v330 = vld [vmem:[%s1 + $0xe0] sm:$0xf]
      %v331 = vld [vmem:[%s1 + $0xe4] sm:$0xf]
      %v332 = vld [vmem:[%s1 + $0xe8] sm:$0xf]
      %v333 = vld [vmem:[%s1 + $0xec] sm:$0xf]
      %v334 = vld [vmem:[%s1 + $0xf0] sm:$0xf]
      %v335 = vld [vmem:[%s1 + $0xf4] sm:$0xf]
      %v336 = vld [vmem:[%s1 + $0xf8] sm:$0xf]
      %v337 = vld [vmem:[%s1 + $0xfc] sm:$0xf]
      %v338 = vld [vmem:[%s1 + $0x100] sm:$0xf]
      %v339 = vld [vmem:[%s1 + $0x104] sm:$0xf]
      %v340 = vld [vmem:[%s1 + $0x108] sm:$0xf]
      %v341 = vld [vmem:[%s1 + $0x10c] sm:$0xf]
      %v342 = vld [vmem:[%s1 + $0x110] sm:$0xf]
      %v343 = vld [vmem:[%s1 + $0x114] sm:$0xf]
      %v344 = vld [vmem:[%s1 + $0x118] sm:$0xf]
      %v345 = vld [vmem:[%s1 + $0x11c] sm:$0xf]
      %v346 = vld [vmem:[%s2] sm:$0x1]
      %v348 = vperm.slane %v346, 0
      %v446 = vunpack.c.l.b16 %v178
      %v447 = vunpack.c.h.b16 %v178
      %v448 = vunpack.c.l.b16 %v179
      %v449 = vunpack.c.h.b16 %v179
      %v450 = vunpack.c.l.b16 %v180
      %v451 = vunpack.c.l.b16 %v181
      %v452 = vunpack.c.h.b16 %v181
      %v453 = vunpack.c.l.b16 %v182
      %v454 = vunpack.c.h.b16 %v182
      %v455 = vunpack.c.l.b16 %v183
      %v456 = vunpack.c.l.b16 %v184
      %v457 = vunpack.c.h.b16 %v184
      %v458 = vunpack.c.l.b16 %v185
      %v459 = vunpack.c.h.b16 %v185
      %v460 = vunpack.c.l.b16 %v186
      %v461 = vunpack.c.l.b16 %v187
      %v462 = vunpack.c.h.b16 %v187
      %v463 = vunpack.c.l.b16 %v188
      %v464 = vunpack.c.h.b16 %v188
      %v465 = vunpack.c.l.b16 %v189
      %v466 = vunpack.c.l.b16 %v190
      %v467 = vunpack.c.h.b16 %v190
      %v468 = vunpack.c.l.b16 %v191
      %v469 = vunpack.c.h.b16 %v191
      %v470 = vunpack.c.l.b16 %v192
      %v471 = vunpack.c.l.b16 %v193
      %v472 = vunpack.c.h.b16 %v193
      %v473 = vunpack.c.l.b16 %v194
      %v474 = vunpack.c.h.b16 %v194
      %v475 = vunpack.c.l.b16 %v195
      %v476 = vunpack.c.l.b16 %v196
      %v477 = vunpack.c.h.b16 %v196
      %v478 = vunpack.c.l.b16 %v197
      %v479 = vunpack.c.h.b16 %v197
      %v480 = vunpack.c.l.b16 %v198
      %v481 = vunpack.c.l.b16 %v199
      %v482 = vunpack.c.h.b16 %v199
      %v483 = vunpack.c.l.b16 %v200
      %v484 = vunpack.c.h.b16 %v200
      %v485 = vunpack.c.l.b16 %v201
      %v486 = vunpack.c.l.b16 %v202
      %v487 = vunpack.c.h.b16 %v202
      %v488 = vunpack.c.l.b16 %v203
      %v489 = vunpack.c.h.b16 %v203
      %v490 = vunpack.c.l.b16 %v204
      %v491 = vunpack.c.l.b16 %v205
      %v492 = vunpack.c.h.b16 %v205
      %v493 = vunpack.c.l.b16 %v206
      %v494 = vunpack.c.h.b16 %v206
      %v495 = vunpack.c.l.b16 %v207
      %v496 = vunpack.c.l.b16 %v208
      %v497 = vunpack.c.h.b16 %v208
      %v498 = vunpack.c.l.b16 %v209
      %v499 = vunpack.c.h.b16 %v209
      %v500 = vunpack.c.l.b16 %v210
      %v501 = vunpack.c.l.b16 %v211
      %v502 = vunpack.c.h.b16 %v211
      %v503 = vunpack.c.l.b16 %v212
      %v504 = vunpack.c.h.b16 %v212
      %v505 = vunpack.c.l.b16 %v213
      %v506 = vunpack.c.l.b16 %v214
      %v507 = vunpack.c.h.b16 %v214
      %v508 = vunpack.c.l.b16 %v215
      %v509 = vunpack.c.h.b16 %v215
      %v510 = vunpack.c.l.b16 %v216
      %v511 = vunpack.c.l.b16 %v217
      %v512 = vunpack.c.h.b16 %v217
      %v513 = vunpack.c.l.b16 %v218
      %v514 = vunpack.c.h.b16 %v218
      %v515 = vunpack.c.l.b16 %v219
      %v516 = vunpack.c.l.b16 %v220
      %v517 = vunpack.c.h.b16 %v220
      %v518 = vunpack.c.l.b16 %v221
      %v519 = vunpack.c.h.b16 %v221
      %v520 = vunpack.c.l.b16 %v222
      %v521 = vunpack.c.l.b16 %v223
      %v522 = vunpack.c.h.b16 %v223
      %v523 = vunpack.c.l.b16 %v224
      %v524 = vunpack.c.h.b16 %v224
      %v525 = vunpack.c.l.b16 %v225
      %v526 = vunpack.c.l.b16 %v226
      %v527 = vunpack.c.h.b16 %v226
      %v528 = vunpack.c.l.b16 %v227
      %v529 = vunpack.c.h.b16 %v227
      %v530 = vunpack.c.l.b16 %v228
      %v531 = vunpack.c.l.b16 %v229
      %v532 = vunpack.c.h.b16 %v229
      %v533 = vunpack.c.l.b16 %v230
      %v534 = vunpack.c.h.b16 %v230
      %v535 = vunpack.c.l.b16 %v231
      %v536 = vunpack.c.l.b16 %v232
      %v537 = vunpack.c.h.b16 %v232
      %v538 = vunpack.c.l.b16 %v233
      %v539 = vunpack.c.h.b16 %v233
      %v540 = vunpack.c.l.b16 %v234
      %v541 = vunpack.c.l.b16 %v235
      %v542 = vunpack.c.h.b16 %v235
      %v543 = vunpack.c.l.b16 %v236
      %v544 = vunpack.c.h.b16 %v236
      %v545 = vunpack.c.l.b16 %v237
      %v546 = vunpack.c.l.b16 %v238
      %v547 = vunpack.c.h.b16 %v238
      %v548 = vunpack.c.l.b16 %v239
      %v549 = vunpack.c.h.b16 %v239
      %v550 = vunpack.c.l.b16 %v240
      %v551 = vunpack.c.l.b16 %v241
      %v552 = vunpack.c.h.b16 %v241
      %v553 = vunpack.c.l.b16 %v242
      %v554 = vunpack.c.h.b16 %v242
      %v555 = vunpack.c.l.b16 %v243
      %v556 = vunpack.c.l.b16 %v244
      %v557 = vunpack.c.h.b16 %v244
      %v558 = vunpack.c.l.b16 %v245
      %v559 = vunpack.c.h.b16 %v245
      %v560 = vunpack.c.l.b16 %v246
      %v561 = vunpack.c.l.b16 %v247
      %v562 = vunpack.c.h.b16 %v247
      %v563 = vunpack.c.l.b16 %v248
      %v564 = vunpack.c.h.b16 %v248
      %v565 = vunpack.c.l.b16 %v249
      %v566 = vunpack.c.l.b16 %v250
      %v567 = vunpack.c.h.b16 %v250
      %v568 = vunpack.c.l.b16 %v251
      %v569 = vunpack.c.h.b16 %v251
      %v570 = vunpack.c.l.b16 %v252
      %v571 = vunpack.c.l.b16 %v253
      %v572 = vunpack.c.h.b16 %v253
      %v573 = vunpack.c.l.b16 %v254
      %v574 = vunpack.c.h.b16 %v254
      %v575 = vunpack.c.l.b16 %v255
      %v576 = vunpack.c.l.b16 %v256
      %v577 = vunpack.c.h.b16 %v256
      %v578 = vunpack.c.l.b16 %v257
      %v579 = vunpack.c.h.b16 %v257
      %v580 = vunpack.c.l.b16 %v258
      %v581 = vunpack.c.l.b16 %v259
      %v582 = vunpack.c.h.b16 %v259
      %v583 = vunpack.c.l.b16 %v260
      %v584 = vunpack.c.h.b16 %v260
      %v585 = vunpack.c.l.b16 %v261
      %v586 = vunpack.c.l.b16 %v262
      %v587 = vunpack.c.h.b16 %v262
      %v588 = vunpack.c.l.b16 %v263
      %v589 = vunpack.c.h.b16 %v263
      %v590 = vunpack.c.l.b16 %v264
      %v591 = vunpack.c.l.b16 %v265
      %v592 = vunpack.c.h.b16 %v265
      %v593 = vunpack.c.l.b16 %v266
      %v594 = vunpack.c.h.b16 %v266
      %v595 = vunpack.c.l.b16 %v267
      %v596 = vunpack.c.l.b16 %v268
      %v597 = vunpack.c.h.b16 %v268
      %v598 = vunpack.c.l.b16 %v269
      %v599 = vunpack.c.h.b16 %v269
      %v600 = vunpack.c.l.b16 %v270
      %v601 = vunpack.c.l.b16 %v271
      %v602 = vunpack.c.h.b16 %v271
      %v603 = vunpack.c.l.b16 %v272
      %v604 = vunpack.c.h.b16 %v272
      %v605 = vunpack.c.l.b16 %v273
      %v606 = vpack.c.b16 %v451, %v446
      %v607 = vpack.c.b16 %v452, %v447
      %v608 = vpack.c.b16 %v453, %v448
      %v609 = vpack.c.b16 %v454, %v449
      %v610 = vpack.c.b16 %v455, %v450
      %v611 = vpack.c.b16 %v461, %v456
      %v612 = vpack.c.b16 %v462, %v457
      %v613 = vpack.c.b16 %v463, %v458
      %v614 = vpack.c.b16 %v464, %v459
      %v615 = vpack.c.b16 %v465, %v460
      %v616 = vpack.c.b16 %v471, %v466
      %v617 = vpack.c.b16 %v472, %v467
      %v618 = vpack.c.b16 %v473, %v468
      %v619 = vpack.c.b16 %v474, %v469
      %v620 = vpack.c.b16 %v475, %v470
      %v621 = vpack.c.b16 %v481, %v476
      %v622 = vpack.c.b16 %v482, %v477
      %v623 = vpack.c.b16 %v483, %v478
      %v624 = vpack.c.b16 %v484, %v479
      %v625 = vpack.c.b16 %v485, %v480
      %v626 = vpack.c.b16 %v491, %v486
      %v627 = vpack.c.b16 %v492, %v487
      %v628 = vpack.c.b16 %v493, %v488
      %v629 = vpack.c.b16 %v494, %v489
      %v630 = vpack.c.b16 %v495, %v490
      %v631 = vpack.c.b16 %v501, %v496
      %v632 = vpack.c.b16 %v502, %v497
      %v633 = vpack.c.b16 %v503, %v498
      %v634 = vpack.c.b16 %v504, %v499
      %v635 = vpack.c.b16 %v505, %v500
      %v636 = vpack.c.b16 %v511, %v506
      %v637 = vpack.c.b16 %v512, %v507
      %v638 = vpack.c.b16 %v513, %v508
      %v639 = vpack.c.b16 %v514, %v509
      %v640 = vpack.c.b16 %v515, %v510
      %v641 = vpack.c.b16 %v521, %v516
      %v642 = vpack.c.b16 %v522, %v517
      %v643 = vpack.c.b16 %v523, %v518
      %v644 = vpack.c.b16 %v524, %v519
      %v645 = vpack.c.b16 %v525, %v520
      %v646 = vpack.c.b16 %v531, %v526
      %v647 = vpack.c.b16 %v532, %v527
      %v648 = vpack.c.b16 %v533, %v528
      %v649 = vpack.c.b16 %v534, %v529
      %v650 = vpack.c.b16 %v535, %v530
      %v651 = vpack.c.b16 %v541, %v536
      %v652 = vpack.c.b16 %v542, %v537
      %v653 = vpack.c.b16 %v543, %v538
      %v654 = vpack.c.b16 %v544, %v539
      %v655 = vpack.c.b16 %v545, %v540
      %v656 = vpack.c.b16 %v551, %v546
      %v657 = vpack.c.b16 %v552, %v547
      %v658 = vpack.c.b16 %v553, %v548
      %v659 = vpack.c.b16 %v554, %v549
      %v660 = vpack.c.b16 %v555, %v550
      %v661 = vpack.c.b16 %v561, %v556
      %v662 = vpack.c.b16 %v562, %v557
      %v663 = vpack.c.b16 %v563, %v558
      %v664 = vpack.c.b16 %v564, %v559
      %v665 = vpack.c.b16 %v565, %v560
      %v666 = vpack.c.b16 %v571, %v566
      %v667 = vpack.c.b16 %v572, %v567
      %v668 = vpack.c.b16 %v573, %v568
      %v669 = vpack.c.b16 %v574, %v569
      %v670 = vpack.c.b16 %v575, %v570
      %v671 = vpack.c.b16 %v581, %v576
      %v672 = vpack.c.b16 %v582, %v577
      %v673 = vpack.c.b16 %v583, %v578
      %v674 = vpack.c.b16 %v584, %v579
      %v675 = vpack.c.b16 %v585, %v580
      %v676 = vpack.c.b16 %v591, %v586
      %v677 = vpack.c.b16 %v592, %v587
      %v678 = vpack.c.b16 %v593, %v588
      %v679 = vpack.c.b16 %v594, %v589
      %v680 = vpack.c.b16 %v595, %v590
      %v681 = vpack.c.b16 %v601, %v596
      %v682 = vpack.c.b16 %v602, %v597
      %v683 = vpack.c.b16 %v603, %v598
      %v684 = vpack.c.b16 %v604, %v599
      %v685 = vpack.c.b16 %v605, %v600
      %v822 = vunpack.c.l.b16 %v274
      %v823 = vunpack.c.l.b16 %v275
      %v824 = vunpack.c.l.b16 %v276
      %v825 = vunpack.c.l.b16 %v277
      %v826 = vunpack.c.l.b16 %v278
      %v827 = vunpack.c.l.b16 %v279
      %v828 = vunpack.c.l.b16 %v280
      %v829 = vunpack.c.l.b16 %v281
      %v830 = vunpack.c.l.b16 %v282
      %v831 = vunpack.c.l.b16 %v283
      %v832 = vunpack.c.l.b16 %v284
      %v833 = vunpack.c.l.b16 %v285
      %v834 = vunpack.c.l.b16 %v286
      %v835 = vunpack.c.l.b16 %v287
      %v836 = vunpack.c.l.b16 %v288
      %v837 = vunpack.c.l.b16 %v289
      %v838 = vunpack.c.l.b16 %v290
      %v839 = vunpack.c.l.b16 %v291
      %v840 = vunpack.c.l.b16 %v292
      %v841 = vunpack.c.l.b16 %v293
      %v842 = vunpack.c.l.b16 %v294
      %v843 = vunpack.c.l.b16 %v295
      %v844 = vunpack.c.l.b16 %v296
      %v845 = vunpack.c.l.b16 %v297
      %v846 = vunpack.c.l.b16 %v298
      %v847 = vunpack.c.l.b16 %v299
      %v848 = vunpack.c.l.b16 %v300
      %v849 = vunpack.c.l.b16 %v301
      %v850 = vunpack.c.l.b16 %v302
      %v851 = vunpack.c.l.b16 %v303
      %v852 = vunpack.c.l.b16 %v304
      %v853 = vunpack.c.l.b16 %v305
      %v854 = vunpack.c.l.b16 %v306
      %v855 = vunpack.c.l.b16 %v307
      %v856 = vunpack.c.l.b16 %v308
      %v857 = vunpack.c.l.b16 %v309
      %v858 = vunpack.c.l.b16 %v310
      %v859 = vunpack.c.l.b16 %v311
      %v860 = vunpack.c.l.b16 %v312
      %v861 = vunpack.c.l.b16 %v313
      %v862 = vunpack.c.l.b16 %v314
      %v863 = vunpack.c.l.b16 %v315
      %v864 = vunpack.c.l.b16 %v316
      %v865 = vunpack.c.l.b16 %v317
      %v866 = vunpack.c.l.b16 %v318
      %v867 = vunpack.c.l.b16 %v319
      %v868 = vunpack.c.l.b16 %v320
      %v869 = vunpack.c.l.b16 %v321
      %v870 = vunpack.c.l.b16 %v322
      %v871 = vunpack.c.l.b16 %v323
      %v872 = vunpack.c.l.b16 %v324
      %v873 = vunpack.c.l.b16 %v325
      %v874 = vunpack.c.l.b16 %v326
      %v875 = vunpack.c.l.b16 %v327
      %v876 = vunpack.c.l.b16 %v328
      %v877 = vunpack.c.l.b16 %v329
      %v878 = vunpack.c.l.b16 %v330
      %v879 = vunpack.c.l.b16 %v331
      %v880 = vunpack.c.l.b16 %v332
      %v881 = vunpack.c.l.b16 %v333
      %v882 = vunpack.c.l.b16 %v334
      %v883 = vunpack.c.l.b16 %v335
      %v884 = vunpack.c.l.b16 %v336
      %v885 = vunpack.c.l.b16 %v337
      %v886 = vunpack.c.l.b16 %v338
      %v887 = vunpack.c.l.b16 %v339
      %v888 = vunpack.c.l.b16 %v340
      %v889 = vunpack.c.l.b16 %v341
      %v890 = vunpack.c.l.b16 %v342
      %v891 = vunpack.c.l.b16 %v343
      %v892 = vunpack.c.l.b16 %v344
      %v893 = vunpack.c.l.b16 %v345
      %v894 = vpack.c.b16 %v823, %v822
      %v895 = vpack.c.b16 %v825, %v824
      %v896 = vpack.c.b16 %v827, %v826
      %v897 = vpack.c.b16 %v829, %v828
      %v898 = vpack.c.b16 %v831, %v830
      %v899 = vpack.c.b16 %v833, %v832
      %v900 = vpack.c.b16 %v835, %v834
      %v901 = vpack.c.b16 %v837, %v836
      %v902 = vpack.c.b16 %v839, %v838
      %v903 = vpack.c.b16 %v841, %v840
      %v904 = vpack.c.b16 %v843, %v842
      %v905 = vpack.c.b16 %v845, %v844
      %v906 = vpack.c.b16 %v847, %v846
      %v907 = vpack.c.b16 %v849, %v848
      %v908 = vpack.c.b16 %v851, %v850
      %v909 = vpack.c.b16 %v853, %v852
      %v910 = vpack.c.b16 %v855, %v854
      %v911 = vpack.c.b16 %v857, %v856
      %v912 = vpack.c.b16 %v859, %v858
      %v913 = vpack.c.b16 %v861, %v860
      %v914 = vpack.c.b16 %v863, %v862
      %v915 = vpack.c.b16 %v865, %v864
      %v916 = vpack.c.b16 %v867, %v866
      %v917 = vpack.c.b16 %v869, %v868
      %v918 = vpack.c.b16 %v871, %v870
      %v919 = vpack.c.b16 %v873, %v872
      %v920 = vpack.c.b16 %v875, %v874
      %v921 = vpack.c.b16 %v877, %v876
      %v922 = vpack.c.b16 %v879, %v878
      %v923 = vpack.c.b16 %v881, %v880
      %v924 = vpack.c.b16 %v883, %v882
      %v925 = vpack.c.b16 %v885, %v884
      %v926 = vpack.c.b16 %v887, %v886
      %v927 = vpack.c.b16 %v889, %v888
      %v928 = vpack.c.b16 %v891, %v890
      %v929 = vpack.c.b16 %v893, %v892
      %vm966 = vcmask 523264
      %v968 = vsel %vm966, %v610, 0
      %v971 = vsel %vm966, %v615, 0
      %v974 = vsel %vm966, %v620, 0
      %v977 = vsel %vm966, %v625, 0
      %v980 = vsel %vm966, %v630, 0
      %v983 = vsel %vm966, %v635, 0
      %v986 = vsel %vm966, %v640, 0
      %v989 = vsel %vm966, %v645, 0
      %v992 = vsel %vm966, %v650, 0
      %v995 = vsel %vm966, %v655, 0
      %v998 = vsel %vm966, %v660, 0
      %v1001 = vsel %vm966, %v665, 0
      %v1004 = vsel %vm966, %v670, 0
      %v1007 = vsel %vm966, %v675, 0
      %v1010 = vsel %vm966, %v680, 0
      %v1013 = vsel %vm966, %v685, 0
      %1015 = vmatpush.bf16.msra.mxu0 %v901
      %1016 = vmatpush.bf16.msra.mxu0 %v900
      %1017 = vmatpush.bf16.msra.mxu0 %v899
      %1018 = vmatpush.bf16.msra.mxu0 %v898
      %1019 = vmatpush.bf16.msra.mxu0 %v897
      %1020 = vmatpush.bf16.msra.mxu0 %v896
      %1021 = vmatpush.bf16.msra.mxu0 %v895
      %1022 = vmatpush.bf16.msra.mxu0 %v894
      %1023 = vmatmul.bf16.gmra.mxu0 %v606
      %v1024 = vpop.f32.mrf.mxu0
      %v1025 = vadd.f32 %v348, %v1024
      %v1026 = vpop.f32.mrf.mxu0
      %v1027 = vadd.f32 %v348, %v1026
      %1028 = vmatmul.bf16.gmra.mxu0 %v611
      %v1029 = vpop.f32.mrf.mxu0
      %v1030 = vadd.f32 %v348, %v1029
      %v1031 = vpop.f32.mrf.mxu0
      %v1032 = vadd.f32 %v348, %v1031
      %1033 = vmatmul.bf16.gmra.mxu0 %v616
      %v1034 = vpop.f32.mrf.mxu0
      %v1035 = vadd.f32 %v348, %v1034
      %v1036 = vpop.f32.mrf.mxu0
      %v1037 = vadd.f32 %v348, %v1036
      %1038 = vmatmul.bf16.gmra.mxu0 %v621
      %v1039 = vpop.f32.mrf.mxu0
      %v1040 = vadd.f32 %v348, %v1039
      %v1041 = vpop.f32.mrf.mxu0
      %v1042 = vadd.f32 %v348, %v1041
      %1043 = vmatmul.bf16.gmra.mxu0 %v626
      %v1044 = vpop.f32.mrf.mxu0
      %v1045 = vadd.f32 %v348, %v1044
      %v1046 = vpop.f32.mrf.mxu0
      %v1047 = vadd.f32 %v348, %v1046
      %1048 = vmatmul.bf16.gmra.mxu0 %v631
      %v1049 = vpop.f32.mrf.mxu0
      %v1050 = vadd.f32 %v348, %v1049
      %v1051 = vpop.f32.mrf.mxu0
      %v1052 = vadd.f32 %v348, %v1051
      %1053 = vmatmul.bf16.gmra.mxu0 %v636
      %v1054 = vpop.f32.mrf.mxu0
      %v1055 = vadd.f32 %v348, %v1054
      %v1056 = vpop.f32.mrf.mxu0
      %v1057 = vadd.f32 %v348, %v1056
      %1058 = vmatmul.bf16.gmra.mxu0 %v641
      %v1059 = vpop.f32.mrf.mxu0
      %v1060 = vadd.f32 %v348, %v1059
      %v1061 = vpop.f32.mrf.mxu0
      %v1062 = vadd.f32 %v348, %v1061
      %1063 = vmatmul.bf16.gmra.mxu0 %v646
      %v1064 = vpop.f32.mrf.mxu0
      %v1065 = vadd.f32 %v348, %v1064
      %v1066 = vpop.f32.mrf.mxu0
      %v1067 = vadd.f32 %v348, %v1066
      %1068 = vmatmul.bf16.gmra.mxu0 %v651
      %v1069 = vpop.f32.mrf.mxu0
      %v1070 = vadd.f32 %v348, %v1069
      %v1071 = vpop.f32.mrf.mxu0
      %v1072 = vadd.f32 %v348, %v1071
      %1073 = vmatmul.bf16.gmra.mxu0 %v656
      %v1074 = vpop.f32.mrf.mxu0
      %v1075 = vadd.f32 %v348, %v1074
      %v1076 = vpop.f32.mrf.mxu0
      %v1077 = vadd.f32 %v348, %v1076
      %1078 = vmatmul.bf16.gmra.mxu0 %v661
      %v1079 = vpop.f32.mrf.mxu0
      %v1080 = vadd.f32 %v348, %v1079
      %v1081 = vpop.f32.mrf.mxu0
      %v1082 = vadd.f32 %v348, %v1081
      %1083 = vmatmul.bf16.gmra.mxu0 %v666
      %v1084 = vpop.f32.mrf.mxu0
      %v1085 = vadd.f32 %v348, %v1084
      %v1086 = vpop.f32.mrf.mxu0
      %v1087 = vadd.f32 %v348, %v1086
      %1088 = vmatmul.bf16.gmra.mxu0 %v671
      %v1089 = vpop.f32.mrf.mxu0
      %v1090 = vadd.f32 %v348, %v1089
      %v1091 = vpop.f32.mrf.mxu0
      %v1092 = vadd.f32 %v348, %v1091
      %1093 = vmatmul.bf16.gmra.mxu0 %v676
      %v1094 = vpop.f32.mrf.mxu0
      %v1095 = vadd.f32 %v348, %v1094
      %v1096 = vpop.f32.mrf.mxu0
      %v1097 = vadd.f32 %v348, %v1096
      %1098 = vmatmul.bf16.gmra.mxu0 %v681
      %v1099 = vpop.f32.mrf.mxu0
      %v1100 = vadd.f32 %v348, %v1099
      %v1101 = vpop.f32.mrf.mxu0
      %v1102 = vadd.f32 %v348, %v1101
      %1103 = vdwg.mxu0
      %1104 = vmatpush.bf16.msra.mxu0 %v909
      %1105 = vmatpush.bf16.msra.mxu0 %v908
      %1106 = vmatpush.bf16.msra.mxu0 %v907
      %1107 = vmatpush.bf16.msra.mxu0 %v906
      %1108 = vmatpush.bf16.msra.mxu0 %v905
      %1109 = vmatpush.bf16.msra.mxu0 %v904
      %1110 = vmatpush.bf16.msra.mxu0 %v903
      %1111 = vmatpush.bf16.msra.mxu0 %v902
      %1112 = vmatmul.bf16.gmra.mxu0 %v607
      %v1113 = vpop.f32.mrf.mxu0
      %v1114 = vadd.f32 %v1025, %v1113
      %v1115 = vpop.f32.mrf.mxu0
      %v1116 = vadd.f32 %v1027, %v1115
      %1117 = vmatmul.bf16.gmra.mxu0 %v612
      %v1118 = vpop.f32.mrf.mxu0
      %v1119 = vadd.f32 %v1030, %v1118
      %v1120 = vpop.f32.mrf.mxu0
      %v1121 = vadd.f32 %v1032, %v1120
      %1122 = vmatmul.bf16.gmra.mxu0 %v617
      %v1123 = vpop.f32.mrf.mxu0
      %v1124 = vadd.f32 %v1035, %v1123
      %v1125 = vpop.f32.mrf.mxu0
      %v1126 = vadd.f32 %v1037, %v1125
      %1127 = vmatmul.bf16.gmra.mxu0 %v622
      %v1128 = vpop.f32.mrf.mxu0
      %v1129 = vadd.f32 %v1040, %v1128
      %v1130 = vpop.f32.mrf.mxu0
      %v1131 = vadd.f32 %v1042, %v1130
      %1132 = vmatmul.bf16.gmra.mxu0 %v627
      %v1133 = vpop.f32.mrf.mxu0
      %v1134 = vadd.f32 %v1045, %v1133
      %v1135 = vpop.f32.mrf.mxu0
      %v1136 = vadd.f32 %v1047, %v1135
      %1137 = vmatmul.bf16.gmra.mxu0 %v632
      %v1138 = vpop.f32.mrf.mxu0
      %v1139 = vadd.f32 %v1050, %v1138
      %v1140 = vpop.f32.mrf.mxu0
      %v1141 = vadd.f32 %v1052, %v1140
      %1142 = vmatmul.bf16.gmra.mxu0 %v637
      %v1143 = vpop.f32.mrf.mxu0
      %v1144 = vadd.f32 %v1055, %v1143
      %v1145 = vpop.f32.mrf.mxu0
      %v1146 = vadd.f32 %v1057, %v1145
      %1147 = vmatmul.bf16.gmra.mxu0 %v642
      %v1148 = vpop.f32.mrf.mxu0
      %v1149 = vadd.f32 %v1060, %v1148
      %v1150 = vpop.f32.mrf.mxu0
      %v1151 = vadd.f32 %v1062, %v1150
      %1152 = vmatmul.bf16.gmra.mxu0 %v647
      %v1153 = vpop.f32.mrf.mxu0
      %v1154 = vadd.f32 %v1065, %v1153
      %v1155 = vpop.f32.mrf.mxu0
      %v1156 = vadd.f32 %v1067, %v1155
      %1157 = vmatmul.bf16.gmra.mxu0 %v652
      %v1158 = vpop.f32.mrf.mxu0
      %v1159 = vadd.f32 %v1070, %v1158
      %v1160 = vpop.f32.mrf.mxu0
      %v1161 = vadd.f32 %v1072, %v1160
      %1162 = vmatmul.bf16.gmra.mxu0 %v657
      %v1163 = vpop.f32.mrf.mxu0
      %v1164 = vadd.f32 %v1075, %v1163
      %v1165 = vpop.f32.mrf.mxu0
      %v1166 = vadd.f32 %v1077, %v1165
      %1167 = vmatmul.bf16.gmra.mxu0 %v662
      %v1168 = vpop.f32.mrf.mxu0
      %v1169 = vadd.f32 %v1080, %v1168
      %v1170 = vpop.f32.mrf.mxu0
      %v1171 = vadd.f32 %v1082, %v1170
      %1172 = vmatmul.bf16.gmra.mxu0 %v667
      %v1173 = vpop.f32.mrf.mxu0
      %v1174 = vadd.f32 %v1085, %v1173
      %v1175 = vpop.f32.mrf.mxu0
      %v1176 = vadd.f32 %v1087, %v1175
      %1177 = vmatmul.bf16.gmra.mxu0 %v672
      %v1178 = vpop.f32.mrf.mxu0
      %v1179 = vadd.f32 %v1090, %v1178
      %v1180 = vpop.f32.mrf.mxu0
      %v1181 = vadd.f32 %v1092, %v1180
      %1182 = vmatmul.bf16.gmra.mxu0 %v677
      %v1183 = vpop.f32.mrf.mxu0
      %v1184 = vadd.f32 %v1095, %v1183
      %v1185 = vpop.f32.mrf.mxu0
      %v1186 = vadd.f32 %v1097, %v1185
      %1187 = vmatmul.bf16.gmra.mxu0 %v682
      %v1188 = vpop.f32.mrf.mxu0
      %v1189 = vadd.f32 %v1100, %v1188
      %v1190 = vpop.f32.mrf.mxu0
      %v1191 = vadd.f32 %v1102, %v1190
      %1192 = vdwg.mxu0
      %1193 = vmatpush.bf16.msra.mxu0 %v917
      %1194 = vmatpush.bf16.msra.mxu0 %v916
      %1195 = vmatpush.bf16.msra.mxu0 %v915
      %1196 = vmatpush.bf16.msra.mxu0 %v914
      %1197 = vmatpush.bf16.msra.mxu0 %v913
      %1198 = vmatpush.bf16.msra.mxu0 %v912
      %1199 = vmatpush.bf16.msra.mxu0 %v911
      %1200 = vmatpush.bf16.msra.mxu0 %v910
      %1201 = vmatmul.bf16.gmra.mxu0 %v608
      %v1202 = vpop.f32.mrf.mxu0
      %v1203 = vadd.f32 %v1114, %v1202
      %v1204 = vpop.f32.mrf.mxu0
      %v1205 = vadd.f32 %v1116, %v1204
      %1206 = vmatmul.bf16.gmra.mxu0 %v613
      %v1207 = vpop.f32.mrf.mxu0
      %v1208 = vadd.f32 %v1119, %v1207
      %v1209 = vpop.f32.mrf.mxu0
      %v1210 = vadd.f32 %v1121, %v1209
      %1211 = vmatmul.bf16.gmra.mxu0 %v618
      %v1212 = vpop.f32.mrf.mxu0
      %v1213 = vadd.f32 %v1124, %v1212
      %v1214 = vpop.f32.mrf.mxu0
      %v1215 = vadd.f32 %v1126, %v1214
      %1216 = vmatmul.bf16.gmra.mxu0 %v623
      %v1217 = vpop.f32.mrf.mxu0
      %v1218 = vadd.f32 %v1129, %v1217
      %v1219 = vpop.f32.mrf.mxu0
      %v1220 = vadd.f32 %v1131, %v1219
      %1221 = vmatmul.bf16.gmra.mxu0 %v628
      %v1222 = vpop.f32.mrf.mxu0
      %v1223 = vadd.f32 %v1134, %v1222
      %v1224 = vpop.f32.mrf.mxu0
      %v1225 = vadd.f32 %v1136, %v1224
      %1226 = vmatmul.bf16.gmra.mxu0 %v633
      %v1227 = vpop.f32.mrf.mxu0
      %v1228 = vadd.f32 %v1139, %v1227
      %v1229 = vpop.f32.mrf.mxu0
      %v1230 = vadd.f32 %v1141, %v1229
      %1231 = vmatmul.bf16.gmra.mxu0 %v638
      %v1232 = vpop.f32.mrf.mxu0
      %v1233 = vadd.f32 %v1144, %v1232
      %v1234 = vpop.f32.mrf.mxu0
      %v1235 = vadd.f32 %v1146, %v1234
      %1236 = vmatmul.bf16.gmra.mxu0 %v643
      %v1237 = vpop.f32.mrf.mxu0
      %v1238 = vadd.f32 %v1149, %v1237
      %v1239 = vpop.f32.mrf.mxu0
      %v1240 = vadd.f32 %v1151, %v1239
      %1241 = vmatmul.bf16.gmra.mxu0 %v648
      %v1242 = vpop.f32.mrf.mxu0
      %v1243 = vadd.f32 %v1154, %v1242
      %v1244 = vpop.f32.mrf.mxu0
      %v1245 = vadd.f32 %v1156, %v1244
      %1246 = vmatmul.bf16.gmra.mxu0 %v653
      %v1247 = vpop.f32.mrf.mxu0
      %v1248 = vadd.f32 %v1159, %v1247
      %v1249 = vpop.f32.mrf.mxu0
      %v1250 = vadd.f32 %v1161, %v1249
      %1251 = vmatmul.bf16.gmra.mxu0 %v658
      %v1252 = vpop.f32.mrf.mxu0
      %v1253 = vadd.f32 %v1164, %v1252
      %v1254 = vpop.f32.mrf.mxu0
      %v1255 = vadd.f32 %v1166, %v1254
      %1256 = vmatmul.bf16.gmra.mxu0 %v663
      %v1257 = vpop.f32.mrf.mxu0
      %v1258 = vadd.f32 %v1169, %v1257
      %v1259 = vpop.f32.mrf.mxu0
      %v1260 = vadd.f32 %v1171, %v1259
      %1261 = vmatmul.bf16.gmra.mxu0 %v668
      %v1262 = vpop.f32.mrf.mxu0
      %v1263 = vadd.f32 %v1174, %v1262
      %v1264 = vpop.f32.mrf.mxu0
      %v1265 = vadd.f32 %v1176, %v1264
      %1266 = vmatmul.bf16.gmra.mxu0 %v673
      %v1267 = vpop.f32.mrf.mxu0
      %v1268 = vadd.f32 %v1179, %v1267
      %v1269 = vpop.f32.mrf.mxu0
      %v1270 = vadd.f32 %v1181, %v1269
      %1271 = vmatmul.bf16.gmra.mxu0 %v678
      %v1272 = vpop.f32.mrf.mxu0
      %v1273 = vadd.f32 %v1184, %v1272
      %v1274 = vpop.f32.mrf.mxu0
      %v1275 = vadd.f32 %v1186, %v1274
      %1276 = vmatmul.bf16.gmra.mxu0 %v683
      %v1277 = vpop.f32.mrf.mxu0
      %v1278 = vadd.f32 %v1189, %v1277
      %v1279 = vpop.f32.mrf.mxu0
      %v1280 = vadd.f32 %v1191, %v1279
      %1281 = vdwg.mxu0
      %1282 = vmatpush.bf16.msra.mxu0 %v925
      %1283 = vmatpush.bf16.msra.mxu0 %v924
      %1284 = vmatpush.bf16.msra.mxu0 %v923
      %1285 = vmatpush.bf16.msra.mxu0 %v922
      %1286 = vmatpush.bf16.msra.mxu0 %v921
      %1287 = vmatpush.bf16.msra.mxu0 %v920
      %1288 = vmatpush.bf16.msra.mxu0 %v919
      %1289 = vmatpush.bf16.msra.mxu0 %v918
      %1290 = vmatmul.bf16.gmra.mxu0 %v609
      %v1291 = vpop.f32.mrf.mxu0
      %v1292 = vadd.f32 %v1203, %v1291
      %v1293 = vpop.f32.mrf.mxu0
      %v1294 = vadd.f32 %v1205, %v1293
      %1295 = vmatmul.bf16.gmra.mxu0 %v614
      %v1296 = vpop.f32.mrf.mxu0
      %v1297 = vadd.f32 %v1208, %v1296
      %v1298 = vpop.f32.mrf.mxu0
      %v1299 = vadd.f32 %v1210, %v1298
      %1300 = vmatmul.bf16.gmra.mxu0 %v619
      %v1301 = vpop.f32.mrf.mxu0
      %v1302 = vadd.f32 %v1213, %v1301
      %v1303 = vpop.f32.mrf.mxu0
      %v1304 = vadd.f32 %v1215, %v1303
      %1305 = vmatmul.bf16.gmra.mxu0 %v624
      %v1306 = vpop.f32.mrf.mxu0
      %v1307 = vadd.f32 %v1218, %v1306
      %v1308 = vpop.f32.mrf.mxu0
      %v1309 = vadd.f32 %v1220, %v1308
      %1310 = vmatmul.bf16.gmra.mxu0 %v629
      %v1311 = vpop.f32.mrf.mxu0
      %v1312 = vadd.f32 %v1223, %v1311
      %v1313 = vpop.f32.mrf.mxu0
      %v1314 = vadd.f32 %v1225, %v1313
      %1315 = vmatmul.bf16.gmra.mxu0 %v634
      %v1316 = vpop.f32.mrf.mxu0
      %v1317 = vadd.f32 %v1228, %v1316
      %v1318 = vpop.f32.mrf.mxu0
      %v1319 = vadd.f32 %v1230, %v1318
      %1320 = vmatmul.bf16.gmra.mxu0 %v639
      %v1321 = vpop.f32.mrf.mxu0
      %v1322 = vadd.f32 %v1233, %v1321
      %v1323 = vpop.f32.mrf.mxu0
      %v1324 = vadd.f32 %v1235, %v1323
      %1325 = vmatmul.bf16.gmra.mxu0 %v644
      %v1326 = vpop.f32.mrf.mxu0
      %v1327 = vadd.f32 %v1238, %v1326
      %v1328 = vpop.f32.mrf.mxu0
      %v1329 = vadd.f32 %v1240, %v1328
      %1330 = vmatmul.bf16.gmra.mxu0 %v649
      %v1331 = vpop.f32.mrf.mxu0
      %v1332 = vadd.f32 %v1243, %v1331
      %v1333 = vpop.f32.mrf.mxu0
      %v1334 = vadd.f32 %v1245, %v1333
      %1335 = vmatmul.bf16.gmra.mxu0 %v654
      %v1336 = vpop.f32.mrf.mxu0
      %v1337 = vadd.f32 %v1248, %v1336
      %v1338 = vpop.f32.mrf.mxu0
      %v1339 = vadd.f32 %v1250, %v1338
      %1340 = vmatmul.bf16.gmra.mxu0 %v659
      %v1341 = vpop.f32.mrf.mxu0
      %v1342 = vadd.f32 %v1253, %v1341
      %v1343 = vpop.f32.mrf.mxu0
      %v1344 = vadd.f32 %v1255, %v1343
      %1345 = vmatmul.bf16.gmra.mxu0 %v664
      %v1346 = vpop.f32.mrf.mxu0
      %v1347 = vadd.f32 %v1258, %v1346
      %v1348 = vpop.f32.mrf.mxu0
      %v1349 = vadd.f32 %v1260, %v1348
      %1350 = vmatmul.bf16.gmra.mxu0 %v669
      %v1351 = vpop.f32.mrf.mxu0
      %v1352 = vadd.f32 %v1263, %v1351
      %v1353 = vpop.f32.mrf.mxu0
      %v1354 = vadd.f32 %v1265, %v1353
      %1355 = vmatmul.bf16.gmra.mxu0 %v674
      %v1356 = vpop.f32.mrf.mxu0
      %v1357 = vadd.f32 %v1268, %v1356
      %v1358 = vpop.f32.mrf.mxu0
      %v1359 = vadd.f32 %v1270, %v1358
      %1360 = vmatmul.bf16.gmra.mxu0 %v679
      %v1361 = vpop.f32.mrf.mxu0
      %v1362 = vadd.f32 %v1273, %v1361
      %v1363 = vpop.f32.mrf.mxu0
      %v1364 = vadd.f32 %v1275, %v1363
      %1365 = vmatmul.bf16.gmra.mxu0 %v684
      %v1366 = vpop.f32.mrf.mxu0
      %v1367 = vadd.f32 %v1278, %v1366
      %v1368 = vpop.f32.mrf.mxu0
      %v1369 = vadd.f32 %v1280, %v1368
      %1370 = vdwg.mxu0
      %1371 = vmatpush.bf16.msra.mxu0 0
      %1372 = vmatpush.bf16.msra.mxu0 0
      %1373 = vmatpush.bf16.msra.mxu0 0
      %1374 = vmatpush.bf16.msra.mxu0 0
      %1375 = vmatpush.bf16.msra.mxu0 %v929
      %1376 = vmatpush.bf16.msra.mxu0 %v928
      %1377 = vmatpush.bf16.msra.mxu0 %v927
      %1378 = vmatpush.bf16.msra.mxu0 %v926
      %1379 = vmatmul.bf16.gmra.mxu0 %v968
      %v1380 = vpop.f32.mrf.mxu0
      %v1381 = vadd.f32 %v1292, %v1380
      %v1382 = vpop.f32.mrf.mxu0
      %v1383 = vadd.f32 %v1294, %v1382
      %1384 = vmatmul.bf16.gmra.mxu0 %v971
      %v1385 = vpop.f32.mrf.mxu0
      %v1386 = vadd.f32 %v1297, %v1385
      %v1387 = vpop.f32.mrf.mxu0
      %v1388 = vadd.f32 %v1299, %v1387
      %1389 = vmatmul.bf16.gmra.mxu0 %v974
      %v1390 = vpop.f32.mrf.mxu0
      %v1391 = vadd.f32 %v1302, %v1390
      %v1392 = vpop.f32.mrf.mxu0
      %v1393 = vadd.f32 %v1304, %v1392
      %1394 = vmatmul.bf16.gmra.mxu0 %v977
      %v1395 = vpop.f32.mrf.mxu0
      %v1396 = vadd.f32 %v1307, %v1395
      %v1397 = vpop.f32.mrf.mxu0
      %v1398 = vadd.f32 %v1309, %v1397
      %1399 = vmatmul.bf16.gmra.mxu0 %v980
      %v1400 = vpop.f32.mrf.mxu0
      %v1401 = vadd.f32 %v1312, %v1400
      %v1402 = vpop.f32.mrf.mxu0
      %v1403 = vadd.f32 %v1314, %v1402
      %1404 = vmatmul.bf16.gmra.mxu0 %v983
      %v1405 = vpop.f32.mrf.mxu0
      %v1406 = vadd.f32 %v1317, %v1405
      %v1407 = vpop.f32.mrf.mxu0
      %v1408 = vadd.f32 %v1319, %v1407
      %1409 = vmatmul.bf16.gmra.mxu0 %v986
      %v1410 = vpop.f32.mrf.mxu0
      %v1411 = vadd.f32 %v1322, %v1410
      %v1412 = vpop.f32.mrf.mxu0
      %v1413 = vadd.f32 %v1324, %v1412
      %1414 = vmatmul.bf16.gmra.mxu0 %v989
      %v1415 = vpop.f32.mrf.mxu0
      %v1416 = vadd.f32 %v1327, %v1415
      %v1417 = vpop.f32.mrf.mxu0
      %v1418 = vadd.f32 %v1329, %v1417
      %1419 = vmatmul.bf16.gmra.mxu0 %v992
      %v1420 = vpop.f32.mrf.mxu0
      %v1421 = vadd.f32 %v1332, %v1420
      %v1422 = vpop.f32.mrf.mxu0
      %v1423 = vadd.f32 %v1334, %v1422
      %1424 = vmatmul.bf16.gmra.mxu0 %v995
      %v1425 = vpop.f32.mrf.mxu0
      %v1426 = vadd.f32 %v1337, %v1425
      %v1427 = vpop.f32.mrf.mxu0
      %v1428 = vadd.f32 %v1339, %v1427
      %1429 = vmatmul.bf16.gmra.mxu0 %v998
      %v1430 = vpop.f32.mrf.mxu0
      %v1431 = vadd.f32 %v1342, %v1430
      %v1432 = vpop.f32.mrf.mxu0
      %v1433 = vadd.f32 %v1344, %v1432
      %1434 = vmatmul.bf16.gmra.mxu0 %v1001
      %v1435 = vpop.f32.mrf.mxu0
      %v1436 = vadd.f32 %v1347, %v1435
      %v1437 = vpop.f32.mrf.mxu0
      %v1438 = vadd.f32 %v1349, %v1437
      %1439 = vmatmul.bf16.gmra.mxu0 %v1004
      %v1440 = vpop.f32.mrf.mxu0
      %v1441 = vadd.f32 %v1352, %v1440
      %v1442 = vpop.f32.mrf.mxu0
      %v1443 = vadd.f32 %v1354, %v1442
      %1444 = vmatmul.bf16.gmra.mxu0 %v1007
      %v1445 = vpop.f32.mrf.mxu0
      %v1446 = vadd.f32 %v1357, %v1445
      %v1447 = vpop.f32.mrf.mxu0
      %v1448 = vadd.f32 %v1359, %v1447
      %1449 = vmatmul.bf16.gmra.mxu0 %v1010
      %v1450 = vpop.f32.mrf.mxu0
      %v1451 = vadd.f32 %v1362, %v1450
      %v1452 = vpop.f32.mrf.mxu0
      %v1453 = vadd.f32 %v1364, %v1452
      %1454 = vmatmul.bf16.gmra.mxu0 %v1013
      %v1455 = vpop.f32.mrf.mxu0
      %v1456 = vadd.f32 %v1367, %v1455
      %v1457 = vpop.f32.mrf.mxu0
      %v1458 = vadd.f32 %v1369, %v1457
      %1459 = vdwg.mxu0
      %v1460 = vmax.f32 %v1381, 0.0
      %v1461 = vmax.f32 %v1383, 0.0
      %v1462 = vmax.f32 %v1386, 0.0
      %v1463 = vmax.f32 %v1388, 0.0
      %v1464 = vmax.f32 %v1391, 0.0
      %v1465 = vmax.f32 %v1393, 0.0
      %v1466 = vmax.f32 %v1396, 0.0
      %v1467 = vmax.f32 %v1398, 0.0
      %v1468 = vmax.f32 %v1401, 0.0
      %v1469 = vmax.f32 %v1403, 0.0
      %v1470 = vmax.f32 %v1406, 0.0
      %v1471 = vmax.f32 %v1408, 0.0
      %v1472 = vmax.f32 %v1411, 0.0
      %v1473 = vmax.f32 %v1413, 0.0
      %v1474 = vmax.f32 %v1416, 0.0
      %v1475 = vmax.f32 %v1418, 0.0
      %v1476 = vmax.f32 %v1421, 0.0
      %v1477 = vmax.f32 %v1423, 0.0
      %v1478 = vmax.f32 %v1426, 0.0
      %v1479 = vmax.f32 %v1428, 0.0
      %v1480 = vmax.f32 %v1431, 0.0
      %v1481 = vmax.f32 %v1433, 0.0
      %v1482 = vmax.f32 %v1436, 0.0
      %v1483 = vmax.f32 %v1438, 0.0
      %v1484 = vmax.f32 %v1441, 0.0
      %v1485 = vmax.f32 %v1443, 0.0
      %v1486 = vmax.f32 %v1446, 0.0
      %v1487 = vmax.f32 %v1448, 0.0
      %v1488 = vmax.f32 %v1451, 0.0
      %v1489 = vmax.f32 %v1453, 0.0
      %v1490 = vmax.f32 %v1456, 0.0
      %v1491 = vmax.f32 %v1458, 0.0
      %v1492 = vpack.c.bf16 %v1460, %v1460
      %v1493 = vpack.c.bf16 %v1461, %v1461
      %v1494 = vpack.c.bf16 %v1462, %v1462
      %v1495 = vpack.c.bf16 %v1463, %v1463
      %v1496 = vpack.c.bf16 %v1464, %v1464
      %v1497 = vpack.c.bf16 %v1465, %v1465
      %v1498 = vpack.c.bf16 %v1466, %v1466
      %v1499 = vpack.c.bf16 %v1467, %v1467
      %v1500 = vpack.c.bf16 %v1468, %v1468
      %v1501 = vpack.c.bf16 %v1469, %v1469
      %v1502 = vpack.c.bf16 %v1470, %v1470
      %v1503 = vpack.c.bf16 %v1471, %v1471
      %v1504 = vpack.c.bf16 %v1472, %v1472
      %v1505 = vpack.c.bf16 %v1473, %v1473
      %v1506 = vpack.c.bf16 %v1474, %v1474
      %v1507 = vpack.c.bf16 %v1475, %v1475
      %v1508 = vpack.c.bf16 %v1476, %v1476
      %v1509 = vpack.c.bf16 %v1477, %v1477
      %v1510 = vpack.c.bf16 %v1478, %v1478
      %v1511 = vpack.c.bf16 %v1479, %v1479
      %v1512 = vpack.c.bf16 %v1480, %v1480
      %v1513 = vpack.c.bf16 %v1481, %v1481
      %v1514 = vpack.c.bf16 %v1482, %v1482
      %v1515 = vpack.c.bf16 %v1483, %v1483
      %v1516 = vpack.c.bf16 %v1484, %v1484
      %v1517 = vpack.c.bf16 %v1485, %v1485
      %v1518 = vpack.c.bf16 %v1486, %v1486
      %v1519 = vpack.c.bf16 %v1487, %v1487
      %v1520 = vpack.c.bf16 %v1488, %v1488
      %v1521 = vpack.c.bf16 %v1489, %v1489
      %v1522 = vpack.c.bf16 %v1490, %v1490
      %v1523 = vpack.c.bf16 %v1491, %v1491
      %vm1524 = vcmask 519168
      %1525 = vst.msk [vmem:[%s175] sm:$0xf] %vm1524, %v1492
      %1526 = vst.msk [vmem:[%s175 + $0x4] sm:$0xf] %vm1524, %v1493
      %1527 = vst.msk [vmem:[%s175 + $0x8] sm:$0xf] %vm1524, %v1494
      %1528 = vst.msk [vmem:[%s175 + $0xc] sm:$0xf] %vm1524, %v1495
      %1529 = vst.msk [vmem:[%s175 + $0x10] sm:$0xf] %vm1524, %v1496
      %1530 = vst.msk [vmem:[%s175 + $0x14] sm:$0xf] %vm1524, %v1497
      %1531 = vst.msk [vmem:[%s175 + $0x18] sm:$0xf] %vm1524, %v1498
      %1532 = vst.msk [vmem:[%s175 + $0x1c] sm:$0xf] %vm1524, %v1499
      %1533 = vst.msk [vmem:[%s175 + $0x20] sm:$0xf] %vm1524, %v1500
      %1534 = vst.msk [vmem:[%s175 + $0x24] sm:$0xf] %vm1524, %v1501
      %1535 = vst.msk [vmem:[%s175 + $0x28] sm:$0xf] %vm1524, %v1502
      %1536 = vst.msk [vmem:[%s175 + $0x2c] sm:$0xf] %vm1524, %v1503
      %1537 = vst.msk [vmem:[%s175 + $0x30] sm:$0xf] %vm1524, %v1504
      %1538 = vst.msk [vmem:[%s175 + $0x34] sm:$0xf] %vm1524, %v1505
      %1539 = vst.msk [vmem:[%s175 + $0x38] sm:$0xf] %vm1524, %v1506
      %1540 = vst.msk [vmem:[%s175 + $0x3c] sm:$0xf] %vm1524, %v1507
      %1541 = vst.msk [vmem:[%s175 + $0x40] sm:$0xf] %vm1524, %v1508
      %1542 = vst.msk [vmem:[%s175 + $0x44] sm:$0xf] %vm1524, %v1509
      %1543 = vst.msk [vmem:[%s175 + $0x48] sm:$0xf] %vm1524, %v1510
      %1544 = vst.msk [vmem:[%s175 + $0x4c] sm:$0xf] %vm1524, %v1511
      %1545 = vst.msk [vmem:[%s175 + $0x50] sm:$0xf] %vm1524, %v1512
      %1546 = vst.msk [vmem:[%s175 + $0x54] sm:$0xf] %vm1524, %v1513
      %1547 = vst.msk [vmem:[%s175 + $0x58] sm:$0xf] %vm1524, %v1514
      %1548 = vst.msk [vmem:[%s175 + $0x5c] sm:$0xf] %vm1524, %v1515
      %1549 = vst.msk [vmem:[%s175 + $0x60] sm:$0xf] %vm1524, %v1516
      %1550 = vst.msk [vmem:[%s175 + $0x64] sm:$0xf] %vm1524, %v1517
      %1551 = vst.msk [vmem:[%s175 + $0x68] sm:$0xf] %vm1524, %v1518
      %1552 = vst.msk [vmem:[%s175 + $0x6c] sm:$0xf] %vm1524, %v1519
      %1553 = vst.msk [vmem:[%s175 + $0x70] sm:$0xf] %vm1524, %v1520
      %1554 = vst.msk [vmem:[%s175 + $0x74] sm:$0xf] %vm1524, %v1521
      %1555 = vst.msk [vmem:[%s175 + $0x78] sm:$0xf] %vm1524, %v1522
      %1556 = vst.msk [vmem:[%s175 + $0x7c] sm:$0xf] %vm1524, %v1523
      %s1557 = smul.u32 32, %s14
      %p1558 = scmp.lt.s32.totalorder %s1557, 63
      %s1559 = scalar_select %p1558, %s1557, 63
      %s1560 = smul.addr %s1559, 4
      %s1561 = scalar_lea.vmem %s3, %s1560
      // Predicated region
      $region33: #{domain_resnet_forward.7} parent=31 // pred_check
        %p1562 = pneg %p100
      $region34: #{domain_resnet_forward.7} parent=31 // pred_check_branch
        %1564 = sbr.rel (%p1562) target = $region36
      $region35: #{domain_resnet_forward.7} parent=31 // pred_region
        %s1565 = smul.u32 32, %s14
      $region36: #{domain_resnet_forward.7} parent=31 // pred_fallthru
        _
    $region32: #{domain_resnet_forward.7} parent=5 // pred_fallthru
      _
    %p1566 = scmp.le.s32.totalorder 2, %s9
    // Predicated region
    $region37: #{domain_resnet_forward.7} parent=5 // pred_check
      %p1567 = pneg %p1566
    $region38: #{domain_resnet_forward.7} parent=5 // pred_check_branch
      %1569 = sbr.rel (%p1567) target = $region40
    $region39: #{domain_resnet_forward.7} parent=5 // pred_region
      %s1570 = ssub.s32 %s9, 2
      // Predicated region
      $region41: #{domain_resnet_forward.7} parent=39 // pred_check
        %p1571 = pneg %p106
      $region42: #{domain_resnet_forward.7} parent=39 // pred_check_branch
        %1573 = sbr.rel (%p1571) target = $region44
      $region43: #{domain_resnet_forward.7} parent=39 // pred_region
        %s1574 = smul.u32 32, %s15
        %p1575 = scmp.lt.s32.totalorder %s1574, 63
        %s1576 = scalar_select %p1575, %s1574, 63
        %s1577 = smul.addr %s1576, 4
        %s1578 = scalar_lea.vmem %s3, %s1577
      $region44: #{domain_resnet_forward.7} parent=39 // pred_fallthru
        _
    $region40: #{domain_resnet_forward.7} parent=5 // pred_fallthru
      _
  $region6: #{domain_resnet_forward.7} parent=0 // loop_footer
    %s13 = sadd.s32 1, %s9
  $region7: #{domain_resnet_forward.7} parent=0 // loop_footer_branch
    %8 = sbr.rel target = $region3
  $region8: #{domain_resnet_forward.7} parent=0 // loop_exit
    _

// kernel: domain_resnet_forward.8
$region0: #{domain_resnet_forward.8}
  #allocation0 [shape = 'u32[]', space=smem, size = 0x4, offset = 0x4, fixed_abs, tag = 'smem constant byte address 0x4 - core index']
  #allocation1 [shape = 'u32[72,128]{1,0:T(1,128)}', space=vmem, size = 0x9000, scoped, tag = 'internal scratch']
  %s0 = inlined_call_operand.vmem [shape: bf16[512,576], index: 0, kind: input, shape index: {}]
  %s1 = inlined_call_operand.vmem [shape: bf16[576,64], index: 1, kind: input, shape index: {}]
  %s2 = inlined_call_operand.vmem [shape: f32[1,64], index: 2, kind: input, shape index: {}]
  %s3 = inlined_call_operand.vmem [shape: bf16[512,64], index: 3, kind: input, shape index: {}]
  %s4 = inlined_call_operand.vmem [shape: bf16[512,64], index: 4, kind: output, shape index: {}]
  %s5 = sld [smem:[#allocation0]]
  $region49: #{domain_resnet_forward.8} parent=0
    _
  %s7 = ssub.s32 1, %s5
  %s8 = scalar_select 0, %s7, %s5
  loop: start=0, step=1, limit=4
  $region2: #{domain_resnet_forward.8} parent=0 // loop_pre_header
    _
  $region3: #{domain_resnet_forward.8} parent=0 // loop_header
    %s10 = sphi 0, %s14
    %p11 = scmp.ge.s32.totalorder %s10, 4
    %s20 = sphi 0, %s22
    %s23 = sphi 0, %s20
    %s24 = sphi 0, %s23
    %s40 = sphi 0, %s24
    %s44 = sphi 0, %s44
    %s46 = sphi 0, %s44
    %s47 = sphi 0, %s46
    %s61 = sphi 0, %s47
    %s65 = sphi 0, %s65
    %s67 = sphi 0, %s65
    %s68 = sphi 0, %s67
    %s82 = sphi 0, %s68
    %s88 = sphi 0, %s90
    %s91 = sphi 0, %s88
    %s92 = sphi 0, %s91
    %s108 = sphi 0, %s92
    %s114 = sphi 0, %s116
    %s117 = sphi 0, %s114
    %s118 = sphi 0, %s117
    %s134 = sphi 0, %s118
  $region4: #{domain_resnet_forward.8} parent=0 // loop_header_branch
    %13 = sbr.rel (%p11) target = $region8
  $region5: #{domain_resnet_forward.8} parent=0 // loop_body
    %s15 = ssub.s32 %s10, 1
    %s16 = ssub.s32 %s10, 2
    %s17 = sadd.s32 %s10, 1
    %s18 = ssub.s32 %s10, %s17
    %p19 = scmp.eq.s32.totalorder %s18, 0
    %s21 = sadd.s32 %s20, 1
    %s22 = scalar_select %p19, %s20, %s21
    %p25 = pneg %p19
    %p26 = scmp.eq.s32.totalorder %s10, 1
    %p27 = por %p25, %p26
    %p28 = scmp.ne.s32.totalorder %s20, %s23
    %p29 = scmp.eq.s32.totalorder %s10, 0
    %p30 = por %p28, %p29
    %p31 = scmp.ne.s32.totalorder %s20, %s23
    %p32 = scmp.eq.s32.totalorder %s15, 1
    %p33 = por %p31, %p32
    %p34 = scmp.ne.s32.totalorder %s23, %s24
    %p35 = scmp.eq.s32.totalorder %s15, 0
    %p36 = por %p34, %p35
    %p37 = scmp.ne.s32.totalorder %s23, %s24
    %p38 = scmp.eq.s32.totalorder %s16, 1
    %p39 = por %p37, %p38
    %p41 = scmp.ne.s32.totalorder %s24, %s40
    %p42 = scmp.eq.s32.totalorder %s16, 0
    %p43 = por %p41, %p42
    %s45 = sadd.s32 %s44, 1
    %p48 = scmp.eq.s32.totalorder %s10, 1
    %p49 = scmp.ne.s32.totalorder %s44, %s46
    %p50 = scmp.eq.s32.totalorder %s10, 0
    %p51 = por %p49, %p50
    %p52 = scmp.ne.s32.totalorder %s44, %s46
    %p53 = scmp.eq.s32.totalorder %s15, 1
    %p54 = por %p52, %p53
    %p55 = scmp.ne.s32.totalorder %s46, %s47
    %p56 = scmp.eq.s32.totalorder %s15, 0
    %p57 = por %p55, %p56
    %p58 = scmp.ne.s32.totalorder %s46, %s47
    %p59 = scmp.eq.s32.totalorder %s16, 1
    %p60 = por %p58, %p59
    %p62 = scmp.ne.s32.totalorder %s47, %s61
    %p63 = scmp.eq.s32.totalorder %s16, 0
    %p64 = por %p62, %p63
    %s66 = sadd.s32 %s65, 1
    %p69 = scmp.eq.s32.totalorder %s10, 1
    %p70 = scmp.ne.s32.totalorder %s65, %s67
    %p71 = scmp.eq.s32.totalorder %s10, 0
    %p72 = por %p70, %p71
    %p73 = scmp.ne.s32.totalorder %s65, %s67
    %p74 = scmp.eq.s32.totalorder %s15, 1
    %p75 = por %p73, %p74
    %p76 = scmp.ne.s32.totalorder %s67, %s68
    %p77 = scmp.eq.s32.totalorder %s15, 0
    %p78 = por %p76, %p77
    %p79 = scmp.ne.s32.totalorder %s67, %s68
    %p80 = scmp.eq.s32.totalorder %s16, 1
    %p81 = por %p79, %p80
    %p83 = scmp.ne.s32.totalorder %s68, %s82
    %p84 = scmp.eq.s32.totalorder %s16, 0
    %p85 = por %p83, %p84
    %s86 = ssub.s32 %s10, %s17
    %p87 = scmp.eq.s32.totalorder %s86, 0
    %s89 = sadd.s32 %s88, 1
    %s90 = scalar_select %p87, %s88, %s89
    %p93 = pneg %p87
    %p94 = scmp.eq.s32.totalorder %s10, 1
    %p95 = por %p93, %p94
    %p96 = scmp.ne.s32.totalorder %s88, %s91
    %p97 = scmp.eq.s32.totalorder %s10, 0
    %p98 = por %p96, %p97
    %p99 = scmp.ne.s32.totalorder %s88, %s91
    %p100 = scmp.eq.s32.totalorder %s15, 1
    %p101 = por %p99, %p100
    %p102 = scmp.ne.s32.totalorder %s91, %s92
    %p103 = scmp.eq.s32.totalorder %s15, 0
    %p104 = por %p102, %p103
    %p105 = scmp.ne.s32.totalorder %s91, %s92
    %p106 = scmp.eq.s32.totalorder %s16, 1
    %p107 = por %p105, %p106
    %p109 = scmp.ne.s32.totalorder %s92, %s108
    %p110 = scmp.eq.s32.totalorder %s16, 0
    %p111 = por %p109, %p110
    %s112 = ssub.s32 %s10, %s17
    %p113 = scmp.eq.s32.totalorder %s112, 0
    %s115 = sadd.s32 %s114, 1
    %s116 = scalar_select %p113, %s114, %s115
    %p119 = pneg %p113
    %p120 = scmp.eq.s32.totalorder %s10, 1
    %p121 = por %p119, %p120
    %p122 = scmp.ne.s32.totalorder %s114, %s117
    %p123 = scmp.eq.s32.totalorder %s10, 0
    %p124 = por %p122, %p123
    %p125 = scmp.ne.s32.totalorder %s114, %s117
    %p126 = scmp.eq.s32.totalorder %s15, 1
    %p127 = por %p125, %p126
    %p128 = scmp.ne.s32.totalorder %s117, %s118
    %p129 = scmp.eq.s32.totalorder %s15, 0
    %p130 = por %p128, %p129
    %p131 = scmp.ne.s32.totalorder %s117, %s118
    %p132 = scmp.eq.s32.totalorder %s16, 1
    %p133 = por %p131, %p132
    %p135 = scmp.ne.s32.totalorder %s118, %s134
    %p136 = scmp.eq.s32.totalorder %s16, 0
    %p137 = por %p135, %p136
    %p138 = scmp.le.s32.totalorder 1, %s10
    %p139 = scmp.lt.s32.totalorder %s10, 3
    %p140 = pnand %p138, %p139
    %p141 = pneg %p140
    // Predicated region
    $region9: #{domain_resnet_forward.8} parent=5 // pred_check
      _
    $region10: #{domain_resnet_forward.8} parent=5 // pred_check_branch
      %143 = sbr.rel (%p140) target = $region12
    $region11: #{domain_resnet_forward.8} parent=5 // pred_region
      %s144 = ssub.s32 %s10, 1
      // Predicated region
      $region13: #{domain_resnet_forward.8} parent=11 // pred_check
        %p145 = pneg %p57
      $region14: #{domain_resnet_forward.8} parent=11 // pred_check_branch
        %147 = sbr.rel (%p145) target = $region16
      $region15: #{domain_resnet_forward.8} parent=11 // pred_region
        _
      $region16: #{domain_resnet_forward.8} parent=11 // pred_fallthru
        _
      // Predicated region
      $region17: #{domain_resnet_forward.8} parent=11 // pred_check
        %p148 = pneg %p78
      $region18: #{domain_resnet_forward.8} parent=11 // pred_check_branch
        %150 = sbr.rel (%p148) target = $region20
      $region19: #{domain_resnet_forward.8} parent=11 // pred_region
        _
      $region20: #{domain_resnet_forward.8} parent=11 // pred_fallthru
        _
    $region12: #{domain_resnet_forward.8} parent=5 // pred_fallthru
      _
    %p151 = scmp.lt.s32.totalorder %s10, 2
    // Predicated region
    $region21: #{domain_resnet_forward.8} parent=5 // pred_check
      %p152 = pneg %p151
    $region22: #{domain_resnet_forward.8} parent=5 // pred_check_branch
      %154 = sbr.rel (%p152) target = $region24
    $region23: #{domain_resnet_forward.8} parent=5 // pred_region
      // Predicated region
      $region25: #{domain_resnet_forward.8} parent=23 // pred_check
        %p155 = pneg %p30
      $region26: #{domain_resnet_forward.8} parent=23 // pred_check_branch
        %157 = sbr.rel (%p155) target = $region28
      $region27: #{domain_resnet_forward.8} parent=23 // pred_region
        %s158 = smul.u32 32, %s10
        %p159 = scmp.lt.s32.totalorder %s158, 63
        %s160 = scalar_select %p159, %s158, 63
        %s161 = smul.addr %s160, 5
        %s162 = smul.addr %s161, 4
        %s163 = scalar_lea.vmem %s0, %s162
        %s164 = smul.u32 32, %s10
      $region28: #{domain_resnet_forward.8} parent=23 // pred_fallthru
        _
      // Predicated region
      $region29: #{domain_resnet_forward.8} parent=23 // pred_check
        %p165 = pneg %p98
      $region30: #{domain_resnet_forward.8} parent=23 // pred_check_branch
        %167 = sbr.rel (%p165) target = $region32
      $region31: #{domain_resnet_forward.8} parent=23 // pred_region
        %s168 = smul.u32 32, %s10
        %p169 = scmp.lt.s32.totalorder %s168, 63
        %s170 = scalar_select %p169, %s168, 63
        %s171 = smul.addr %s170, 4
        %s172 = scalar_lea.vmem %s3, %s171
        %s173 = smul.u32 32, %s10
      $region32: #{domain_resnet_forward.8} parent=23 // pred_fallthru
        _
    $region24: #{domain_resnet_forward.8} parent=5 // pred_fallthru
      _
    %p174 = scmp.le.s32.totalorder 1, %s10
    %p175 = scmp.lt.s32.totalorder %s10, 3
    %p176 = pnand %p174, %p175
    %p177 = pneg %p176
    // Predicated region
    $region33: #{domain_resnet_forward.8} parent=5 // pred_check
      _
    $region34: #{domain_resnet_forward.8} parent=5 // pred_check_branch
      %179 = sbr.rel (%p176) target = $region36
    $region35: #{domain_resnet_forward.8} parent=5 // pred_region
      %s180 = ssub.s32 %s10, 1
      %s181 = smul.u32 32, %s15
      %p182 = scmp.lt.s32.totalorder %s181, 63
      %s183 = scalar_select %p182, %s181, 63
      %s184 = smul.addr %s183, 5
      %s185 = smul.addr %s184, 4
      %s186 = scalar_lea.vmem %s0, %s185
      %p187 = pneg %p36
      %p188 = pneg %p33
      %p189 = pneg %p57
      %p190 = pneg %p54
      %p191 = pneg %p78
      %p192 = pneg %p75
      %s193 = smul.u32 32, %s15
      %p194 = scmp.lt.s32.totalorder %s193, 63
      %s195 = scalar_select %p194, %s193, 63
      %s196 = smul.addr %s195, 4
      %s197 = scalar_lea.vmem %s3, %s196
      %p198 = pneg %p104
      %p199 = pneg %p101
      %p200 = pneg %p130
      %p201 = pneg %p127
      %s202 = smul.u32 32, %s15
      %p203 = scmp.lt.s32.totalorder %s202, 63
      %s204 = scalar_select %p203, %s202, 63
      %s205 = smul.addr %s204, 4
      %s206 = scalar_lea.vmem %s4, %s205
      %s207 = smul.u32 32, %s15
      %p208 = scmp.lt.s32.totalorder %s207, 63
      %s209 = scalar_select %p208, %s207, 63
      %s210 = smul.addr %s209, 5
      %s211 = smul.addr %s210, 4
      %s212 = scalar_lea.vmem %s0, %s211
      %s213 = smul.u32 32, %s15
      %s214 = smul.u32 32, %s15
      %p215 = scmp.lt.s32.totalorder %s214, 63
      %s216 = scalar_select %p215, %s214, 63
      %s217 = smul.addr %s216, 4
      %s218 = scalar_lea.vmem %s3, %s217
      %s219 = smul.u32 32, %s15
      %s220 = smul.u32 32, %s15
      %p221 = scmp.lt.s32.totalorder %s220, 63
      %s222 = scalar_select %p221, %s220, 63
      %s223 = smul.addr %s222, 4
      %s224 = scalar_lea.vmem %s4, %s223
      %s225 = smul.u32 32, %s15
      %v227 = vld [vmem:[%s212] sm:$0xff]
      %v228 = vld [vmem:[%s212 + $0x8] sm:$0xff]
      %v229 = vld [vmem:[%s212 + $0x10] sm:$0xf]
      %v230 = vld [vmem:[%s212 + $0x14] sm:$0xff]
      %v231 = vld [vmem:[%s212 + $0x1c] sm:$0xff]
      %v232 = vld [vmem:[%s212 + $0x24] sm:$0xf]
      %v233 = vld [vmem:[%s212 + $0x28] sm:$0xff]
      %v234 = vld [vmem:[%s212 + $0x30] sm:$0xff]
      %v235 = vld [vmem:[%s212 + $0x38] sm:$0xf]
      %v236 = vld [vmem:[%s212 + $0x3c] sm:$0xff]
      %v237 = vld [vmem:[%s212 + $0x44] sm:$0xff]
      %v238 = vld [vmem:[%s212 + $0x4c] sm:$0xf]
      %v239 = vld [vmem:[%s212 + $0x50] sm:$0xff]
      %v240 = vld [vmem:[%s212 + $0x58] sm:$0xff]
      %v241 = vld [vmem:[%s212 + $0x60] sm:$0xf]
      %v242 = vld [vmem:[%s212 + $0x64] sm:$0xff]
      %v243 = vld [vmem:[%s212 + $0x6c] sm:$0xff]
      %v244 = vld [vmem:[%s212 + $0x74] sm:$0xf]
      %v245 = vld [vmem:[%s212 + $0x78] sm:$0xff]
      %v246 = vld [vmem:[%s212 + $0x80] sm:$0xff]
      %v247 = vld [vmem:[%s212 + $0x88] sm:$0xf]
      %v248 = vld [vmem:[%s212 + $0x8c] sm:$0xff]
      %v249 = vld [vmem:[%s212 + $0x94] sm:$0xff]
      %v250 = vld [vmem:[%s212 + $0x9c] sm:$0xf]
      %v251 = vld [vmem:[%s212 + $0xa0] sm:$0xff]
      %v252 = vld [vmem:[%s212 + $0xa8] sm:$0xff]
      %v253 = vld [vmem:[%s212 + $0xb0] sm:$0xf]
      %v254 = vld [vmem:[%s212 + $0xb4] sm:$0xff]
      %v255 = vld [vmem:[%s212 + $0xbc] sm:$0xff]
      %v256 = vld [vmem:[%s212 + $0xc4] sm:$0xf]
      %v257 = vld [vmem:[%s212 + $0xc8] sm:$0xff]
      %v258 = vld [vmem:[%s212 + $0xd0] sm:$0xff]
      %v259 = vld [vmem:[%s212 + $0xd8] sm:$0xf]
      %v260 = vld [vmem:[%s212 + $0xdc] sm:$0xff]
      %v261 = vld [vmem:[%s212 + $0xe4] sm:$0xff]
      %v262 = vld [vmem:[%s212 + $0xec] sm:$0xf]
      %v263 = vld [vmem:[%s212 + $0xf0] sm:$0xff]
      %v264 = vld [vmem:[%s212 + $0xf8] sm:$0xff]
      %v265 = vld [vmem:[%s212 + $0x100] sm:$0xf]
      %v266 = vld [vmem:[%s212 + $0x104] sm:$0xff]
      %v267 = vld [vmem:[%s212 + $0x10c] sm:$0xff]
      %v268 = vld [vmem:[%s212 + $0x114] sm:$0xf]
      %v269 = vld [vmem:[%s212 + $0x118] sm:$0xff]
      %v270 = vld [vmem:[%s212 + $0x120] sm:$0xff]
      %v271 = vld [vmem:[%s212 + $0x128] sm:$0xf]
      %v272 = vld [vmem:[%s212 + $0x12c] sm:$0xff]
      %v273 = vld [vmem:[%s212 + $0x134] sm:$0xff]
      %v274 = vld [vmem:[%s212 + $0x13c] sm:$0xf]
      %v275 = vld [vmem:[%s212 + $0x140] sm:$0xff]
      %v276 = vld [vmem:[%s212 + $0x148] sm:$0xff]
      %v277 = vld [vmem:[%s212 + $0x150] sm:$0xf]
      %v278 = vld [vmem:[%s212 + $0x154] sm:$0xff]
      %v279 = vld [vmem:[%s212 + $0x15c] sm:$0xff]
      %v280 = vld [vmem:[%s212 + $0x164] sm:$0xf]
      %v281 = vld [vmem:[%s212 + $0x168] sm:$0xff]
      %v282 = vld [vmem:[%s212 + $0x170] sm:$0xff]
      %v283 = vld [vmem:[%s212 + $0x178] sm:$0xf]
      %v284 = vld [vmem:[%s212 + $0x17c] sm:$0xff]
      %v285 = vld [vmem:[%s212 + $0x184] sm:$0xff]
      %v286 = vld [vmem:[%s212 + $0x18c] sm:$0xf]
      %v287 = vld [vmem:[%s212 + $0x190] sm:$0xff]
      %v288 = vld [vmem:[%s212 + $0x198] sm:$0xff]
      %v289 = vld [vmem:[%s212 + $0x1a0] sm:$0xf]
      %v290 = vld [vmem:[%s212 + $0x1a4] sm:$0xff]
      %v291 = vld [vmem:[%s212 + $0x1ac] sm:$0xff]
      %v292 = vld [vmem:[%s212 + $0x1b4] sm:$0xf]
      %v293 = vld [vmem:[%s212 + $0x1b8] sm:$0xff]
      %v294 = vld [vmem:[%s212 + $0x1c0] sm:$0xff]
      %v295 = vld [vmem:[%s212 + $0x1c8] sm:$0xf]
      %v296 = vld [vmem:[%s212 + $0x1cc] sm:$0xff]
      %v297 = vld [vmem:[%s212 + $0x1d4] sm:$0xff]
      %v298 = vld [vmem:[%s212 + $0x1dc] sm:$0xf]
      %v299 = vld [vmem:[%s212 + $0x1e0] sm:$0xff]
      %v300 = vld [vmem:[%s212 + $0x1e8] sm:$0xff]
      %v301 = vld [vmem:[%s212 + $0x1f0] sm:$0xf]
      %v302 = vld [vmem:[%s212 + $0x1f4] sm:$0xff]
      %v303 = vld [vmem:[%s212 + $0x1fc] sm:$0xff]
      %v304 = vld [vmem:[%s212 + $0x204] sm:$0xf]
      %v305 = vld [vmem:[%s212 + $0x208] sm:$0xff]
      %v306 = vld [vmem:[%s212 + $0x210] sm:$0xff]
      %v307 = vld [vmem:[%s212 + $0x218] sm:$0xf]
      %v308 = vld [vmem:[%s212 + $0x21c] sm:$0xff]
      %v309 = vld [vmem:[%s212 + $0x224] sm:$0xff]
      %v310 = vld [vmem:[%s212 + $0x22c] sm:$0xf]
      %v311 = vld [vmem:[%s212 + $0x230] sm:$0xff]
      %v312 = vld [vmem:[%s212 + $0x238] sm:$0xff]
      %v313 = vld [vmem:[%s212 + $0x240] sm:$0xf]
      %v314 = vld [vmem:[%s212 + $0x244] sm:$0xff]
      %v315 = vld [vmem:[%s212 + $0x24c] sm:$0xff]
      %v316 = vld [vmem:[%s212 + $0x254] sm:$0xf]
      %v317 = vld [vmem:[%s212 + $0x258] sm:$0xff]
      %v318 = vld [vmem:[%s212 + $0x260] sm:$0xff]
      %v319 = vld [vmem:[%s212 + $0x268] sm:$0xf]
      %v320 = vld [vmem:[%s212 + $0x26c] sm:$0xff]
      %v321 = vld [vmem:[%s212 + $0x274] sm:$0xff]
      %v322 = vld [vmem:[%s212 + $0x27c] sm:$0xf]
      %v323 = vld [vmem:[%s1] sm:$0xf]
      %v324 = vld [vmem:[%s1 + $0x4] sm:$0xf]
      %v325 = vld [vmem:[%s1 + $0x8] sm:$0xf]
      %v326 = vld [vmem:[%s1 + $0xc] sm:$0xf]
      %v327 = vld [vmem:[%s1 + $0x10] sm:$0xf]
      %v328 = vld [vmem:[%s1 + $0x14] sm:$0xf]
      %v329 = vld [vmem:[%s1 + $0x18] sm:$0xf]
      %v330 = vld [vmem:[%s1 + $0x1c] sm:$0xf]
      %v331 = vld [vmem:[%s1 + $0x20] sm:$0xf]
      %v332 = vld [vmem:[%s1 + $0x24] sm:$0xf]
      %v333 = vld [vmem:[%s1 + $0x28] sm:$0xf]
      %v334 = vld [vmem:[%s1 + $0x2c] sm:$0xf]
      %v335 = vld [vmem:[%s1 + $0x30] sm:$0xf]
      %v336 = vld [vmem:[%s1 + $0x34] sm:$0xf]
      %v337 = vld [vmem:[%s1 + $0x38] sm:$0xf]
      %v338 = vld [vmem:[%s1 + $0x3c] sm:$0xf]
      %v339 = vld [vmem:[%s1 + $0x40] sm:$0xf]
      %v340 = vld [vmem:[%s1 + $0x44] sm:$0xf]
      %v341 = vld [vmem:[%s1 + $0x48] sm:$0xf]
      %v342 = vld [vmem:[%s1 + $0x4c] sm:$0xf]
      %v343 = vld [vmem:[%s1 + $0x50] sm:$0xf]
      %v344 = vld [vmem:[%s1 + $0x54] sm:$0xf]
      %v345 = vld [vmem:[%s1 + $0x58] sm:$0xf]
      %v346 = vld [vmem:[%s1 + $0x5c] sm:$0xf]
      %v347 = vld [vmem:[%s1 + $0x60] sm:$0xf]
      %v348 = vld [vmem:[%s1 + $0x64] sm:$0xf]
      %v349 = vld [vmem:[%s1 + $0x68] sm:$0xf]
      %v350 = vld [vmem:[%s1 + $0x6c] sm:$0xf]
      %v351 = vld [vmem:[%s1 + $0x70] sm:$0xf]
      %v352 = vld [vmem:[%s1 + $0x74] sm:$0xf]
      %v353 = vld [vmem:[%s1 + $0x78] sm:$0xf]
      %v354 = vld [vmem:[%s1 + $0x7c] sm:$0xf]
      %v355 = vld [vmem:[%s1 + $0x80] sm:$0xf]
      %v356 = vld [vmem:[%s1 + $0x84] sm:$0xf]
      %v357 = vld [vmem:[%s1 + $0x88] sm:$0xf]
      %v358 = vld [vmem:[%s1 + $0x8c] sm:$0xf]
      %v359 = vld [vmem:[%s1 + $0x90] sm:$0xf]
      %v360 = vld [vmem:[%s1 + $0x94] sm:$0xf]
      %v361 = vld [vmem:[%s1 + $0x98] sm:$0xf]
      %v362 = vld [vmem:[%s1 + $0x9c] sm:$0xf]
      %v363 = vld [vmem:[%s1 + $0xa0] sm:$0xf]
      %v364 = vld [vmem:[%s1 + $0xa4] sm:$0xf]
      %v365 = vld [vmem:[%s1 + $0xa8] sm:$0xf]
      %v366 = vld [vmem:[%s1 + $0xac] sm:$0xf]
      %v367 = vld [vmem:[%s1 + $0xb0] sm:$0xf]
      %v368 = vld [vmem:[%s1 + $0xb4] sm:$0xf]
      %v369 = vld [vmem:[%s1 + $0xb8] sm:$0xf]
      %v370 = vld [vmem:[%s1 + $0xbc] sm:$0xf]
      %v371 = vld [vmem:[%s1 + $0xc0] sm:$0xf]
      %v372 = vld [vmem:[%s1 + $0xc4] sm:$0xf]
      %v373 = vld [vmem:[%s1 + $0xc8] sm:$0xf]
      %v374 = vld [vmem:[%s1 + $0xcc] sm:$0xf]
      %v375 = vld [vmem:[%s1 + $0xd0] sm:$0xf]
      %v376 = vld [vmem:[%s1 + $0xd4] sm:$0xf]
      %v377 = vld [vmem:[%s1 + $0xd8] sm:$0xf]
      %v378 = vld [vmem:[%s1 + $0xdc] sm:$0xf]
      %v379 = vld [vmem:[%s1 + $0xe0] sm:$0xf]
      %v380 = vld [vmem:[%s1 + $0xe4] sm:$0xf]
      %v381 = vld [vmem:[%s1 + $0xe8] sm:$0xf]
      %v382 = vld [vmem:[%s1 + $0xec] sm:$0xf]
      %v383 = vld [vmem:[%s1 + $0xf0] sm:$0xf]
      %v384 = vld [vmem:[%s1 + $0xf4] sm:$0xf]
      %v385 = vld [vmem:[%s1 + $0xf8] sm:$0xf]
      %v386 = vld [vmem:[%s1 + $0xfc] sm:$0xf]
      %v387 = vld [vmem:[%s1 + $0x100] sm:$0xf]
      %v388 = vld [vmem:[%s1 + $0x104] sm:$0xf]
      %v389 = vld [vmem:[%s1 + $0x108] sm:$0xf]
      %v390 = vld [vmem:[%s1 + $0x10c] sm:$0xf]
      %v391 = vld [vmem:[%s1 + $0x110] sm:$0xf]
      %v392 = vld [vmem:[%s1 + $0x114] sm:$0xf]
      %v393 = vld [vmem:[%s1 + $0x118] sm:$0xf]
      %v394 = vld [vmem:[%s1 + $0x11c] sm:$0xf]
      %v395 = vld [vmem:[%s2] sm:$0x1]
      %v397 = vperm.slane %v395, 0
      %v495 = vunpack.c.l.b16 %v227
      %v496 = vunpack.c.h.b16 %v227
      %v497 = vunpack.c.l.b16 %v228
      %v498 = vunpack.c.h.b16 %v228
      %v499 = vunpack.c.l.b16 %v229
      %v500 = vunpack.c.l.b16 %v230
      %v501 = vunpack.c.h.b16 %v230
      %v502 = vunpack.c.l.b16 %v231
      %v503 = vunpack.c.h.b16 %v231
      %v504 = vunpack.c.l.b16 %v232
      %v505 = vunpack.c.l.b16 %v233
      %v506 = vunpack.c.h.b16 %v233
      %v507 = vunpack.c.l.b16 %v234
      %v508 = vunpack.c.h.b16 %v234
      %v509 = vunpack.c.l.b16 %v235
      %v510 = vunpack.c.l.b16 %v236
      %v511 = vunpack.c.h.b16 %v236
      %v512 = vunpack.c.l.b16 %v237
      %v513 = vunpack.c.h.b16 %v237
      %v514 = vunpack.c.l.b16 %v238
      %v515 = vunpack.c.l.b16 %v239
      %v516 = vunpack.c.h.b16 %v239
      %v517 = vunpack.c.l.b16 %v240
      %v518 = vunpack.c.h.b16 %v240
      %v519 = vunpack.c.l.b16 %v241
      %v520 = vunpack.c.l.b16 %v242
      %v521 = vunpack.c.h.b16 %v242
      %v522 = vunpack.c.l.b16 %v243
      %v523 = vunpack.c.h.b16 %v243
      %v524 = vunpack.c.l.b16 %v244
      %v525 = vunpack.c.l.b16 %v245
      %v526 = vunpack.c.h.b16 %v245
      %v527 = vunpack.c.l.b16 %v246
      %v528 = vunpack.c.h.b16 %v246
      %v529 = vunpack.c.l.b16 %v247
      %v530 = vunpack.c.l.b16 %v248
      %v531 = vunpack.c.h.b16 %v248
      %v532 = vunpack.c.l.b16 %v249
      %v533 = vunpack.c.h.b16 %v249
      %v534 = vunpack.c.l.b16 %v250
      %v535 = vunpack.c.l.b16 %v251
      %v536 = vunpack.c.h.b16 %v251
      %v537 = vunpack.c.l.b16 %v252
      %v538 = vunpack.c.h.b16 %v252
      %v539 = vunpack.c.l.b16 %v253
      %v540 = vunpack.c.l.b16 %v254
      %v541 = vunpack.c.h.b16 %v254
      %v542 = vunpack.c.l.b16 %v255
      %v543 = vunpack.c.h.b16 %v255
      %v544 = vunpack.c.l.b16 %v256
      %v545 = vunpack.c.l.b16 %v257
      %v546 = vunpack.c.h.b16 %v257
      %v547 = vunpack.c.l.b16 %v258
      %v548 = vunpack.c.h.b16 %v258
      %v549 = vunpack.c.l.b16 %v259
      %v550 = vunpack.c.l.b16 %v260
      %v551 = vunpack.c.h.b16 %v260
      %v552 = vunpack.c.l.b16 %v261
      %v553 = vunpack.c.h.b16 %v261
      %v554 = vunpack.c.l.b16 %v262
      %v555 = vunpack.c.l.b16 %v263
      %v556 = vunpack.c.h.b16 %v263
      %v557 = vunpack.c.l.b16 %v264
      %v558 = vunpack.c.h.b16 %v264
      %v559 = vunpack.c.l.b16 %v265
      %v560 = vunpack.c.l.b16 %v266
      %v561 = vunpack.c.h.b16 %v266
      %v562 = vunpack.c.l.b16 %v267
      %v563 = vunpack.c.h.b16 %v267
      %v564 = vunpack.c.l.b16 %v268
      %v565 = vunpack.c.l.b16 %v269
      %v566 = vunpack.c.h.b16 %v269
      %v567 = vunpack.c.l.b16 %v270
      %v568 = vunpack.c.h.b16 %v270
      %v569 = vunpack.c.l.b16 %v271
      %v570 = vunpack.c.l.b16 %v272
      %v571 = vunpack.c.h.b16 %v272
      %v572 = vunpack.c.l.b16 %v273
      %v573 = vunpack.c.h.b16 %v273
      %v574 = vunpack.c.l.b16 %v274
      %v575 = vunpack.c.l.b16 %v275
      %v576 = vunpack.c.h.b16 %v275
      %v577 = vunpack.c.l.b16 %v276
      %v578 = vunpack.c.h.b16 %v276
      %v579 = vunpack.c.l.b16 %v277
      %v580 = vunpack.c.l.b16 %v278
      %v581 = vunpack.c.h.b16 %v278
      %v582 = vunpack.c.l.b16 %v279
      %v583 = vunpack.c.h.b16 %v279
      %v584 = vunpack.c.l.b16 %v280
      %v585 = vunpack.c.l.b16 %v281
      %v586 = vunpack.c.h.b16 %v281
      %v587 = vunpack.c.l.b16 %v282
      %v588 = vunpack.c.h.b16 %v282
      %v589 = vunpack.c.l.b16 %v283
      %v590 = vunpack.c.l.b16 %v284
      %v591 = vunpack.c.h.b16 %v284
      %v592 = vunpack.c.l.b16 %v285
      %v593 = vunpack.c.h.b16 %v285
      %v594 = vunpack.c.l.b16 %v286
      %v595 = vunpack.c.l.b16 %v287
      %v596 = vunpack.c.h.b16 %v287
      %v597 = vunpack.c.l.b16 %v288
      %v598 = vunpack.c.h.b16 %v288
      %v599 = vunpack.c.l.b16 %v289
      %v600 = vunpack.c.l.b16 %v290
      %v601 = vunpack.c.h.b16 %v290
      %v602 = vunpack.c.l.b16 %v291
      %v603 = vunpack.c.h.b16 %v291
      %v604 = vunpack.c.l.b16 %v292
      %v605 = vunpack.c.l.b16 %v293
      %v606 = vunpack.c.h.b16 %v293
      %v607 = vunpack.c.l.b16 %v294
      %v608 = vunpack.c.h.b16 %v294
      %v609 = vunpack.c.l.b16 %v295
      %v610 = vunpack.c.l.b16 %v296
      %v611 = vunpack.c.h.b16 %v296
      %v612 = vunpack.c.l.b16 %v297
      %v613 = vunpack.c.h.b16 %v297
      %v614 = vunpack.c.l.b16 %v298
      %v615 = vunpack.c.l.b16 %v299
      %v616 = vunpack.c.h.b16 %v299
      %v617 = vunpack.c.l.b16 %v300
      %v618 = vunpack.c.h.b16 %v300
      %v619 = vunpack.c.l.b16 %v301
      %v620 = vunpack.c.l.b16 %v302
      %v621 = vunpack.c.h.b16 %v302
      %v622 = vunpack.c.l.b16 %v303
      %v623 = vunpack.c.h.b16 %v303
      %v624 = vunpack.c.l.b16 %v304
      %v625 = vunpack.c.l.b16 %v305
      %v626 = vunpack.c.h.b16 %v305
      %v627 = vunpack.c.l.b16 %v306
      %v628 = vunpack.c.h.b16 %v306
      %v629 = vunpack.c.l.b16 %v307
      %v630 = vunpack.c.l.b16 %v308
      %v631 = vunpack.c.h.b16 %v308
      %v632 = vunpack.c.l.b16 %v309
      %v633 = vunpack.c.h.b16 %v309
      %v634 = vunpack.c.l.b16 %v310
      %v635 = vunpack.c.l.b16 %v311
      %v636 = vunpack.c.h.b16 %v311
      %v637 = vunpack.c.l.b16 %v312
      %v638 = vunpack.c.h.b16 %v312
      %v639 = vunpack.c.l.b16 %v313
      %v640 = vunpack.c.l.b16 %v314
      %v641 = vunpack.c.h.b16 %v314
      %v642 = vunpack.c.l.b16 %v315
      %v643 = vunpack.c.h.b16 %v315
      %v644 = vunpack.c.l.b16 %v316
      %v645 = vunpack.c.l.b16 %v317
      %v646 = vunpack.c.h.b16 %v317
      %v647 = vunpack.c.l.b16 %v318
      %v648 = vunpack.c.h.b16 %v318
      %v649 = vunpack.c.l.b16 %v319
      %v650 = vunpack.c.l.b16 %v320
      %v651 = vunpack.c.h.b16 %v320
      %v652 = vunpack.c.l.b16 %v321
      %v653 = vunpack.c.h.b16 %v321
      %v654 = vunpack.c.l.b16 %v322
      %v655 = vpack.c.b16 %v500, %v495
      %v656 = vpack.c.b16 %v501, %v496
      %v657 = vpack.c.b16 %v502, %v497
      %v658 = vpack.c.b16 %v503, %v498
      %v659 = vpack.c.b16 %v504, %v499
      %v660 = vpack.c.b16 %v510, %v505
      %v661 = vpack.c.b16 %v511, %v506
      %v662 = vpack.c.b16 %v512, %v507
      %v663 = vpack.c.b16 %v513, %v508
      %v664 = vpack.c.b16 %v514, %v509
      %v665 = vpack.c.b16 %v520, %v515
      %v666 = vpack.c.b16 %v521, %v516
      %v667 = vpack.c.b16 %v522, %v517
      %v668 = vpack.c.b16 %v523, %v518
      %v669 = vpack.c.b16 %v524, %v519
      %v670 = vpack.c.b16 %v530, %v525
      %v671 = vpack.c.b16 %v531, %v526
      %v672 = vpack.c.b16 %v532, %v527
      %v673 = vpack.c.b16 %v533, %v528
      %v674 = vpack.c.b16 %v534, %v529
      %v675 = vpack.c.b16 %v540, %v535
      %v676 = vpack.c.b16 %v541, %v536
      %v677 = vpack.c.b16 %v542, %v537
      %v678 = vpack.c.b16 %v543, %v538
      %v679 = vpack.c.b16 %v544, %v539
      %v680 = vpack.c.b16 %v550, %v545
      %v681 = vpack.c.b16 %v551, %v546
      %v682 = vpack.c.b16 %v552, %v547
      %v683 = vpack.c.b16 %v553, %v548
      %v684 = vpack.c.b16 %v554, %v549
      %v685 = vpack.c.b16 %v560, %v555
      %v686 = vpack.c.b16 %v561, %v556
      %v687 = vpack.c.b16 %v562, %v557
      %v688 = vpack.c.b16 %v563, %v558
      %v689 = vpack.c.b16 %v564, %v559
      %v690 = vpack.c.b16 %v570, %v565
      %v691 = vpack.c.b16 %v571, %v566
      %v692 = vpack.c.b16 %v572, %v567
      %v693 = vpack.c.b16 %v573, %v568
      %v694 = vpack.c.b16 %v574, %v569
      %v695 = vpack.c.b16 %v580, %v575
      %v696 = vpack.c.b16 %v581, %v576
      %v697 = vpack.c.b16 %v582, %v577
      %v698 = vpack.c.b16 %v583, %v578
      %v699 = vpack.c.b16 %v584, %v579
      %v700 = vpack.c.b16 %v590, %v585
      %v701 = vpack.c.b16 %v591, %v586
      %v702 = vpack.c.b16 %v592, %v587
      %v703 = vpack.c.b16 %v593, %v588
      %v704 = vpack.c.b16 %v594, %v589
      %v705 = vpack.c.b16 %v600, %v595
      %v706 = vpack.c.b16 %v601, %v596
      %v707 = vpack.c.b16 %v602, %v597
      %v708 = vpack.c.b16 %v603, %v598
      %v709 = vpack.c.b16 %v604, %v599
      %v710 = vpack.c.b16 %v610, %v605
      %v711 = vpack.c.b16 %v611, %v606
      %v712 = vpack.c.b16 %v612, %v607
      %v713 = vpack.c.b16 %v613, %v608
      %v714 = vpack.c.b16 %v614, %v609
      %v715 = vpack.c.b16 %v620, %v615
      %v716 = vpack.c.b16 %v621, %v616
      %v717 = vpack.c.b16 %v622, %v617
      %v718 = vpack.c.b16 %v623, %v618
      %v719 = vpack.c.b16 %v624, %v619
      %v720 = vpack.c.b16 %v630, %v625
      %v721 = vpack.c.b16 %v631, %v626
      %v722 = vpack.c.b16 %v632, %v627
      %v723 = vpack.c.b16 %v633, %v628
      %v724 = vpack.c.b16 %v634, %v629
      %v725 = vpack.c.b16 %v640, %v635
      %v726 = vpack.c.b16 %v641, %v636
      %v727 = vpack.c.b16 %v642, %v637
      %v728 = vpack.c.b16 %v643, %v638
      %v729 = vpack.c.b16 %v644, %v639
      %v730 = vpack.c.b16 %v650, %v645
      %v731 = vpack.c.b16 %v651, %v646
      %v732 = vpack.c.b16 %v652, %v647
      %v733 = vpack.c.b16 %v653, %v648
      %v734 = vpack.c.b16 %v654, %v649
      %v871 = vunpack.c.l.b16 %v323
      %v872 = vunpack.c.l.b16 %v324
      %v873 = vunpack.c.l.b16 %v325
      %v874 = vunpack.c.l.b16 %v326
      %v875 = vunpack.c.l.b16 %v327
      %v876 = vunpack.c.l.b16 %v328
      %v877 = vunpack.c.l.b16 %v329
      %v878 = vunpack.c.l.b16 %v330
      %v879 = vunpack.c.l.b16 %v331
      %v880 = vunpack.c.l.b16 %v332
      %v881 = vunpack.c.l.b16 %v333
      %v882 = vunpack.c.l.b16 %v334
      %v883 = vunpack.c.l.b16 %v335
      %v884 = vunpack.c.l.b16 %v336
      %v885 = vunpack.c.l.b16 %v337
      %v886 = vunpack.c.l.b16 %v338
      %v887 = vunpack.c.l.b16 %v339
      %v888 = vunpack.c.l.b16 %v340
      %v889 = vunpack.c.l.b16 %v341
      %v890 = vunpack.c.l.b16 %v342
      %v891 = vunpack.c.l.b16 %v343
      %v892 = vunpack.c.l.b16 %v344
      %v893 = vunpack.c.l.b16 %v345
      %v894 = vunpack.c.l.b16 %v346
      %v895 = vunpack.c.l.b16 %v347
      %v896 = vunpack.c.l.b16 %v348
      %v897 = vunpack.c.l.b16 %v349
      %v898 = vunpack.c.l.b16 %v350
      %v899 = vunpack.c.l.b16 %v351
      %v900 = vunpack.c.l.b16 %v352
      %v901 = vunpack.c.l.b16 %v353
      %v902 = vunpack.c.l.b16 %v354
      %v903 = vunpack.c.l.b16 %v355
      %v904 = vunpack.c.l.b16 %v356
      %v905 = vunpack.c.l.b16 %v357
      %v906 = vunpack.c.l.b16 %v358
      %v907 = vunpack.c.l.b16 %v359
      %v908 = vunpack.c.l.b16 %v360
      %v909 = vunpack.c.l.b16 %v361
      %v910 = vunpack.c.l.b16 %v362
      %v911 = vunpack.c.l.b16 %v363
      %v912 = vunpack.c.l.b16 %v364
      %v913 = vunpack.c.l.b16 %v365
      %v914 = vunpack.c.l.b16 %v366
      %v915 = vunpack.c.l.b16 %v367
      %v916 = vunpack.c.l.b16 %v368
      %v917 = vunpack.c.l.b16 %v369
      %v918 = vunpack.c.l.b16 %v370
      %v919 = vunpack.c.l.b16 %v371
      %v920 = vunpack.c.l.b16 %v372
      %v921 = vunpack.c.l.b16 %v373
      %v922 = vunpack.c.l.b16 %v374
      %v923 = vunpack.c.l.b16 %v375
      %v924 = vunpack.c.l.b16 %v376
      %v925 = vunpack.c.l.b16 %v377
      %v926 = vunpack.c.l.b16 %v378
      %v927 = vunpack.c.l.b16 %v379
      %v928 = vunpack.c.l.b16 %v380
      %v929 = vunpack.c.l.b16 %v381
      %v930 = vunpack.c.l.b16 %v382
      %v931 = vunpack.c.l.b16 %v383
      %v932 = vunpack.c.l.b16 %v384
      %v933 = vunpack.c.l.b16 %v385
      %v934 = vunpack.c.l.b16 %v386
      %v935 = vunpack.c.l.b16 %v387
      %v936 = vunpack.c.l.b16 %v388
      %v937 = vunpack.c.l.b16 %v389
      %v938 = vunpack.c.l.b16 %v390
      %v939 = vunpack.c.l.b16 %v391
      %v940 = vunpack.c.l.b16 %v392
      %v941 = vunpack.c.l.b16 %v393
      %v942 = vunpack.c.l.b16 %v394
      %v943 = vpack.c.b16 %v872, %v871
      %v944 = vpack.c.b16 %v874, %v873
      %v945 = vpack.c.b16 %v876, %v875
      %v946 = vpack.c.b16 %v878, %v877
      %v947 = vpack.c.b16 %v880, %v879
      %v948 = vpack.c.b16 %v882, %v881
      %v949 = vpack.c.b16 %v884, %v883
      %v950 = vpack.c.b16 %v886, %v885
      %v951 = vpack.c.b16 %v888, %v887
      %v952 = vpack.c.b16 %v890, %v889
      %v953 = vpack.c.b16 %v892, %v891
      %v954 = vpack.c.b16 %v894, %v893
      %v955 = vpack.c.b16 %v896, %v895
      %v956 = vpack.c.b16 %v898, %v897
      %v957 = vpack.c.b16 %v900, %v899
      %v958 = vpack.c.b16 %v902, %v901
      %v959 = vpack.c.b16 %v904, %v903
      %v960 = vpack.c.b16 %v906, %v905
      %v961 = vpack.c.b16 %v908, %v907
      %v962 = vpack.c.b16 %v910, %v909
      %v963 = vpack.c.b16 %v912, %v911
      %v964 = vpack.c.b16 %v914, %v913
      %v965 = vpack.c.b16 %v916, %v915
      %v966 = vpack.c.b16 %v918, %v917
      %v967 = vpack.c.b16 %v920, %v919
      %v968 = vpack.c.b16 %v922, %v921
      %v969 = vpack.c.b16 %v924, %v923
      %v970 = vpack.c.b16 %v926, %v925
      %v971 = vpack.c.b16 %v928, %v927
      %v972 = vpack.c.b16 %v930, %v929
      %v973 = vpack.c.b16 %v932, %v931
      %v974 = vpack.c.b16 %v934, %v933
      %v975 = vpack.c.b16 %v936, %v935
      %v976 = vpack.c.b16 %v938, %v937
      %v977 = vpack.c.b16 %v940, %v939
      %v978 = vpack.c.b16 %v942, %v941
      %vm1015 = vcmask 523264
      %v1017 = vsel %vm1015, %v659, 0
      %v1020 = vsel %vm1015, %v664, 0
      %v1023 = vsel %vm1015, %v669, 0
      %v1026 = vsel %vm1015, %v674, 0
      %v1029 = vsel %vm1015, %v679, 0
      %v1032 = vsel %vm1015, %v684, 0
      %v1035 = vsel %vm1015, %v689, 0
      %v1038 = vsel %vm1015, %v694, 0
      %v1041 = vsel %vm1015, %v699, 0
      %v1044 = vsel %vm1015, %v704, 0
      %v1047 = vsel %vm1015, %v709, 0
      %v1050 = vsel %vm1015, %v714, 0
      %v1053 = vsel %vm1015, %v719, 0
      %v1056 = vsel %vm1015, %v724, 0
      %v1059 = vsel %vm1015, %v729, 0
      %v1062 = vsel %vm1015, %v734, 0
      %1064 = vmatpush.bf16.msra.mxu0 %v950
      %1065 = vmatpush.bf16.msra.mxu0 %v949
      %1066 = vmatpush.bf16.msra.mxu0 %v948
      %1067 = vmatpush.bf16.msra.mxu0 %v947
      %1068 = vmatpush.bf16.msra.mxu0 %v946
      %1069 = vmatpush.bf16.msra.mxu0 %v945
      %1070 = vmatpush.bf16.msra.mxu0 %v944
      %1071 = vmatpush.bf16.msra.mxu0 %v943
      %1072 = vmatmul.bf16.gmra.mxu0 %v655
      %v1073 = vpop.f32.mrf.mxu0
      %v1074 = vadd.f32 %v397, %v1073
      %v1075 = vpop.f32.mrf.mxu0
      %v1076 = vadd.f32 %v397, %v1075
      %1077 = vmatmul.bf16.gmra.mxu0 %v660
      %v1078 = vpop.f32.mrf.mxu0
      %v1079 = vadd.f32 %v397, %v1078
      %v1080 = vpop.f32.mrf.mxu0
      %v1081 = vadd.f32 %v397, %v1080
      %1082 = vmatmul.bf16.gmra.mxu0 %v665
      %v1083 = vpop.f32.mrf.mxu0
      %v1084 = vadd.f32 %v397, %v1083
      %v1085 = vpop.f32.mrf.mxu0
      %v1086 = vadd.f32 %v397, %v1085
      %1087 = vmatmul.bf16.gmra.mxu0 %v670
      %v1088 = vpop.f32.mrf.mxu0
      %v1089 = vadd.f32 %v397, %v1088
      %v1090 = vpop.f32.mrf.mxu0
      %v1091 = vadd.f32 %v397, %v1090
      %1092 = vmatmul.bf16.gmra.mxu0 %v675
      %v1093 = vpop.f32.mrf.mxu0
      %v1094 = vadd.f32 %v397, %v1093
      %v1095 = vpop.f32.mrf.mxu0
      %v1096 = vadd.f32 %v397, %v1095
      %1097 = vmatmul.bf16.gmra.mxu0 %v680
      %v1098 = vpop.f32.mrf.mxu0
      %v1099 = vadd.f32 %v397, %v1098
      %v1100 = vpop.f32.mrf.mxu0
      %v1101 = vadd.f32 %v397, %v1100
      %1102 = vmatmul.bf16.gmra.mxu0 %v685
      %v1103 = vpop.f32.mrf.mxu0
      %v1104 = vadd.f32 %v397, %v1103
      %v1105 = vpop.f32.mrf.mxu0
      %v1106 = vadd.f32 %v397, %v1105
      %1107 = vmatmul.bf16.gmra.mxu0 %v690
      %v1108 = vpop.f32.mrf.mxu0
      %v1109 = vadd.f32 %v397, %v1108
      %v1110 = vpop.f32.mrf.mxu0
      %v1111 = vadd.f32 %v397, %v1110
      %1112 = vmatmul.bf16.gmra.mxu0 %v695
      %v1113 = vpop.f32.mrf.mxu0
      %v1114 = vadd.f32 %v397, %v1113
      %v1115 = vpop.f32.mrf.mxu0
      %v1116 = vadd.f32 %v397, %v1115
      %1117 = vmatmul.bf16.gmra.mxu0 %v700
      %v1118 = vpop.f32.mrf.mxu0
      %v1119 = vadd.f32 %v397, %v1118
      %v1120 = vpop.f32.mrf.mxu0
      %v1121 = vadd.f32 %v397, %v1120
      %1122 = vmatmul.bf16.gmra.mxu0 %v705
      %v1123 = vpop.f32.mrf.mxu0
      %v1124 = vadd.f32 %v397, %v1123
      %v1125 = vpop.f32.mrf.mxu0
      %v1126 = vadd.f32 %v397, %v1125
      %1127 = vmatmul.bf16.gmra.mxu0 %v710
      %v1128 = vpop.f32.mrf.mxu0
      %v1129 = vadd.f32 %v397, %v1128
      %v1130 = vpop.f32.mrf.mxu0
      %v1131 = vadd.f32 %v397, %v1130
      %1132 = vmatmul.bf16.gmra.mxu0 %v715
      %v1133 = vpop.f32.mrf.mxu0
      %v1134 = vadd.f32 %v397, %v1133
      %v1135 = vpop.f32.mrf.mxu0
      %v1136 = vadd.f32 %v397, %v1135
      %1137 = vmatmul.bf16.gmra.mxu0 %v720
      %v1138 = vpop.f32.mrf.mxu0
      %v1139 = vadd.f32 %v397, %v1138
      %v1140 = vpop.f32.mrf.mxu0
      %v1141 = vadd.f32 %v397, %v1140
      %1142 = vmatmul.bf16.gmra.mxu0 %v725
      %v1143 = vpop.f32.mrf.mxu0
      %v1144 = vadd.f32 %v397, %v1143
      %v1145 = vpop.f32.mrf.mxu0
      %v1146 = vadd.f32 %v397, %v1145
      %1147 = vmatmul.bf16.gmra.mxu0 %v730
      %v1148 = vpop.f32.mrf.mxu0
      %v1149 = vadd.f32 %v397, %v1148
      %v1150 = vpop.f32.mrf.mxu0
      %v1151 = vadd.f32 %v397, %v1150
      %1152 = vdwg.mxu0
      %1153 = vmatpush.bf16.msra.mxu0 %v958
      %1154 = vmatpush.bf16.msra.mxu0 %v957
      %1155 = vmatpush.bf16.msra.mxu0 %v956
      %1156 = vmatpush.bf16.msra.mxu0 %v955
      %1157 = vmatpush.bf16.msra.mxu0 %v954
      %1158 = vmatpush.bf16.msra.mxu0 %v953
      %1159 = vmatpush.bf16.msra.mxu0 %v952
      %1160 = vmatpush.bf16.msra.mxu0 %v951
      %1161 = vmatmul.bf16.gmra.mxu0 %v656
      %v1162 = vpop.f32.mrf.mxu0
      %v1163 = vadd.f32 %v1074, %v1162
      %v1164 = vpop.f32.mrf.mxu0
      %v1165 = vadd.f32 %v1076, %v1164
      %1166 = vmatmul.bf16.gmra.mxu0 %v661
      %v1167 = vpop.f32.mrf.mxu0
      %v1168 = vadd.f32 %v1079, %v1167
      %v1169 = vpop.f32.mrf.mxu0
      %v1170 = vadd.f32 %v1081, %v1169
      %1171 = vmatmul.bf16.gmra.mxu0 %v666
      %v1172 = vpop.f32.mrf.mxu0
      %v1173 = vadd.f32 %v1084, %v1172
      %v1174 = vpop.f32.mrf.mxu0
      %v1175 = vadd.f32 %v1086, %v1174
      %1176 = vmatmul.bf16.gmra.mxu0 %v671
      %v1177 = vpop.f32.mrf.mxu0
      %v1178 = vadd.f32 %v1089, %v1177
      %v1179 = vpop.f32.mrf.mxu0
      %v1180 = vadd.f32 %v1091, %v1179
      %1181 = vmatmul.bf16.gmra.mxu0 %v676
      %v1182 = vpop.f32.mrf.mxu0
      %v1183 = vadd.f32 %v1094, %v1182
      %v1184 = vpop.f32.mrf.mxu0
      %v1185 = vadd.f32 %v1096, %v1184
      %1186 = vmatmul.bf16.gmra.mxu0 %v681
      %v1187 = vpop.f32.mrf.mxu0
      %v1188 = vadd.f32 %v1099, %v1187
      %v1189 = vpop.f32.mrf.mxu0
      %v1190 = vadd.f32 %v1101, %v1189
      %1191 = vmatmul.bf16.gmra.mxu0 %v686
      %v1192 = vpop.f32.mrf.mxu0
      %v1193 = vadd.f32 %v1104, %v1192
      %v1194 = vpop.f32.mrf.mxu0
      %v1195 = vadd.f32 %v1106, %v1194
      %1196 = vmatmul.bf16.gmra.mxu0 %v691
      %v1197 = vpop.f32.mrf.mxu0
      %v1198 = vadd.f32 %v1109, %v1197
      %v1199 = vpop.f32.mrf.mxu0
      %v1200 = vadd.f32 %v1111, %v1199
      %1201 = vmatmul.bf16.gmra.mxu0 %v696
      %v1202 = vpop.f32.mrf.mxu0
      %v1203 = vadd.f32 %v1114, %v1202
      %v1204 = vpop.f32.mrf.mxu0
      %v1205 = vadd.f32 %v1116, %v1204
      %1206 = vmatmul.bf16.gmra.mxu0 %v701
      %v1207 = vpop.f32.mrf.mxu0
      %v1208 = vadd.f32 %v1119, %v1207
      %v1209 = vpop.f32.mrf.mxu0
      %v1210 = vadd.f32 %v1121, %v1209
      %1211 = vmatmul.bf16.gmra.mxu0 %v706
      %v1212 = vpop.f32.mrf.mxu0
      %v1213 = vadd.f32 %v1124, %v1212
      %v1214 = vpop.f32.mrf.mxu0
      %v1215 = vadd.f32 %v1126, %v1214
      %1216 = vmatmul.bf16.gmra.mxu0 %v711
      %v1217 = vpop.f32.mrf.mxu0
      %v1218 = vadd.f32 %v1129, %v1217
      %v1219 = vpop.f32.mrf.mxu0
      %v1220 = vadd.f32 %v1131, %v1219
      %1221 = vmatmul.bf16.gmra.mxu0 %v716
      %v1222 = vpop.f32.mrf.mxu0
      %v1223 = vadd.f32 %v1134, %v1222
      %v1224 = vpop.f32.mrf.mxu0
      %v1225 = vadd.f32 %v1136, %v1224
      %1226 = vmatmul.bf16.gmra.mxu0 %v721
      %v1227 = vpop.f32.mrf.mxu0
      %v1228 = vadd.f32 %v1139, %v1227
      %v1229 = vpop.f32.mrf.mxu0
      %v1230 = vadd.f32 %v1141, %v1229
      %1231 = vmatmul.bf16.gmra.mxu0 %v726
      %v1232 = vpop.f32.mrf.mxu0
      %v1233 = vadd.f32 %v1144, %v1232
      %v1234 = vpop.f32.mrf.mxu0
      %v1235 = vadd.f32 %v1146, %v1234
      %1236 = vmatmul.bf16.gmra.mxu0 %v731
      %v1237 = vpop.f32.mrf.mxu0
      %v1238 = vadd.f32 %v1149, %v1237
      %v1239 = vpop.f32.mrf.mxu0
      %v1240 = vadd.f32 %v1151, %v1239
      %1241 = vdwg.mxu0
      %1242 = vmatpush.bf16.msra.mxu0 %v966
      %1243 = vmatpush.bf16.msra.mxu0 %v965
      %1244 = vmatpush.bf16.msra.mxu0 %v964
      %1245 = vmatpush.bf16.msra.mxu0 %v963
      %1246 = vmatpush.bf16.msra.mxu0 %v962
      %1247 = vmatpush.bf16.msra.mxu0 %v961
      %1248 = vmatpush.bf16.msra.mxu0 %v960
      %1249 = vmatpush.bf16.msra.mxu0 %v959
      %1250 = vmatmul.bf16.gmra.mxu0 %v657
      %v1251 = vpop.f32.mrf.mxu0
      %v1252 = vadd.f32 %v1163, %v1251
      %v1253 = vpop.f32.mrf.mxu0
      %v1254 = vadd.f32 %v1165, %v1253
      %1255 = vmatmul.bf16.gmra.mxu0 %v662
      %v1256 = vpop.f32.mrf.mxu0
      %v1257 = vadd.f32 %v1168, %v1256
      %v1258 = vpop.f32.mrf.mxu0
      %v1259 = vadd.f32 %v1170, %v1258
      %1260 = vmatmul.bf16.gmra.mxu0 %v667
      %v1261 = vpop.f32.mrf.mxu0
      %v1262 = vadd.f32 %v1173, %v1261
      %v1263 = vpop.f32.mrf.mxu0
      %v1264 = vadd.f32 %v1175, %v1263
      %1265 = vmatmul.bf16.gmra.mxu0 %v672
      %v1266 = vpop.f32.mrf.mxu0
      %v1267 = vadd.f32 %v1178, %v1266
      %v1268 = vpop.f32.mrf.mxu0
      %v1269 = vadd.f32 %v1180, %v1268
      %1270 = vmatmul.bf16.gmra.mxu0 %v677
      %v1271 = vpop.f32.mrf.mxu0
      %v1272 = vadd.f32 %v1183, %v1271
      %v1273 = vpop.f32.mrf.mxu0
      %v1274 = vadd.f32 %v1185, %v1273
      %1275 = vmatmul.bf16.gmra.mxu0 %v682
      %v1276 = vpop.f32.mrf.mxu0
      %v1277 = vadd.f32 %v1188, %v1276
      %v1278 = vpop.f32.mrf.mxu0
      %v1279 = vadd.f32 %v1190, %v1278
      %1280 = vmatmul.bf16.gmra.mxu0 %v687
      %v1281 = vpop.f32.mrf.mxu0
      %v1282 = vadd.f32 %v1193, %v1281
      %v1283 = vpop.f32.mrf.mxu0
      %v1284 = vadd.f32 %v1195, %v1283
      %1285 = vmatmul.bf16.gmra.mxu0 %v692
      %v1286 = vpop.f32.mrf.mxu0
      %v1287 = vadd.f32 %v1198, %v1286
      %v1288 = vpop.f32.mrf.mxu0
      %v1289 = vadd.f32 %v1200, %v1288
      %1290 = vmatmul.bf16.gmra.mxu0 %v697
      %v1291 = vpop.f32.mrf.mxu0
      %v1292 = vadd.f32 %v1203, %v1291
      %v1293 = vpop.f32.mrf.mxu0
      %v1294 = vadd.f32 %v1205, %v1293
      %1295 = vmatmul.bf16.gmra.mxu0 %v702
      %v1296 = vpop.f32.mrf.mxu0
      %v1297 = vadd.f32 %v1208, %v1296
      %v1298 = vpop.f32.mrf.mxu0
      %v1299 = vadd.f32 %v1210, %v1298
      %1300 = vmatmul.bf16.gmra.mxu0 %v707
      %v1301 = vpop.f32.mrf.mxu0
      %v1302 = vadd.f32 %v1213, %v1301
      %v1303 = vpop.f32.mrf.mxu0
      %v1304 = vadd.f32 %v1215, %v1303
      %1305 = vmatmul.bf16.gmra.mxu0 %v712
      %v1306 = vpop.f32.mrf.mxu0
      %v1307 = vadd.f32 %v1218, %v1306
      %v1308 = vpop.f32.mrf.mxu0
      %v1309 = vadd.f32 %v1220, %v1308
      %1310 = vmatmul.bf16.gmra.mxu0 %v717
      %v1311 = vpop.f32.mrf.mxu0
      %v1312 = vadd.f32 %v1223, %v1311
      %v1313 = vpop.f32.mrf.mxu0
      %v1314 = vadd.f32 %v1225, %v1313
      %1315 = vmatmul.bf16.gmra.mxu0 %v722
      %v1316 = vpop.f32.mrf.mxu0
      %v1317 = vadd.f32 %v1228, %v1316
      %v1318 = vpop.f32.mrf.mxu0
      %v1319 = vadd.f32 %v1230, %v1318
      %1320 = vmatmul.bf16.gmra.mxu0 %v727
      %v1321 = vpop.f32.mrf.mxu0
      %v1322 = vadd.f32 %v1233, %v1321
      %v1323 = vpop.f32.mrf.mxu0
      %v1324 = vadd.f32 %v1235, %v1323
      %1325 = vmatmul.bf16.gmra.mxu0 %v732
      %v1326 = vpop.f32.mrf.mxu0
      %v1327 = vadd.f32 %v1238, %v1326
      %v1328 = vpop.f32.mrf.mxu0
      %v1329 = vadd.f32 %v1240, %v1328
      %1330 = vdwg.mxu0
      %1331 = vmatpush.bf16.msra.mxu0 %v974
      %1332 = vmatpush.bf16.msra.mxu0 %v973
      %1333 = vmatpush.bf16.msra.mxu0 %v972
      %1334 = vmatpush.bf16.msra.mxu0 %v971
      %1335 = vmatpush.bf16.msra.mxu0 %v970
      %1336 = vmatpush.bf16.msra.mxu0 %v969
      %1337 = vmatpush.bf16.msra.mxu0 %v968
      %1338 = vmatpush.bf16.msra.mxu0 %v967
      %1339 = vmatmul.bf16.gmra.mxu0 %v658
      %v1340 = vpop.f32.mrf.mxu0
      %v1341 = vadd.f32 %v1252, %v1340
      %v1342 = vpop.f32.mrf.mxu0
      %v1343 = vadd.f32 %v1254, %v1342
      %1344 = vmatmul.bf16.gmra.mxu0 %v663
      %v1345 = vpop.f32.mrf.mxu0
      %v1346 = vadd.f32 %v1257, %v1345
      %v1347 = vpop.f32.mrf.mxu0
      %v1348 = vadd.f32 %v1259, %v1347
      %1349 = vmatmul.bf16.gmra.mxu0 %v668
      %v1350 = vpop.f32.mrf.mxu0
      %v1351 = vadd.f32 %v1262, %v1350
      %v1352 = vpop.f32.mrf.mxu0
      %v1353 = vadd.f32 %v1264, %v1352
      %1354 = vmatmul.bf16.gmra.mxu0 %v673
      %v1355 = vpop.f32.mrf.mxu0
      %v1356 = vadd.f32 %v1267, %v1355
      %v1357 = vpop.f32.mrf.mxu0
      %v1358 = vadd.f32 %v1269, %v1357
      %1359 = vmatmul.bf16.gmra.mxu0 %v678
      %v1360 = vpop.f32.mrf.mxu0
      %v1361 = vadd.f32 %v1272, %v1360
      %v1362 = vpop.f32.mrf.mxu0
      %v1363 = vadd.f32 %v1274, %v1362
      %1364 = vmatmul.bf16.gmra.mxu0 %v683
      %v1365 = vpop.f32.mrf.mxu0
      %v1366 = vadd.f32 %v1277, %v1365
      %v1367 = vpop.f32.mrf.mxu0
      %v1368 = vadd.f32 %v1279, %v1367
      %1369 = vmatmul.bf16.gmra.mxu0 %v688
      %v1370 = vpop.f32.mrf.mxu0
      %v1371 = vadd.f32 %v1282, %v1370
      %v1372 = vpop.f32.mrf.mxu0
      %v1373 = vadd.f32 %v1284, %v1372
      %1374 = vmatmul.bf16.gmra.mxu0 %v693
      %v1375 = vpop.f32.mrf.mxu0
      %v1376 = vadd.f32 %v1287, %v1375
      %v1377 = vpop.f32.mrf.mxu0
      %v1378 = vadd.f32 %v1289, %v1377
      %1379 = vmatmul.bf16.gmra.mxu0 %v698
      %v1380 = vpop.f32.mrf.mxu0
      %v1381 = vadd.f32 %v1292, %v1380
      %v1382 = vpop.f32.mrf.mxu0
      %v1383 = vadd.f32 %v1294, %v1382
      %1384 = vmatmul.bf16.gmra.mxu0 %v703
      %v1385 = vpop.f32.mrf.mxu0
      %v1386 = vadd.f32 %v1297, %v1385
      %v1387 = vpop.f32.mrf.mxu0
      %v1388 = vadd.f32 %v1299, %v1387
      %1389 = vmatmul.bf16.gmra.mxu0 %v708
      %v1390 = vpop.f32.mrf.mxu0
      %v1391 = vadd.f32 %v1302, %v1390
      %v1392 = vpop.f32.mrf.mxu0
      %v1393 = vadd.f32 %v1304, %v1392
      %1394 = vmatmul.bf16.gmra.mxu0 %v713
      %v1395 = vpop.f32.mrf.mxu0
      %v1396 = vadd.f32 %v1307, %v1395
      %v1397 = vpop.f32.mrf.mxu0
      %v1398 = vadd.f32 %v1309, %v1397
      %1399 = vmatmul.bf16.gmra.mxu0 %v718
      %v1400 = vpop.f32.mrf.mxu0
      %v1401 = vadd.f32 %v1312, %v1400
      %v1402 = vpop.f32.mrf.mxu0
      %v1403 = vadd.f32 %v1314, %v1402
      %1404 = vmatmul.bf16.gmra.mxu0 %v723
      %v1405 = vpop.f32.mrf.mxu0
      %v1406 = vadd.f32 %v1317, %v1405
      %v1407 = vpop.f32.mrf.mxu0
      %v1408 = vadd.f32 %v1319, %v1407
      %1409 = vmatmul.bf16.gmra.mxu0 %v728
      %v1410 = vpop.f32.mrf.mxu0
      %v1411 = vadd.f32 %v1322, %v1410
      %v1412 = vpop.f32.mrf.mxu0
      %v1413 = vadd.f32 %v1324, %v1412
      %1414 = vmatmul.bf16.gmra.mxu0 %v733
      %v1415 = vpop.f32.mrf.mxu0
      %v1416 = vadd.f32 %v1327, %v1415
      %v1417 = vpop.f32.mrf.mxu0
      %v1418 = vadd.f32 %v1329, %v1417
      %1419 = vdwg.mxu0
      %1420 = vmatpush.bf16.msra.mxu0 0
      %1421 = vmatpush.bf16.msra.mxu0 0
      %1422 = vmatpush.bf16.msra.mxu0 0
      %1423 = vmatpush.bf16.msra.mxu0 0
      %1424 = vmatpush.bf16.msra.mxu0 %v978
      %1425 = vmatpush.bf16.msra.mxu0 %v977
      %1426 = vmatpush.bf16.msra.mxu0 %v976
      %1427 = vmatpush.bf16.msra.mxu0 %v975
      %1428 = vmatmul.bf16.gmra.mxu0 %v1017
      %v1429 = vpop.f32.mrf.mxu0
      %v1430 = vadd.f32 %v1341, %v1429
      %v1431 = vpop.f32.mrf.mxu0
      %v1432 = vadd.f32 %v1343, %v1431
      %1433 = vmatmul.bf16.gmra.mxu0 %v1020
      %v1434 = vpop.f32.mrf.mxu0
      %v1435 = vadd.f32 %v1346, %v1434
      %v1436 = vpop.f32.mrf.mxu0
      %v1437 = vadd.f32 %v1348, %v1436
      %1438 = vmatmul.bf16.gmra.mxu0 %v1023
      %v1439 = vpop.f32.mrf.mxu0
      %v1440 = vadd.f32 %v1351, %v1439
      %v1441 = vpop.f32.mrf.mxu0
      %v1442 = vadd.f32 %v1353, %v1441
      %1443 = vmatmul.bf16.gmra.mxu0 %v1026
      %v1444 = vpop.f32.mrf.mxu0
      %v1445 = vadd.f32 %v1356, %v1444
      %v1446 = vpop.f32.mrf.mxu0
      %v1447 = vadd.f32 %v1358, %v1446
      %1448 = vmatmul.bf16.gmra.mxu0 %v1029
      %v1449 = vpop.f32.mrf.mxu0
      %v1450 = vadd.f32 %v1361, %v1449
      %v1451 = vpop.f32.mrf.mxu0
      %v1452 = vadd.f32 %v1363, %v1451
      %1453 = vmatmul.bf16.gmra.mxu0 %v1032
      %v1454 = vpop.f32.mrf.mxu0
      %v1455 = vadd.f32 %v1366, %v1454
      %v1456 = vpop.f32.mrf.mxu0
      %v1457 = vadd.f32 %v1368, %v1456
      %1458 = vmatmul.bf16.gmra.mxu0 %v1035
      %v1459 = vpop.f32.mrf.mxu0
      %v1460 = vadd.f32 %v1371, %v1459
      %v1461 = vpop.f32.mrf.mxu0
      %v1462 = vadd.f32 %v1373, %v1461
      %1463 = vmatmul.bf16.gmra.mxu0 %v1038
      %v1464 = vpop.f32.mrf.mxu0
      %v1465 = vadd.f32 %v1376, %v1464
      %v1466 = vpop.f32.mrf.mxu0
      %v1467 = vadd.f32 %v1378, %v1466
      %1468 = vmatmul.bf16.gmra.mxu0 %v1041
      %v1469 = vpop.f32.mrf.mxu0
      %v1470 = vadd.f32 %v1381, %v1469
      %v1471 = vpop.f32.mrf.mxu0
      %v1472 = vadd.f32 %v1383, %v1471
      %1473 = vmatmul.bf16.gmra.mxu0 %v1044
      %v1474 = vpop.f32.mrf.mxu0
      %v1475 = vadd.f32 %v1386, %v1474
      %v1476 = vpop.f32.mrf.mxu0
      %v1477 = vadd.f32 %v1388, %v1476
      %1478 = vmatmul.bf16.gmra.mxu0 %v1047
      %v1479 = vpop.f32.mrf.mxu0
      %v1480 = vadd.f32 %v1391, %v1479
      %v1481 = vpop.f32.mrf.mxu0
      %v1482 = vadd.f32 %v1393, %v1481
      %1483 = vmatmul.bf16.gmra.mxu0 %v1050
      %v1484 = vpop.f32.mrf.mxu0
      %v1485 = vadd.f32 %v1396, %v1484
      %v1486 = vpop.f32.mrf.mxu0
      %v1487 = vadd.f32 %v1398, %v1486
      %1488 = vmatmul.bf16.gmra.mxu0 %v1053
      %v1489 = vpop.f32.mrf.mxu0
      %v1490 = vadd.f32 %v1401, %v1489
      %v1491 = vpop.f32.mrf.mxu0
      %v1492 = vadd.f32 %v1403, %v1491
      %1493 = vmatmul.bf16.gmra.mxu0 %v1056
      %v1494 = vpop.f32.mrf.mxu0
      %v1495 = vadd.f32 %v1406, %v1494
      %v1496 = vpop.f32.mrf.mxu0
      %v1497 = vadd.f32 %v1408, %v1496
      %1498 = vmatmul.bf16.gmra.mxu0 %v1059
      %v1499 = vpop.f32.mrf.mxu0
      %v1500 = vadd.f32 %v1411, %v1499
      %v1501 = vpop.f32.mrf.mxu0
      %v1502 = vadd.f32 %v1413, %v1501
      %1503 = vmatmul.bf16.gmra.mxu0 %v1062
      %v1504 = vpop.f32.mrf.mxu0
      %v1505 = vadd.f32 %v1416, %v1504
      %v1506 = vpop.f32.mrf.mxu0
      %v1507 = vadd.f32 %v1418, %v1506
      %1508 = vdwg.mxu0
      %v1509 = vld [vmem:[%s218] sm:$0xf]
      %v1510 = vld [vmem:[%s218 + $0x4] sm:$0xf]
      %v1511 = vld [vmem:[%s218 + $0x8] sm:$0xf]
      %v1512 = vld [vmem:[%s218 + $0xc] sm:$0xf]
      %v1513 = vld [vmem:[%s218 + $0x10] sm:$0xf]
      %v1514 = vld [vmem:[%s218 + $0x14] sm:$0xf]
      %v1515 = vld [vmem:[%s218 + $0x18] sm:$0xf]
      %v1516 = vld [vmem:[%s218 + $0x1c] sm:$0xf]
      %v1517 = vld [vmem:[%s218 + $0x20] sm:$0xf]
      %v1518 = vld [vmem:[%s218 + $0x24] sm:$0xf]
      %v1519 = vld [vmem:[%s218 + $0x28] sm:$0xf]
      %v1520 = vld [vmem:[%s218 + $0x2c] sm:$0xf]
      %v1521 = vld [vmem:[%s218 + $0x30] sm:$0xf]
      %v1522 = vld [vmem:[%s218 + $0x34] sm:$0xf]
      %v1523 = vld [vmem:[%s218 + $0x38] sm:$0xf]
      %v1524 = vld [vmem:[%s218 + $0x3c] sm:$0xf]
      %v1525 = vld [vmem:[%s218 + $0x40] sm:$0xf]
      %v1526 = vld [vmem:[%s218 + $0x44] sm:$0xf]
      %v1527 = vld [vmem:[%s218 + $0x48] sm:$0xf]
      %v1528 = vld [vmem:[%s218 + $0x4c] sm:$0xf]
      %v1529 = vld [vmem:[%s218 + $0x50] sm:$0xf]
      %v1530 = vld [vmem:[%s218 + $0x54] sm:$0xf]
      %v1531 = vld [vmem:[%s218 + $0x58] sm:$0xf]
      %v1532 = vld [vmem:[%s218 + $0x5c] sm:$0xf]
      %v1533 = vld [vmem:[%s218 + $0x60] sm:$0xf]
      %v1534 = vld [vmem:[%s218 + $0x64] sm:$0xf]
      %v1535 = vld [vmem:[%s218 + $0x68] sm:$0xf]
      %v1536 = vld [vmem:[%s218 + $0x6c] sm:$0xf]
      %v1537 = vld [vmem:[%s218 + $0x70] sm:$0xf]
      %v1538 = vld [vmem:[%s218 + $0x74] sm:$0xf]
      %v1539 = vld [vmem:[%s218 + $0x78] sm:$0xf]
      %v1540 = vld [vmem:[%s218 + $0x7c] sm:$0xf]
      %v1541 = vunpack.c.l.bf16 %v1509
      %v1542 = vunpack.c.l.bf16 %v1510
      %v1543 = vunpack.c.l.bf16 %v1511
      %v1544 = vunpack.c.l.bf16 %v1512
      %v1545 = vunpack.c.l.bf16 %v1513
      %v1546 = vunpack.c.l.bf16 %v1514
      %v1547 = vunpack.c.l.bf16 %v1515
      %v1548 = vunpack.c.l.bf16 %v1516
      %v1549 = vunpack.c.l.bf16 %v1517
      %v1550 = vunpack.c.l.bf16 %v1518
      %v1551 = vunpack.c.l.bf16 %v1519
      %v1552 = vunpack.c.l.bf16 %v1520
      %v1553 = vunpack.c.l.bf16 %v1521
      %v1554 = vunpack.c.l.bf16 %v1522
      %v1555 = vunpack.c.l.bf16 %v1523
      %v1556 = vunpack.c.l.bf16 %v1524
      %v1557 = vunpack.c.l.bf16 %v1525
      %v1558 = vunpack.c.l.bf16 %v1526
      %v1559 = vunpack.c.l.bf16 %v1527
      %v1560 = vunpack.c.l.bf16 %v1528
      %v1561 = vunpack.c.l.bf16 %v1529
      %v1562 = vunpack.c.l.bf16 %v1530
      %v1563 = vunpack.c.l.bf16 %v1531
      %v1564 = vunpack.c.l.bf16 %v1532
      %v1565 = vunpack.c.l.bf16 %v1533
      %v1566 = vunpack.c.l.bf16 %v1534
      %v1567 = vunpack.c.l.bf16 %v1535
      %v1568 = vunpack.c.l.bf16 %v1536
      %v1569 = vunpack.c.l.bf16 %v1537
      %v1570 = vunpack.c.l.bf16 %v1538
      %v1571 = vunpack.c.l.bf16 %v1539
      %v1572 = vunpack.c.l.bf16 %v1540
      %v1573 = vadd.f32 %v1430, %v1541
      %v1574 = vadd.f32 %v1432, %v1542
      %v1575 = vadd.f32 %v1435, %v1543
      %v1576 = vadd.f32 %v1437, %v1544
      %v1577 = vadd.f32 %v1440, %v1545
      %v1578 = vadd.f32 %v1442, %v1546
      %v1579 = vadd.f32 %v1445, %v1547
      %v1580 = vadd.f32 %v1447, %v1548
      %v1581 = vadd.f32 %v1450, %v1549
      %v1582 = vadd.f32 %v1452, %v1550
      %v1583 = vadd.f32 %v1455, %v1551
      %v1584 = vadd.f32 %v1457, %v1552
      %v1585 = vadd.f32 %v1460, %v1553
      %v1586 = vadd.f32 %v1462, %v1554
      %v1587 = vadd.f32 %v1465, %v1555
      %v1588 = vadd.f32 %v1467, %v1556
      %v1589 = vadd.f32 %v1470, %v1557
      %v1590 = vadd.f32 %v1472, %v1558
      %v1591 = vadd.f32 %v1475, %v1559
      %v1592 = vadd.f32 %v1477, %v1560
      %v1593 = vadd.f32 %v1480, %v1561
      %v1594 = vadd.f32 %v1482, %v1562
      %v1595 = vadd.f32 %v1485, %v1563
      %v1596 = vadd.f32 %v1487, %v1564
      %v1597 = vadd.f32 %v1490, %v1565
      %v1598 = vadd.f32 %v1492, %v1566
      %v1599 = vadd.f32 %v1495, %v1567
      %v1600 = vadd.f32 %v1497, %v1568
      %v1601 = vadd.f32 %v1500, %v1569
      %v1602 = vadd.f32 %v1502, %v1570
      %v1603 = vadd.f32 %v1505, %v1571
      %v1604 = vadd.f32 %v1507, %v1572
      %v1605 = vmax.f32 %v1573, 0.0
      %v1606 = vmax.f32 %v1574, 0.0
      %v1607 = vmax.f32 %v1575, 0.0
      %v1608 = vmax.f32 %v1576, 0.0
      %v1609 = vmax.f32 %v1577, 0.0
      %v1610 = vmax.f32 %v1578, 0.0
      %v1611 = vmax.f32 %v1579, 0.0
      %v1612 = vmax.f32 %v1580, 0.0
      %v1613 = vmax.f32 %v1581, 0.0
      %v1614 = vmax.f32 %v1582, 0.0
      %v1615 = vmax.f32 %v1583, 0.0
      %v1616 = vmax.f32 %v1584, 0.0
      %v1617 = vmax.f32 %v1585, 0.0
      %v1618 = vmax.f32 %v1586, 0.0
      %v1619 = vmax.f32 %v1587, 0.0
      %v1620 = vmax.f32 %v1588, 0.0
      %v1621 = vmax.f32 %v1589, 0.0
      %v1622 = vmax.f32 %v1590, 0.0
      %v1623 = vmax.f32 %v1591, 0.0
      %v1624 = vmax.f32 %v1592, 0.0
      %v1625 = vmax.f32 %v1593, 0.0
      %v1626 = vmax.f32 %v1594, 0.0
      %v1627 = vmax.f32 %v1595, 0.0
      %v1628 = vmax.f32 %v1596, 0.0
      %v1629 = vmax.f32 %v1597, 0.0
      %v1630 = vmax.f32 %v1598, 0.0
      %v1631 = vmax.f32 %v1599, 0.0
      %v1632 = vmax.f32 %v1600, 0.0
      %v1633 = vmax.f32 %v1601, 0.0
      %v1634 = vmax.f32 %v1602, 0.0
      %v1635 = vmax.f32 %v1603, 0.0
      %v1636 = vmax.f32 %v1604, 0.0
      %v1637 = vpack.c.bf16 %v1605, %v1605
      %v1638 = vpack.c.bf16 %v1606, %v1606
      %v1639 = vpack.c.bf16 %v1607, %v1607
      %v1640 = vpack.c.bf16 %v1608, %v1608
      %v1641 = vpack.c.bf16 %v1609, %v1609
      %v1642 = vpack.c.bf16 %v1610, %v1610
      %v1643 = vpack.c.bf16 %v1611, %v1611
      %v1644 = vpack.c.bf16 %v1612, %v1612
      %v1645 = vpack.c.bf16 %v1613, %v1613
      %v1646 = vpack.c.bf16 %v1614, %v1614
      %v1647 = vpack.c.bf16 %v1615, %v1615
      %v1648 = vpack.c.bf16 %v1616, %v1616
      %v1649 = vpack.c.bf16 %v1617, %v1617
      %v1650 = vpack.c.bf16 %v1618, %v1618
      %v1651 = vpack.c.bf16 %v1619, %v1619
      %v1652 = vpack.c.bf16 %v1620, %v1620
      %v1653 = vpack.c.bf16 %v1621, %v1621
      %v1654 = vpack.c.bf16 %v1622, %v1622
      %v1655 = vpack.c.bf16 %v1623, %v1623
      %v1656 = vpack.c.bf16 %v1624, %v1624
      %v1657 = vpack.c.bf16 %v1625, %v1625
      %v1658 = vpack.c.bf16 %v1626, %v1626
      %v1659 = vpack.c.bf16 %v1627, %v1627
      %v1660 = vpack.c.bf16 %v1628, %v1628
      %v1661 = vpack.c.bf16 %v1629, %v1629
      %v1662 = vpack.c.bf16 %v1630, %v1630
      %v1663 = vpack.c.bf16 %v1631, %v1631
      %v1664 = vpack.c.bf16 %v1632, %v1632
      %v1665 = vpack.c.bf16 %v1633, %v1633
      %v1666 = vpack.c.bf16 %v1634, %v1634
      %v1667 = vpack.c.bf16 %v1635, %v1635
      %v1668 = vpack.c.bf16 %v1636, %v1636
      %vm1669 = vcmask 519168
      %1670 = vst.msk [vmem:[%s224] sm:$0xf] %vm1669, %v1637
      %1671 = vst.msk [vmem:[%s224 + $0x4] sm:$0xf] %vm1669, %v1638
      %1672 = vst.msk [vmem:[%s224 + $0x8] sm:$0xf] %vm1669, %v1639
      %1673 = vst.msk [vmem:[%s224 + $0xc] sm:$0xf] %vm1669, %v1640
      %1674 = vst.msk [vmem:[%s224 + $0x10] sm:$0xf] %vm1669, %v1641
      %1675 = vst.msk [vmem:[%s224 + $0x14] sm:$0xf] %vm1669, %v1642
      %1676 = vst.msk [vmem:[%s224 + $0x18] sm:$0xf] %vm1669, %v1643
      %1677 = vst.msk [vmem:[%s224 + $0x1c] sm:$0xf] %vm1669, %v1644
      %1678 = vst.msk [vmem:[%s224 + $0x20] sm:$0xf] %vm1669, %v1645
      %1679 = vst.msk [vmem:[%s224 + $0x24] sm:$0xf] %vm1669, %v1646
      %1680 = vst.msk [vmem:[%s224 + $0x28] sm:$0xf] %vm1669, %v1647
      %1681 = vst.msk [vmem:[%s224 + $0x2c] sm:$0xf] %vm1669, %v1648
      %1682 = vst.msk [vmem:[%s224 + $0x30] sm:$0xf] %vm1669, %v1649
      %1683 = vst.msk [vmem:[%s224 + $0x34] sm:$0xf] %vm1669, %v1650
      %1684 = vst.msk [vmem:[%s224 + $0x38] sm:$0xf] %vm1669, %v1651
      %1685 = vst.msk [vmem:[%s224 + $0x3c] sm:$0xf] %vm1669, %v1652
      %1686 = vst.msk [vmem:[%s224 + $0x40] sm:$0xf] %vm1669, %v1653
      %1687 = vst.msk [vmem:[%s224 + $0x44] sm:$0xf] %vm1669, %v1654
      %1688 = vst.msk [vmem:[%s224 + $0x48] sm:$0xf] %vm1669, %v1655
      %1689 = vst.msk [vmem:[%s224 + $0x4c] sm:$0xf] %vm1669, %v1656
      %1690 = vst.msk [vmem:[%s224 + $0x50] sm:$0xf] %vm1669, %v1657
      %1691 = vst.msk [vmem:[%s224 + $0x54] sm:$0xf] %vm1669, %v1658
      %1692 = vst.msk [vmem:[%s224 + $0x58] sm:$0xf] %vm1669, %v1659
      %1693 = vst.msk [vmem:[%s224 + $0x5c] sm:$0xf] %vm1669, %v1660
      %1694 = vst.msk [vmem:[%s224 + $0x60] sm:$0xf] %vm1669, %v1661
      %1695 = vst.msk [vmem:[%s224 + $0x64] sm:$0xf] %vm1669, %v1662
      %1696 = vst.msk [vmem:[%s224 + $0x68] sm:$0xf] %vm1669, %v1663
      %1697 = vst.msk [vmem:[%s224 + $0x6c] sm:$0xf] %vm1669, %v1664
      %1698 = vst.msk [vmem:[%s224 + $0x70] sm:$0xf] %vm1669, %v1665
      %1699 = vst.msk [vmem:[%s224 + $0x74] sm:$0xf] %vm1669, %v1666
      %1700 = vst.msk [vmem:[%s224 + $0x78] sm:$0xf] %vm1669, %v1667
      %1701 = vst.msk [vmem:[%s224 + $0x7c] sm:$0xf] %vm1669, %v1668
      %s1702 = smul.u32 32, %s15
      %p1703 = scmp.lt.s32.totalorder %s1702, 63
      %s1704 = scalar_select %p1703, %s1702, 63
      %s1705 = smul.addr %s1704, 4
      %s1706 = scalar_lea.vmem %s4, %s1705
      // Predicated region
      $region37: #{domain_resnet_forward.8} parent=35 // pred_check
        %p1707 = pneg %p127
      $region38: #{domain_resnet_forward.8} parent=35 // pred_check_branch
        %1709 = sbr.rel (%p1707) target = $region40
      $region39: #{domain_resnet_forward.8} parent=35 // pred_region
        %s1710 = smul.u32 32, %s15
      $region40: #{domain_resnet_forward.8} parent=35 // pred_fallthru
        _
    $region36: #{domain_resnet_forward.8} parent=5 // pred_fallthru
      _
    %p1711 = scmp.le.s32.totalorder 2, %s10
    // Predicated region
    $region41: #{domain_resnet_forward.8} parent=5 // pred_check
      %p1712 = pneg %p1711
    $region42: #{domain_resnet_forward.8} parent=5 // pred_check_branch
      %1714 = sbr.rel (%p1712) target = $region44
    $region43: #{domain_resnet_forward.8} parent=5 // pred_region
      %s1715 = ssub.s32 %s10, 2
      // Predicated region
      $region45: #{domain_resnet_forward.8} parent=43 // pred_check
        %p1716 = pneg %p133
      $region46: #{domain_resnet_forward.8} parent=43 // pred_check_branch
        %1718 = sbr.rel (%p1716) target = $region48
      $region47: #{domain_resnet_forward.8} parent=43 // pred_region
        %s1719 = smul.u32 32, %s16
        %p1720 = scmp.lt.s32.totalorder %s1719, 63
        %s1721 = scalar_select %p1720, %s1719, 63
        %s1722 = smul.addr %s1721, 4
        %s1723 = scalar_lea.vmem %s4, %s1722
      $region48: #{domain_resnet_forward.8} parent=43 // pred_fallthru
        _
    $region44: #{domain_resnet_forward.8} parent=5 // pred_fallthru
      _
  $region6: #{domain_resnet_forward.8} parent=0 // loop_footer
    %s14 = sadd.s32 1, %s10
  $region7: #{domain_resnet_forward.8} parent=0 // loop_footer_branch
    %9 = sbr.rel target = $region3
  $region8: #{domain_resnet_forward.8} parent=0 // loop_exit
    _

// kernel: domain_resnet_forward.9
$region0: #{domain_resnet_forward.9}
  #allocation0 [shape = 'u32[]', space=smem, size = 0x4, offset = 0x4, fixed_abs, tag = 'smem constant byte address 0x4 - core index']
  #allocation1 [shape = 'u32[72,128]{1,0:T(1,128)}', space=vmem, size = 0x9000, scoped, tag = 'internal scratch']
  %s0 = inlined_call_operand.vmem [shape: bf16[104,576], index: 0, kind: input, shape index: {}]
  %s1 = inlined_call_operand.vmem [shape: bf16[576,128], index: 1, kind: input, shape index: {}]
  %s2 = inlined_call_operand.vmem [shape: f32[1,128], index: 2, kind: input, shape index: {}]
  %s3 = inlined_call_operand.vmem [shape: bf16[104,128], index: 3, kind: output, shape index: {}]
  %s4 = sld [smem:[#allocation0]]
  $region22: #{domain_resnet_forward.9} parent=0
    _
  %s6 = ssub.s32 1, %s4
  %s7 = scalar_select 0, %s6, %s4
  // Predicated region
  $region2: #{domain_resnet_forward.9} parent=0 // pred_check
    _
  $region3: #{domain_resnet_forward.9} parent=0 // pred_check_branch
    %9 = sbr.rel (0) target = $region5
  $region4: #{domain_resnet_forward.9} parent=0 // pred_region
    _
  $region5: #{domain_resnet_forward.9} parent=0 // pred_fallthru
    _
  // Predicated region
  $region6: #{domain_resnet_forward.9} parent=0 // pred_check
    _
  $region7: #{domain_resnet_forward.9} parent=0 // pred_check_branch
    %11 = sbr.rel (0) target = $region9
  $region8: #{domain_resnet_forward.9} parent=0 // pred_region
    _
  $region9: #{domain_resnet_forward.9} parent=0 // pred_fallthru
    _
  // Predicated region
  $region10: #{domain_resnet_forward.9} parent=0 // pred_check
    _
  $region11: #{domain_resnet_forward.9} parent=0 // pred_check_branch
    %13 = sbr.rel (0) target = $region13
  $region12: #{domain_resnet_forward.9} parent=0 // pred_region
    _
  $region13: #{domain_resnet_forward.9} parent=0 // pred_fallthru
    _
  %v15 = vld [vmem:[%s0] sm:$0xff]
  %v16 = vld [vmem:[%s0 + $0x8] sm:$0xff]
  %v17 = vld [vmem:[%s0 + $0x10] sm:$0xf]
  %v18 = vld [vmem:[%s0 + $0x14] sm:$0xff]
  %v19 = vld [vmem:[%s0 + $0x1c] sm:$0xff]
  %v20 = vld [vmem:[%s0 + $0x24] sm:$0xf]
  %v21 = vld [vmem:[%s0 + $0x28] sm:$0xff]
  %v22 = vld [vmem:[%s0 + $0x30] sm:$0xff]
  %v23 = vld [vmem:[%s0 + $0x38] sm:$0xf]
  %v24 = vld [vmem:[%s0 + $0x3c] sm:$0xff]
  %v25 = vld [vmem:[%s0 + $0x44] sm:$0xff]
  %v26 = vld [vmem:[%s0 + $0x4c] sm:$0xf]
  %v27 = vld [vmem:[%s0 + $0x50] sm:$0xff]
  %v28 = vld [vmem:[%s0 + $0x58] sm:$0xff]
  %v29 = vld [vmem:[%s0 + $0x60] sm:$0xf]
  %v30 = vld [vmem:[%s0 + $0x64] sm:$0xff]
  %v31 = vld [vmem:[%s0 + $0x6c] sm:$0xff]
  %v32 = vld [vmem:[%s0 + $0x74] sm:$0xf]
  %v33 = vld [vmem:[%s0 + $0x78] sm:$0xff]
  %v34 = vld [vmem:[%s0 + $0x80] sm:$0xff]
  %v35 = vld [vmem:[%s0 + $0x88] sm:$0xf]
  %v36 = vld [vmem:[%s0 + $0x8c] sm:$0xff]
  %v37 = vld [vmem:[%s0 + $0x94] sm:$0xff]
  %v38 = vld [vmem:[%s0 + $0x9c] sm:$0xf]
  %v39 = vld [vmem:[%s0 + $0xa0] sm:$0xff]
  %v40 = vld [vmem:[%s0 + $0xa8] sm:$0xff]
  %v41 = vld [vmem:[%s0 + $0xb0] sm:$0xf]
  %v42 = vld [vmem:[%s0 + $0xb4] sm:$0xff]
  %v43 = vld [vmem:[%s0 + $0xbc] sm:$0xff]
  %v44 = vld [vmem:[%s0 + $0xc4] sm:$0xf]
  %v45 = vld [vmem:[%s0 + $0xc8] sm:$0xff]
  %v46 = vld [vmem:[%s0 + $0xd0] sm:$0xff]
  %v47 = vld [vmem:[%s0 + $0xd8] sm:$0xf]
  %v48 = vld [vmem:[%s0 + $0xdc] sm:$0xff]
  %v49 = vld [vmem:[%s0 + $0xe4] sm:$0xff]
  %v50 = vld [vmem:[%s0 + $0xec] sm:$0xf]
  %v51 = vld [vmem:[%s0 + $0xf0] sm:$0xff]
  %v52 = vld [vmem:[%s0 + $0xf8] sm:$0xff]
  %v53 = vld [vmem:[%s0 + $0x100] sm:$0xf]
  %v54 = vld [vmem:[%s1] sm:$0xf]
  %v55 = vld [vmem:[%s1 + $0x4] sm:$0xf]
  %v56 = vld [vmem:[%s1 + $0x8] sm:$0xf]
  %v57 = vld [vmem:[%s1 + $0xc] sm:$0xf]
  %v58 = vld [vmem:[%s1 + $0x10] sm:$0xf]
  %v59 = vld [vmem:[%s1 + $0x14] sm:$0xf]
  %v60 = vld [vmem:[%s1 + $0x18] sm:$0xf]
  %v61 = vld [vmem:[%s1 + $0x1c] sm:$0xf]
  %v62 = vld [vmem:[%s1 + $0x20] sm:$0xf]
  %v63 = vld [vmem:[%s1 + $0x24] sm:$0xf]
  %v64 = vld [vmem:[%s1 + $0x28] sm:$0xf]
  %v65 = vld [vmem:[%s1 + $0x2c] sm:$0xf]
  %v66 = vld [vmem:[%s1 + $0x30] sm:$0xf]
  %v67 = vld [vmem:[%s1 + $0x34] sm:$0xf]
  %v68 = vld [vmem:[%s1 + $0x38] sm:$0xf]
  %v69 = vld [vmem:[%s1 + $0x3c] sm:$0xf]
  %v70 = vld [vmem:[%s1 + $0x40] sm:$0xf]
  %v71 = vld [vmem:[%s1 + $0x44] sm:$0xf]
  %v72 = vld [vmem:[%s1 + $0x48] sm:$0xf]
  %v73 = vld [vmem:[%s1 + $0x4c] sm:$0xf]
  %v74 = vld [vmem:[%s1 + $0x50] sm:$0xf]
  %v75 = vld [vmem:[%s1 + $0x54] sm:$0xf]
  %v76 = vld [vmem:[%s1 + $0x58] sm:$0xf]
  %v77 = vld [vmem:[%s1 + $0x5c] sm:$0xf]
  %v78 = vld [vmem:[%s1 + $0x60] sm:$0xf]
  %v79 = vld [vmem:[%s1 + $0x64] sm:$0xf]
  %v80 = vld [vmem:[%s1 + $0x68] sm:$0xf]
  %v81 = vld [vmem:[%s1 + $0x6c] sm:$0xf]
  %v82 = vld [vmem:[%s1 + $0x70] sm:$0xf]
  %v83 = vld [vmem:[%s1 + $0x74] sm:$0xf]
  %v84 = vld [vmem:[%s1 + $0x78] sm:$0xf]
  %v85 = vld [vmem:[%s1 + $0x7c] sm:$0xf]
  %v86 = vld [vmem:[%s1 + $0x80] sm:$0xf]
  %v87 = vld [vmem:[%s1 + $0x84] sm:$0xf]
  %v88 = vld [vmem:[%s1 + $0x88] sm:$0xf]
  %v89 = vld [vmem:[%s1 + $0x8c] sm:$0xf]
  %v90 = vld [vmem:[%s1 + $0x90] sm:$0xf]
  %v91 = vld [vmem:[%s1 + $0x94] sm:$0xf]
  %v92 = vld [vmem:[%s1 + $0x98] sm:$0xf]
  %v93 = vld [vmem:[%s1 + $0x9c] sm:$0xf]
  %v94 = vld [vmem:[%s1 + $0xa0] sm:$0xf]
  %v95 = vld [vmem:[%s1 + $0xa4] sm:$0xf]
  %v96 = vld [vmem:[%s1 + $0xa8] sm:$0xf]
  %v97 = vld [vmem:[%s1 + $0xac] sm:$0xf]
  %v98 = vld [vmem:[%s1 + $0xb0] sm:$0xf]
  %v99 = vld [vmem:[%s1 + $0xb4] sm:$0xf]
  %v100 = vld [vmem:[%s1 + $0xb8] sm:$0xf]
  %v101 = vld [vmem:[%s1 + $0xbc] sm:$0xf]
  %v102 = vld [vmem:[%s1 + $0xc0] sm:$0xf]
  %v103 = vld [vmem:[%s1 + $0xc4] sm:$0xf]
  %v104 = vld [vmem:[%s1 + $0xc8] sm:$0xf]
  %v105 = vld [vmem:[%s1 + $0xcc] sm:$0xf]
  %v106 = vld [vmem:[%s1 + $0xd0] sm:$0xf]
  %v107 = vld [vmem:[%s1 + $0xd4] sm:$0xf]
  %v108 = vld [vmem:[%s1 + $0xd8] sm:$0xf]
  %v109 = vld [vmem:[%s1 + $0xdc] sm:$0xf]
  %v110 = vld [vmem:[%s1 + $0xe0] sm:$0xf]
  %v111 = vld [vmem:[%s1 + $0xe4] sm:$0xf]
  %v112 = vld [vmem:[%s1 + $0xe8] sm:$0xf]
  %v113 = vld [vmem:[%s1 + $0xec] sm:$0xf]
  %v114 = vld [vmem:[%s1 + $0xf0] sm:$0xf]
  %v115 = vld [vmem:[%s1 + $0xf4] sm:$0xf]
  %v116 = vld [vmem:[%s1 + $0xf8] sm:$0xf]
  %v117 = vld [vmem:[%s1 + $0xfc] sm:$0xf]
  %v118 = vld [vmem:[%s1 + $0x100] sm:$0xf]
  %v119 = vld [vmem:[%s1 + $0x104] sm:$0xf]
  %v120 = vld [vmem:[%s1 + $0x108] sm:$0xf]
  %v121 = vld [vmem:[%s1 + $0x10c] sm:$0xf]
  %v122 = vld [vmem:[%s1 + $0x110] sm:$0xf]
  %v123 = vld [vmem:[%s1 + $0x114] sm:$0xf]
  %v124 = vld [vmem:[%s1 + $0x118] sm:$0xf]
  %v125 = vld [vmem:[%s1 + $0x11c] sm:$0xf]
  %v126 = vld [vmem:[%s2] sm:$0x1]
  %v128 = vperm.slane %v126, 0
  %v169 = vunpack.c.l.b16 %v15
  %v170 = vunpack.c.h.b16 %v15
  %v171 = vunpack.c.l.b16 %v16
  %v172 = vunpack.c.h.b16 %v16
  %v173 = vunpack.c.l.b16 %v17
  %v174 = vunpack.c.l.b16 %v18
  %v175 = vunpack.c.h.b16 %v18
  %v176 = vunpack.c.l.b16 %v19
  %v177 = vunpack.c.h.b16 %v19
  %v178 = vunpack.c.l.b16 %v20
  %v179 = vunpack.c.l.b16 %v21
  %v180 = vunpack.c.h.b16 %v21
  %v181 = vunpack.c.l.b16 %v22
  %v182 = vunpack.c.h.b16 %v22
  %v183 = vunpack.c.l.b16 %v23
  %v184 = vunpack.c.l.b16 %v24
  %v185 = vunpack.c.h.b16 %v24
  %v186 = vunpack.c.l.b16 %v25
  %v187 = vunpack.c.h.b16 %v25
  %v188 = vunpack.c.l.b16 %v26
  %v189 = vunpack.c.l.b16 %v27
  %v190 = vunpack.c.h.b16 %v27
  %v191 = vunpack.c.l.b16 %v28
  %v192 = vunpack.c.h.b16 %v28
  %v193 = vunpack.c.l.b16 %v29
  %v194 = vunpack.c.l.b16 %v30
  %v195 = vunpack.c.h.b16 %v30
  %v196 = vunpack.c.l.b16 %v31
  %v197 = vunpack.c.h.b16 %v31
  %v198 = vunpack.c.l.b16 %v32
  %v199 = vunpack.c.l.b16 %v33
  %v200 = vunpack.c.h.b16 %v33
  %v201 = vunpack.c.l.b16 %v34
  %v202 = vunpack.c.h.b16 %v34
  %v203 = vunpack.c.l.b16 %v35
  %v204 = vunpack.c.l.b16 %v36
  %v205 = vunpack.c.h.b16 %v36
  %v206 = vunpack.c.l.b16 %v37
  %v207 = vunpack.c.h.b16 %v37
  %v208 = vunpack.c.l.b16 %v38
  %v209 = vunpack.c.l.b16 %v39
  %v210 = vunpack.c.h.b16 %v39
  %v211 = vunpack.c.l.b16 %v40
  %v212 = vunpack.c.h.b16 %v40
  %v213 = vunpack.c.l.b16 %v41
  %v214 = vunpack.c.l.b16 %v42
  %v215 = vunpack.c.h.b16 %v42
  %v216 = vunpack.c.l.b16 %v43
  %v217 = vunpack.c.h.b16 %v43
  %v218 = vunpack.c.l.b16 %v44
  %v219 = vunpack.c.l.b16 %v45
  %v220 = vunpack.c.h.b16 %v45
  %v221 = vunpack.c.l.b16 %v46
  %v222 = vunpack.c.h.b16 %v46
  %v223 = vunpack.c.l.b16 %v47
  %v224 = vunpack.c.l.b16 %v48
  %v225 = vunpack.c.h.b16 %v48
  %v226 = vunpack.c.l.b16 %v49
  %v227 = vunpack.c.h.b16 %v49
  %v228 = vunpack.c.l.b16 %v50
  %v229 = vunpack.c.l.b16 %v51
  %v230 = vunpack.c.h.b16 %v51
  %v231 = vunpack.c.l.b16 %v52
  %v232 = vunpack.c.h.b16 %v52
  %v233 = vunpack.c.l.b16 %v53
  %v234 = vpack.c.b16 %v174, %v169
  %v235 = vpack.c.b16 %v175, %v170
  %v236 = vpack.c.b16 %v176, %v171
  %v237 = vpack.c.b16 %v177, %v172
  %v238 = vpack.c.b16 %v178, %v173
  %v239 = vpack.c.b16 %v184, %v179
  %v240 = vpack.c.b16 %v185, %v180
  %v241 = vpack.c.b16 %v186, %v181
  %v242 = vpack.c.b16 %v187, %v182
  %v243 = vpack.c.b16 %v188, %v183
  %v244 = vpack.c.b16 %v194, %v189
  %v245 = vpack.c.b16 %v195, %v190
  %v246 = vpack.c.b16 %v196, %v191
  %v247 = vpack.c.b16 %v197, %v192
  %v248 = vpack.c.b16 %v198, %v193
  %v249 = vpack.c.b16 %v204, %v199
  %v250 = vpack.c.b16 %v205, %v200
  %v251 = vpack.c.b16 %v206, %v201
  %v252 = vpack.c.b16 %v207, %v202
  %v253 = vpack.c.b16 %v208, %v203
  %v254 = vpack.c.b16 %v214, %v209
  %v255 = vpack.c.b16 %v215, %v210
  %v256 = vpack.c.b16 %v216, %v211
  %v257 = vpack.c.b16 %v217, %v212
  %v258 = vpack.c.b16 %v218, %v213
  %v259 = vpack.c.b16 %v224, %v219
  %v260 = vpack.c.b16 %v225, %v220
  %v261 = vpack.c.b16 %v226, %v221
  %v262 = vpack.c.b16 %v227, %v222
  %v263 = vpack.c.b16 %v228, %v223
  %v264 = vpack.c.b16 %v229, %v229
  %v265 = vpack.c.b16 %v230, %v230
  %v266 = vpack.c.b16 %v231, %v231
  %v267 = vpack.c.b16 %v232, %v232
  %v268 = vpack.c.b16 %v233, %v233
  %v369 = vunpack.c.l.b16 %v54
  %v370 = vunpack.c.l.b16 %v55
  %v371 = vunpack.c.l.b16 %v56
  %v372 = vunpack.c.l.b16 %v57
  %v373 = vunpack.c.l.b16 %v58
  %v374 = vunpack.c.l.b16 %v59
  %v375 = vunpack.c.l.b16 %v60
  %v376 = vunpack.c.l.b16 %v61
  %v377 = vunpack.c.l.b16 %v62
  %v378 = vunpack.c.l.b16 %v63
  %v379 = vunpack.c.l.b16 %v64
  %v380 = vunpack.c.l.b16 %v65
  %v381 = vunpack.c.l.b16 %v66
  %v382 = vunpack.c.l.b16 %v67
  %v383 = vunpack.c.l.b16 %v68
  %v384 = vunpack.c.l.b16 %v69
  %v385 = vunpack.c.l.b16 %v70
  %v386 = vunpack.c.l.b16 %v71
  %v387 = vunpack.c.l.b16 %v72
  %v388 = vunpack.c.l.b16 %v73
  %v389 = vunpack.c.l.b16 %v74
  %v390 = vunpack.c.l.b16 %v75
  %v391 = vunpack.c.l.b16 %v76
  %v392 = vunpack.c.l.b16 %v77
  %v393 = vunpack.c.l.b16 %v78
  %v394 = vunpack.c.l.b16 %v79
  %v395 = vunpack.c.l.b16 %v80
  %v396 = vunpack.c.l.b16 %v81
  %v397 = vunpack.c.l.b16 %v82
  %v398 = vunpack.c.l.b16 %v83
  %v399 = vunpack.c.l.b16 %v84
  %v400 = vunpack.c.l.b16 %v85
  %v401 = vunpack.c.l.b16 %v86
  %v402 = vunpack.c.l.b16 %v87
  %v403 = vunpack.c.l.b16 %v88
  %v404 = vunpack.c.l.b16 %v89
  %v405 = vunpack.c.l.b16 %v90
  %v406 = vunpack.c.l.b16 %v91
  %v407 = vunpack.c.l.b16 %v92
  %v408 = vunpack.c.l.b16 %v93
  %v409 = vunpack.c.l.b16 %v94
  %v410 = vunpack.c.l.b16 %v95
  %v411 = vunpack.c.l.b16 %v96
  %v412 = vunpack.c.l.b16 %v97
  %v413 = vunpack.c.l.b16 %v98
  %v414 = vunpack.c.l.b16 %v99
  %v415 = vunpack.c.l.b16 %v100
  %v416 = vunpack.c.l.b16 %v101
  %v417 = vunpack.c.l.b16 %v102
  %v418 = vunpack.c.l.b16 %v103
  %v419 = vunpack.c.l.b16 %v104
  %v420 = vunpack.c.l.b16 %v105
  %v421 = vunpack.c.l.b16 %v106
  %v422 = vunpack.c.l.b16 %v107
  %v423 = vunpack.c.l.b16 %v108
  %v424 = vunpack.c.l.b16 %v109
  %v425 = vunpack.c.l.b16 %v110
  %v426 = vunpack.c.l.b16 %v111
  %v427 = vunpack.c.l.b16 %v112
  %v428 = vunpack.c.l.b16 %v113
  %v429 = vunpack.c.l.b16 %v114
  %v430 = vunpack.c.l.b16 %v115
  %v431 = vunpack.c.l.b16 %v116
  %v432 = vunpack.c.l.b16 %v117
  %v433 = vunpack.c.l.b16 %v118
  %v434 = vunpack.c.l.b16 %v119
  %v435 = vunpack.c.l.b16 %v120
  %v436 = vunpack.c.l.b16 %v121
  %v437 = vunpack.c.l.b16 %v122
  %v438 = vunpack.c.l.b16 %v123
  %v439 = vunpack.c.l.b16 %v124
  %v440 = vunpack.c.l.b16 %v125
  %v441 = vpack.c.b16 %v370, %v369
  %v442 = vpack.c.b16 %v372, %v371
  %v443 = vpack.c.b16 %v374, %v373
  %v444 = vpack.c.b16 %v376, %v375
  %v445 = vpack.c.b16 %v378, %v377
  %v446 = vpack.c.b16 %v380, %v379
  %v447 = vpack.c.b16 %v382, %v381
  %v448 = vpack.c.b16 %v384, %v383
  %v449 = vpack.c.b16 %v386, %v385
  %v450 = vpack.c.b16 %v388, %v387
  %v451 = vpack.c.b16 %v390, %v389
  %v452 = vpack.c.b16 %v392, %v391
  %v453 = vpack.c.b16 %v394, %v393
  %v454 = vpack.c.b16 %v396, %v395
  %v455 = vpack.c.b16 %v398, %v397
  %v456 = vpack.c.b16 %v400, %v399
  %v457 = vpack.c.b16 %v402, %v401
  %v458 = vpack.c.b16 %v404, %v403
  %v459 = vpack.c.b16 %v406, %v405
  %v460 = vpack.c.b16 %v408, %v407
  %v461 = vpack.c.b16 %v410, %v409
  %v462 = vpack.c.b16 %v412, %v411
  %v463 = vpack.c.b16 %v414, %v413
  %v464 = vpack.c.b16 %v416, %v415
  %v465 = vpack.c.b16 %v418, %v417
  %v466 = vpack.c.b16 %v420, %v419
  %v467 = vpack.c.b16 %v422, %v421
  %v468 = vpack.c.b16 %v424, %v423
  %v469 = vpack.c.b16 %v426, %v425
  %v470 = vpack.c.b16 %v428, %v427
  %v471 = vpack.c.b16 %v430, %v429
  %v472 = vpack.c.b16 %v432, %v431
  %v473 = vpack.c.b16 %v434, %v433
  %v474 = vpack.c.b16 %v436, %v435
  %v475 = vpack.c.b16 %v438, %v437
  %v476 = vpack.c.b16 %v440, %v439
  %vm513 = vcmask 523264
  %v515 = vsel %vm513, %v238, 0
  %v518 = vsel %vm513, %v243, 0
  %v521 = vsel %vm513, %v248, 0
  %v524 = vsel %vm513, %v253, 0
  %v527 = vsel %vm513, %v258, 0
  %v530 = vsel %vm513, %v263, 0
  %v533 = vsel %vm513, %v268, 0
  %535 = vmatpush.bf16.msra.mxu0 %v448
  %536 = vmatpush.bf16.msra.mxu0 %v447
  %537 = vmatpush.bf16.msra.mxu0 %v446
  %538 = vmatpush.bf16.msra.mxu0 %v445
  %539 = vmatpush.bf16.msra.mxu0 %v444
  %540 = vmatpush.bf16.msra.mxu0 %v443
  %541 = vmatpush.bf16.msra.mxu0 %v442
  %542 = vmatpush.bf16.msra.mxu0 %v441
  %543 = vmatmul.bf16.gmra.mxu0 %v234
  %v544 = vpop.f32.mrf.mxu0
  %v545 = vadd.f32 %v128, %v544
  %v546 = vpop.f32.mrf.mxu0
  %v547 = vadd.f32 %v128, %v546
  %548 = vmatmul.bf16.gmra.mxu0 %v239
  %v549 = vpop.f32.mrf.mxu0
  %v550 = vadd.f32 %v128, %v549
  %v551 = vpop.f32.mrf.mxu0
  %v552 = vadd.f32 %v128, %v551
  %553 = vmatmul.bf16.gmra.mxu0 %v244
  %v554 = vpop.f32.mrf.mxu0
  %v555 = vadd.f32 %v128, %v554
  %v556 = vpop.f32.mrf.mxu0
  %v557 = vadd.f32 %v128, %v556
  %558 = vmatmul.bf16.gmra.mxu0 %v249
  %v559 = vpop.f32.mrf.mxu0
  %v560 = vadd.f32 %v128, %v559
  %v561 = vpop.f32.mrf.mxu0
  %v562 = vadd.f32 %v128, %v561
  %563 = vmatmul.bf16.gmra.mxu0 %v254
  %v564 = vpop.f32.mrf.mxu0
  %v565 = vadd.f32 %v128, %v564
  %v566 = vpop.f32.mrf.mxu0
  %v567 = vadd.f32 %v128, %v566
  %568 = vmatmul.bf16.gmra.mxu0 %v259
  %v569 = vpop.f32.mrf.mxu0
  %v570 = vadd.f32 %v128, %v569
  %v571 = vpop.f32.mrf.mxu0
  %v572 = vadd.f32 %v128, %v571
  %573 = vmatmul.bf16.gmra.mxu0 %v264
  %v574 = vpop.f32.mrf.mxu0
  %v575 = vadd.f32 %v128, %v574
  %v576 = vpop.f32.mrf.mxu0
  %577 = vdwg.mxu0
  %578 = vmatpush.bf16.msra.mxu0 %v456
  %579 = vmatpush.bf16.msra.mxu0 %v455
  %580 = vmatpush.bf16.msra.mxu0 %v454
  %581 = vmatpush.bf16.msra.mxu0 %v453
  %582 = vmatpush.bf16.msra.mxu0 %v452
  %583 = vmatpush.bf16.msra.mxu0 %v451
  %584 = vmatpush.bf16.msra.mxu0 %v450
  %585 = vmatpush.bf16.msra.mxu0 %v449
  %586 = vmatmul.bf16.gmra.mxu0 %v235
  %v587 = vpop.f32.mrf.mxu0
  %v588 = vadd.f32 %v545, %v587
  %v589 = vpop.f32.mrf.mxu0
  %v590 = vadd.f32 %v547, %v589
  %591 = vmatmul.bf16.gmra.mxu0 %v240
  %v592 = vpop.f32.mrf.mxu0
  %v593 = vadd.f32 %v550, %v592
  %v594 = vpop.f32.mrf.mxu0
  %v595 = vadd.f32 %v552, %v594
  %596 = vmatmul.bf16.gmra.mxu0 %v245
  %v597 = vpop.f32.mrf.mxu0
  %v598 = vadd.f32 %v555, %v597
  %v599 = vpop.f32.mrf.mxu0
  %v600 = vadd.f32 %v557, %v599
  %601 = vmatmul.bf16.gmra.mxu0 %v250
  %v602 = vpop.f32.mrf.mxu0
  %v603 = vadd.f32 %v560, %v602
  %v604 = vpop.f32.mrf.mxu0
  %v605 = vadd.f32 %v562, %v604
  %606 = vmatmul.bf16.gmra.mxu0 %v255
  %v607 = vpop.f32.mrf.mxu0
  %v608 = vadd.f32 %v565, %v607
  %v609 = vpop.f32.mrf.mxu0
  %v610 = vadd.f32 %v567, %v609
  %611 = vmatmul.bf16.gmra.mxu0 %v260
  %v612 = vpop.f32.mrf.mxu0
  %v613 = vadd.f32 %v570, %v612
  %v614 = vpop.f32.mrf.mxu0
  %v615 = vadd.f32 %v572, %v614
  %616 = vmatmul.bf16.gmra.mxu0 %v265
  %v617 = vpop.f32.mrf.mxu0
  %v618 = vadd.f32 %v575, %v617
  %v619 = vpop.f32.mrf.mxu0
  %620 = vdwg.mxu0
  %621 = vmatpush.bf16.msra.mxu0 %v464
  %622 = vmatpush.bf16.msra.mxu0 %v463
  %623 = vmatpush.bf16.msra.mxu0 %v462
  %624 = vmatpush.bf16.msra.mxu0 %v461
  %625 = vmatpush.bf16.msra.mxu0 %v460
  %626 = vmatpush.bf16.msra.mxu0 %v459
  %627 = vmatpush.bf16.msra.mxu0 %v458
  %628 = vmatpush.bf16.msra.mxu0 %v457
  %629 = vmatmul.bf16.gmra.mxu0 %v236
  %v630 = vpop.f32.mrf.mxu0
  %v631 = vadd.f32 %v588, %v630
  %v632 = vpop.f32.mrf.mxu0
  %v633 = vadd.f32 %v590, %v632
  %634 = vmatmul.bf16.gmra.mxu0 %v241
  %v635 = vpop.f32.mrf.mxu0
  %v636 = vadd.f32 %v593, %v635
  %v637 = vpop.f32.mrf.mxu0
  %v638 = vadd.f32 %v595, %v637
  %639 = vmatmul.bf16.gmra.mxu0 %v246
  %v640 = vpop.f32.mrf.mxu0
  %v641 = vadd.f32 %v598, %v640
  %v642 = vpop.f32.mrf.mxu0
  %v643 = vadd.f32 %v600, %v642
  %644 = vmatmul.bf16.gmra.mxu0 %v251
  %v645 = vpop.f32.mrf.mxu0
  %v646 = vadd.f32 %v603, %v645
  %v647 = vpop.f32.mrf.mxu0
  %v648 = vadd.f32 %v605, %v647
  %649 = vmatmul.bf16.gmra.mxu0 %v256
  %v650 = vpop.f32.mrf.mxu0
  %v651 = vadd.f32 %v608, %v650
  %v652 = vpop.f32.mrf.mxu0
  %v653 = vadd.f32 %v610, %v652
  %654 = vmatmul.bf16.gmra.mxu0 %v261
  %v655 = vpop.f32.mrf.mxu0
  %v656 = vadd.f32 %v613, %v655
  %v657 = vpop.f32.mrf.mxu0
  %v658 = vadd.f32 %v615, %v657
  %659 = vmatmul.bf16.gmra.mxu0 %v266
  %v660 = vpop.f32.mrf.mxu0
  %v661 = vadd.f32 %v618, %v660
  %v662 = vpop.f32.mrf.mxu0
  %663 = vdwg.mxu0
  %664 = vmatpush.bf16.msra.mxu0 %v472
  %665 = vmatpush.bf16.msra.mxu0 %v471
  %666 = vmatpush.bf16.msra.mxu0 %v470
  %667 = vmatpush.bf16.msra.mxu0 %v469
  %668 = vmatpush.bf16.msra.mxu0 %v468
  %669 = vmatpush.bf16.msra.mxu0 %v467
  %670 = vmatpush.bf16.msra.mxu0 %v466
  %671 = vmatpush.bf16.msra.mxu0 %v465
  %672 = vmatmul.bf16.gmra.mxu0 %v237
  %v673 = vpop.f32.mrf.mxu0
  %v674 = vadd.f32 %v631, %v673
  %v675 = vpop.f32.mrf.mxu0
  %v676 = vadd.f32 %v633, %v675
  %677 = vmatmul.bf16.gmra.mxu0 %v242
  %v678 = vpop.f32.mrf.mxu0
  %v679 = vadd.f32 %v636, %v678
  %v680 = vpop.f32.mrf.mxu0
  %v681 = vadd.f32 %v638, %v680
  %682 = vmatmul.bf16.gmra.mxu0 %v247
  %v683 = vpop.f32.mrf.mxu0
  %v684 = vadd.f32 %v641, %v683
  %v685 = vpop.f32.mrf.mxu0
  %v686 = vadd.f32 %v643, %v685
  %687 = vmatmul.bf16.gmra.mxu0 %v252
  %v688 = vpop.f32.mrf.mxu0
  %v689 = vadd.f32 %v646, %v688
  %v690 = vpop.f32.mrf.mxu0
  %v691 = vadd.f32 %v648, %v690
  %692 = vmatmul.bf16.gmra.mxu0 %v257
  %v693 = vpop.f32.mrf.mxu0
  %v694 = vadd.f32 %v651, %v693
  %v695 = vpop.f32.mrf.mxu0
  %v696 = vadd.f32 %v653, %v695
  %697 = vmatmul.bf16.gmra.mxu0 %v262
  %v698 = vpop.f32.mrf.mxu0
  %v699 = vadd.f32 %v656, %v698
  %v700 = vpop.f32.mrf.mxu0
  %v701 = vadd.f32 %v658, %v700
  %702 = vmatmul.bf16.gmra.mxu0 %v267
  %v703 = vpop.f32.mrf.mxu0
  %v704 = vadd.f32 %v661, %v703
  %v705 = vpop.f32.mrf.mxu0
  %706 = vdwg.mxu0
  %707 = vmatpush.bf16.msra.mxu0 0
  %708 = vmatpush.bf16.msra.mxu0 0
  %709 = vmatpush.bf16.msra.mxu0 0
  %710 = vmatpush.bf16.msra.mxu0 0
  %711 = vmatpush.bf16.msra.mxu0 %v476
  %712 = vmatpush.bf16.msra.mxu0 %v475
  %713 = vmatpush.bf16.msra.mxu0 %v474
  %714 = vmatpush.bf16.msra.mxu0 %v473
  %715 = vmatmul.bf16.gmra.mxu0 %v515
  %v716 = vpop.f32.mrf.mxu0
  %v717 = vadd.f32 %v674, %v716
  %v718 = vpop.f32.mrf.mxu0
  %v719 = vadd.f32 %v676, %v718
  %720 = vmatmul.bf16.gmra.mxu0 %v518
  %v721 = vpop.f32.mrf.mxu0
  %v722 = vadd.f32 %v679, %v721
  %v723 = vpop.f32.mrf.mxu0
  %v724 = vadd.f32 %v681, %v723
  %725 = vmatmul.bf16.gmra.mxu0 %v521
  %v726 = vpop.f32.mrf.mxu0
  %v727 = vadd.f32 %v684, %v726
  %v728 = vpop.f32.mrf.mxu0
  %v729 = vadd.f32 %v686, %v728
  %730 = vmatmul.bf16.gmra.mxu0 %v524
  %v731 = vpop.f32.mrf.mxu0
  %v732 = vadd.f32 %v689, %v731
  %v733 = vpop.f32.mrf.mxu0
  %v734 = vadd.f32 %v691, %v733
  %735 = vmatmul.bf16.gmra.mxu0 %v527
  %v736 = vpop.f32.mrf.mxu0
  %v737 = vadd.f32 %v694, %v736
  %v738 = vpop.f32.mrf.mxu0
  %v739 = vadd.f32 %v696, %v738
  %740 = vmatmul.bf16.gmra.mxu0 %v530
  %v741 = vpop.f32.mrf.mxu0
  %v742 = vadd.f32 %v699, %v741
  %v743 = vpop.f32.mrf.mxu0
  %v744 = vadd.f32 %v701, %v743
  %745 = vmatmul.bf16.gmra.mxu0 %v533
  %v746 = vpop.f32.mrf.mxu0
  %v747 = vadd.f32 %v704, %v746
  %v748 = vpop.f32.mrf.mxu0
  %749 = vdwg.mxu0
  %v750 = vmax.f32 %v717, 0.0
  %v751 = vmax.f32 %v719, 0.0
  %v752 = vmax.f32 %v722, 0.0
  %v753 = vmax.f32 %v724, 0.0
  %v754 = vmax.f32 %v727, 0.0
  %v755 = vmax.f32 %v729, 0.0
  %v756 = vmax.f32 %v732, 0.0
  %v757 = vmax.f32 %v734, 0.0
  %v758 = vmax.f32 %v737, 0.0
  %v759 = vmax.f32 %v739, 0.0
  %v760 = vmax.f32 %v742, 0.0
  %v761 = vmax.f32 %v744, 0.0
  %v762 = vmax.f32 %v747, 0.0
  %v763 = vpack.c.bf16 %v750, %v750
  %v764 = vpack.c.bf16 %v751, %v751
  %v765 = vpack.c.bf16 %v752, %v752
  %v766 = vpack.c.bf16 %v753, %v753
  %v767 = vpack.c.bf16 %v754, %v754
  %v768 = vpack.c.bf16 %v755, %v755
  %v769 = vpack.c.bf16 %v756, %v756
  %v770 = vpack.c.bf16 %v757, %v757
  %v771 = vpack.c.bf16 %v758, %v758
  %v772 = vpack.c.bf16 %v759, %v759
  %v773 = vpack.c.bf16 %v760, %v760
  %v774 = vpack.c.bf16 %v761, %v761
  %v775 = vpack.c.bf16 %v762, %v762
  %776 = vst [vmem:[%s3] sm:$0xf] %v763
  %777 = vst [vmem:[%s3 + $0x4] sm:$0xf] %v764
  %778 = vst [vmem:[%s3 + $0x8] sm:$0xf] %v765
  %779 = vst [vmem:[%s3 + $0xc] sm:$0xf] %v766
  %780 = vst [vmem:[%s3 + $0x10] sm:$0xf] %v767
  %781 = vst [vmem:[%s3 + $0x14] sm:$0xf] %v768
  %782 = vst [vmem:[%s3 + $0x18] sm:$0xf] %v769
  %783 = vst [vmem:[%s3 + $0x1c] sm:$0xf] %v770
  %784 = vst [vmem:[%s3 + $0x20] sm:$0xf] %v771
  %785 = vst [vmem:[%s3 + $0x24] sm:$0xf] %v772
  %786 = vst [vmem:[%s3 + $0x28] sm:$0xf] %v773
  %787 = vst [vmem:[%s3 + $0x2c] sm:$0xf] %v774
  %788 = vst [vmem:[%s3 + $0x30] sm:$0xf] %v775
  // Predicated region
  $region14: #{domain_resnet_forward.9} parent=0 // pred_check
    _
  $region15: #{domain_resnet_forward.9} parent=0 // pred_check_branch
    %790 = sbr.rel (0) target = $region17
  $region16: #{domain_resnet_forward.9} parent=0 // pred_region
    _
  $region17: #{domain_resnet_forward.9} parent=0 // pred_fallthru
    _
  // Predicated region
  $region18: #{domain_resnet_forward.9} parent=0 // pred_check
    _
  $region19: #{domain_resnet_forward.9} parent=0 // pred_check_branch
    %792 = sbr.rel (0) target = $region21
  $region20: #{domain_resnet_forward.9} parent=0 // pred_region
    _
  $region21: #{domain_resnet_forward.9} parent=0 // pred_fallthru
    _

// kernel: domain_resnet_forward.11
$region0: #{domain_resnet_forward.11}
  #allocation0 [shape = 'u32[]', space=smem, size = 0x4, offset = 0x4, fixed_abs, tag = 'smem constant byte address 0x4 - core index']
  #allocation1 [shape = 'u32[72,128]{1,0:T(1,128)}', space=vmem, size = 0x9000, scoped, tag = 'internal scratch']
  %s0 = inlined_call_operand.vmem [shape: bf16[2,49,128], index: 0, kind: input, shape index: {}]
  %s1 = inlined_call_operand.vmem [shape: f32[128,10], index: 1, kind: input, shape index: {}]
  %s2 = inlined_call_operand.vmem [shape: f32[1,10], index: 2, kind: input, shape index: {}]
  %s3 = inlined_call_operand.hbm [shape: f32[2,10], index: 3, kind: output, shape index: {}]
  %s4 = sld [smem:[#allocation0]]
  $region22: #{domain_resnet_forward.11} parent=0
    _
  %s6 = ssub.s32 1, %s4
  %s7 = scalar_select 0, %s6, %s4
  $region1: #{domain_resnet_forward.11} parent=0
    #allocation2 [shape = 'u8[1024]{0}', space=vmem, size = 0x400, scoped, tag = 'output window, operand 0, single buffered']
    #allocation3 [shape = 's32[1]{0}', space=sflag, size = 0x4, scoped, tag = 'scoped memory for domain_resnet_forward.11']
    %8 = vsyncpa [#allocation3], 0
    // Predicated region
    $region2: #{domain_resnet_forward.11} parent=1 // pred_check
      _
    $region3: #{domain_resnet_forward.11} parent=1 // pred_check_branch
      %10 = sbr.rel (0) target = $region5
    $region4: #{domain_resnet_forward.11} parent=1 // pred_region
      _
    $region5: #{domain_resnet_forward.11} parent=1 // pred_fallthru
      _
    // Predicated region
    $region6: #{domain_resnet_forward.11} parent=1 // pred_check
      _
    $region7: #{domain_resnet_forward.11} parent=1 // pred_check_branch
      %12 = sbr.rel (0) target = $region9
    $region8: #{domain_resnet_forward.11} parent=1 // pred_region
      _
    $region9: #{domain_resnet_forward.11} parent=1 // pred_fallthru
      _
    // Predicated region
    $region10: #{domain_resnet_forward.11} parent=1 // pred_check
      _
    $region11: #{domain_resnet_forward.11} parent=1 // pred_check_branch
      %14 = sbr.rel (0) target = $region13
    $region12: #{domain_resnet_forward.11} parent=1 // pred_region
      _
    $region13: #{domain_resnet_forward.11} parent=1 // pred_fallthru
      _
    %v15 = vld [vmem:[%s0] sm:$0xf]
    %v16 = vld [vmem:[%s0 + $0x4] sm:$0xf]
    %v17 = vld [vmem:[%s0 + $0x8] sm:$0xf]
    %v18 = vld [vmem:[%s0 + $0xc] sm:$0xf]
    %v19 = vld [vmem:[%s0 + $0x10] sm:$0xf]
    %v20 = vld [vmem:[%s0 + $0x14] sm:$0xf]
    %v21 = vld [vmem:[%s0 + $0x18] sm:$0x1]
    %v22 = vld [vmem:[%s0 + $0x1c] sm:$0xf]
    %v23 = vld [vmem:[%s0 + $0x20] sm:$0xf]
    %v24 = vld [vmem:[%s0 + $0x24] sm:$0xf]
    %v25 = vld [vmem:[%s0 + $0x28] sm:$0xf]
    %v26 = vld [vmem:[%s0 + $0x2c] sm:$0xf]
    %v27 = vld [vmem:[%s0 + $0x30] sm:$0xf]
    %v28 = vld [vmem:[%s0 + $0x34] sm:$0x1]
    %v29 = vunpack.c.l.bf16 %v15
    %v30 = vunpack.c.l.bf16 %v16
    %v31 = vunpack.c.l.bf16 %v17
    %v32 = vunpack.c.l.bf16 %v18
    %v33 = vunpack.c.l.bf16 %v19
    %v34 = vunpack.c.l.bf16 %v20
    %v35 = vunpack.c.l.bf16 %v21
    %v36 = vunpack.c.l.bf16 %v22
    %v37 = vunpack.c.l.bf16 %v23
    %v38 = vunpack.c.l.bf16 %v24
    %v39 = vunpack.c.l.bf16 %v25
    %v40 = vunpack.c.l.bf16 %v26
    %v41 = vunpack.c.l.bf16 %v27
    %v42 = vunpack.c.l.bf16 %v28
    %v43 = vadd.f32 %v29, %v30
    %v44 = vadd.f32 %v43, %v31
    %v45 = vadd.f32 %v44, %v32
    %v46 = vadd.f32 %v45, %v33
    %v47 = vadd.f32 %v46, %v34
    %vm48 = vcmask 1040384
    %v49 = vsel %vm48, %v35, 0.0
    %v50 = vadd.f32 %v47, %v49
    %v51 = vrot.slane %v50, 4
    %v52 = vadd.f32 %v50, %v51
    %v53 = vrot.slane %v52, 2
    %v54 = vadd.f32 %v52, %v53
    %v55 = vrot.slane %v54, 1
    %v56 = vadd.f32 %v54, %v55
    %v57 = vadd.f32 %v36, %v37
    %v58 = vadd.f32 %v57, %v38
    %v59 = vadd.f32 %v58, %v39
    %v60 = vadd.f32 %v59, %v40
    %v61 = vadd.f32 %v60, %v41
    %v62 = vsel %vm48, %v42, 0.0
    %v63 = vadd.f32 %v61, %v62
    %v64 = vrot.slane %v63, 4
    %v65 = vadd.f32 %v63, %v64
    %v66 = vrot.slane %v65, 2
    %v67 = vadd.f32 %v65, %v66
    %v68 = vrot.slane %v67, 1
    %v69 = vadd.f32 %v67, %v68
    %v70 = vrcp.pop 49.0
    %v71 = vmul.f32 49.0, %v70
    %v72 = vsub.f32 1.0, %v71
    %v73 = vmul.f32 %v70, %v72
    %v74 = vadd.f32 %v70, %v73
    %vm75 = vweird.f32 %v70
    %v76 = vsel %vm75, %v70, %v74
    %v77 = vmul.f32 %v56, %v76
    %v78 = vmul.f32 %v69, %v76
    %v79 = vld [vmem:[%s1] sm:$0xff]
    %v80 = vld [vmem:[%s1 + $0x8] sm:$0xff]
    %v81 = vld [vmem:[%s1 + $0x10] sm:$0xff]
    %v82 = vld [vmem:[%s1 + $0x18] sm:$0xff]
    %v83 = vld [vmem:[%s1 + $0x20] sm:$0xff]
    %v84 = vld [vmem:[%s1 + $0x28] sm:$0xff]
    %v85 = vld [vmem:[%s1 + $0x30] sm:$0xff]
    %v86 = vld [vmem:[%s1 + $0x38] sm:$0xff]
    %v87 = vld [vmem:[%s1 + $0x40] sm:$0xff]
    %v88 = vld [vmem:[%s1 + $0x48] sm:$0xff]
    %v89 = vld [vmem:[%s1 + $0x50] sm:$0xff]
    %v90 = vld [vmem:[%s1 + $0x58] sm:$0xff]
    %v91 = vld [vmem:[%s1 + $0x60] sm:$0xff]
    %v92 = vld [vmem:[%s1 + $0x68] sm:$0xff]
    %v93 = vld [vmem:[%s1 + $0x70] sm:$0xff]
    %v94 = vld [vmem:[%s1 + $0x78] sm:$0xff]
    %v95 = vld [vmem:[%s2] sm:$0x1]
    %v97 = vperm.slane %v95, 0
    %vm101 = vcmask 1041409
    %v102 = vsel %vm101, %v78, %v77
    %104 = vmatpush.msra.mxu0 %v94
    %105 = vmatpush.msra.mxu0 %v93
    %106 = vmatpush.msra.mxu0 %v92
    %107 = vmatpush.msra.mxu0 %v91
    %108 = vmatpush.msra.mxu0 %v90
    %109 = vmatpush.msra.mxu0 %v89
    %110 = vmatpush.msra.mxu0 %v88
    %111 = vmatpush.msra.mxu0 %v87
    %112 = vmatpush.msra.mxu0 %v86
    %113 = vmatpush.msra.mxu0 %v85
    %114 = vmatpush.msra.mxu0 %v84
    %115 = vmatpush.msra.mxu0 %v83
    %116 = vmatpush.msra.mxu0 %v82
    %117 = vmatpush.msra.mxu0 %v81
    %118 = vmatpush.msra.mxu0 %v80
    %119 = vmatpush.msra.mxu0 %v79
    %120 = vmatmul.f32.gmra.mxu0 %v102
    %v121 = vpop.f32.mrf.mxu0
    %v122 = vadd.f32 %v97, %v121
    %123 = vdwg.mxu0
    %vm124 = vcmask 74752
    %125 = vst.msk [vmem:[#allocation2] sm:$0x3] %vm124, %v122
    // Predicated region
    $region14: #{domain_resnet_forward.11} parent=1 // pred_check
      _
    $region15: #{domain_resnet_forward.11} parent=1 // pred_check_branch
      %127 = sbr.rel (0) target = $region17
    $region16: #{domain_resnet_forward.11} parent=1 // pred_region
      %129 = vsyncadd [#allocation3], 0
      %s131 = sshll.u32 [#allocation2], 4
      %s132 = int_to_ptr.vmem [resolvable:$true] %s131
      %s133 = sshll.u32 %s3, 4
      %s134 = int_to_ptr.hbm [resolvable:$true] %s133
      %136 = dma.vmem_to_hbm [thread:$0]  %s132, 32, %s134, [#allocation3]
    $region17: #{domain_resnet_forward.11} parent=1 // pred_fallthru
      _
    // Predicated region
    $region18: #{domain_resnet_forward.11} parent=1 // pred_check
      _
    $region19: #{domain_resnet_forward.11} parent=1 // pred_check_branch
      %138 = sbr.rel (0) target = $region21
    $region20: #{domain_resnet_forward.11} parent=1 // pred_region
      %140 = dma.done [#allocation3], 32
    $region21: #{domain_resnet_forward.11} parent=1 // pred_fallthru
      _
    %141 = vsyncpa [#allocation3], 1

// kernel: domain_resnet_forward.10
$region0: #{domain_resnet_forward.10}
  #allocation0 [shape = 'u32[]', space=smem, size = 0x4, offset = 0x4, fixed_abs, tag = 'smem constant byte address 0x4 - core index']
  #allocation1 [shape = 'u32[72,128]{1,0:T(1,128)}', space=vmem, size = 0x9000, scoped, tag = 'internal scratch']
  %s0 = inlined_call_operand.vmem [shape: bf16[104,1152], index: 0, kind: input, shape index: {}]
  %s1 = inlined_call_operand.vmem [shape: bf16[1152,128], index: 1, kind: input, shape index: {}]
  %s2 = inlined_call_operand.vmem [shape: f32[1,128], index: 2, kind: input, shape index: {}]
  %s3 = inlined_call_operand.vmem [shape: bf16[104,64], index: 3, kind: input, shape index: {}]
  %s4 = inlined_call_operand.vmem [shape: bf16[64,128], index: 4, kind: input, shape index: {}]
  %s5 = inlined_call_operand.vmem [shape: f32[1,128], index: 5, kind: input, shape index: {}]
  %s6 = inlined_call_operand.vmem [shape: bf16[104,128], index: 6, kind: output, shape index: {}]
  %s7 = sld [smem:[#allocation0]]
  $region34: #{domain_resnet_forward.10} parent=0
    _
  %s9 = ssub.s32 1, %s7
  %s10 = scalar_select 0, %s9, %s7
  // Predicated region
  $region2: #{domain_resnet_forward.10} parent=0 // pred_check
    _
  $region3: #{domain_resnet_forward.10} parent=0 // pred_check_branch
    %12 = sbr.rel (0) target = $region5
  $region4: #{domain_resnet_forward.10} parent=0 // pred_region
    _
  $region5: #{domain_resnet_forward.10} parent=0 // pred_fallthru
    _
  // Predicated region
  $region6: #{domain_resnet_forward.10} parent=0 // pred_check
    _
  $region7: #{domain_resnet_forward.10} parent=0 // pred_check_branch
    %14 = sbr.rel (0) target = $region9
  $region8: #{domain_resnet_forward.10} parent=0 // pred_region
    _
  $region9: #{domain_resnet_forward.10} parent=0 // pred_fallthru
    _
  // Predicated region
  $region10: #{domain_resnet_forward.10} parent=0 // pred_check
    _
  $region11: #{domain_resnet_forward.10} parent=0 // pred_check_branch
    %16 = sbr.rel (0) target = $region13
  $region12: #{domain_resnet_forward.10} parent=0 // pred_region
    _
  $region13: #{domain_resnet_forward.10} parent=0 // pred_fallthru
    _
  // Predicated region
  $region14: #{domain_resnet_forward.10} parent=0 // pred_check
    _
  $region15: #{domain_resnet_forward.10} parent=0 // pred_check_branch
    %18 = sbr.rel (0) target = $region17
  $region16: #{domain_resnet_forward.10} parent=0 // pred_region
    _
  $region17: #{domain_resnet_forward.10} parent=0 // pred_fallthru
    _
  // Predicated region
  $region18: #{domain_resnet_forward.10} parent=0 // pred_check
    _
  $region19: #{domain_resnet_forward.10} parent=0 // pred_check_branch
    %20 = sbr.rel (0) target = $region21
  $region20: #{domain_resnet_forward.10} parent=0 // pred_region
    _
  $region21: #{domain_resnet_forward.10} parent=0 // pred_fallthru
    _
  // Predicated region
  $region22: #{domain_resnet_forward.10} parent=0 // pred_check
    _
  $region23: #{domain_resnet_forward.10} parent=0 // pred_check_branch
    %22 = sbr.rel (0) target = $region25
  $region24: #{domain_resnet_forward.10} parent=0 // pred_region
    _
  $region25: #{domain_resnet_forward.10} parent=0 // pred_fallthru
    _
  %v24 = vld [vmem:[%s0] sm:$0xff]
  %v25 = vld [vmem:[%s0 + $0x8] sm:$0xff]
  %v26 = vld [vmem:[%s0 + $0x10] sm:$0xff]
  %v27 = vld [vmem:[%s0 + $0x18] sm:$0xff]
  %v28 = vld [vmem:[%s0 + $0x20] sm:$0xf]
  %v29 = vld [vmem:[%s0 + $0x24] sm:$0xff]
  %v30 = vld [vmem:[%s0 + $0x2c] sm:$0xff]
  %v31 = vld [vmem:[%s0 + $0x34] sm:$0xff]
  %v32 = vld [vmem:[%s0 + $0x3c] sm:$0xff]
  %v33 = vld [vmem:[%s0 + $0x44] sm:$0xf]
  %v34 = vld [vmem:[%s0 + $0x48] sm:$0xff]
  %v35 = vld [vmem:[%s0 + $0x50] sm:$0xff]
  %v36 = vld [vmem:[%s0 + $0x58] sm:$0xff]
  %v37 = vld [vmem:[%s0 + $0x60] sm:$0xff]
  %v38 = vld [vmem:[%s0 + $0x68] sm:$0xf]
  %v39 = vld [vmem:[%s0 + $0x6c] sm:$0xff]
  %v40 = vld [vmem:[%s0 + $0x74] sm:$0xff]
  %v41 = vld [vmem:[%s0 + $0x7c] sm:$0xff]
  %v42 = vld [vmem:[%s0 + $0x84] sm:$0xff]
  %v43 = vld [vmem:[%s0 + $0x8c] sm:$0xf]
  %v44 = vld [vmem:[%s0 + $0x90] sm:$0xff]
  %v45 = vld [vmem:[%s0 + $0x98] sm:$0xff]
  %v46 = vld [vmem:[%s0 + $0xa0] sm:$0xff]
  %v47 = vld [vmem:[%s0 + $0xa8] sm:$0xff]
  %v48 = vld [vmem:[%s0 + $0xb0] sm:$0xf]
  %v49 = vld [vmem:[%s0 + $0xb4] sm:$0xff]
  %v50 = vld [vmem:[%s0 + $0xbc] sm:$0xff]
  %v51 = vld [vmem:[%s0 + $0xc4] sm:$0xff]
  %v52 = vld [vmem:[%s0 + $0xcc] sm:$0xff]
  %v53 = vld [vmem:[%s0 + $0xd4] sm:$0xf]
  %v54 = vld [vmem:[%s0 + $0xd8] sm:$0xff]
  %v55 = vld [vmem:[%s0 + $0xe0] sm:$0xff]
  %v56 = vld [vmem:[%s0 + $0xe8] sm:$0xff]
  %v57 = vld [vmem:[%s0 + $0xf0] sm:$0xff]
  %v58 = vld [vmem:[%s0 + $0xf8] sm:$0xf]
  %v59 = vld [vmem:[%s0 + $0xfc] sm:$0xff]
  %v60 = vld [vmem:[%s0 + $0x104] sm:$0xff]
  %v61 = vld [vmem:[%s0 + $0x10c] sm:$0xff]
  %v62 = vld [vmem:[%s0 + $0x114] sm:$0xff]
  %v63 = vld [vmem:[%s0 + $0x11c] sm:$0xf]
  %v64 = vld [vmem:[%s0 + $0x120] sm:$0xff]
  %v65 = vld [vmem:[%s0 + $0x128] sm:$0xff]
  %v66 = vld [vmem:[%s0 + $0x130] sm:$0xff]
  %v67 = vld [vmem:[%s0 + $0x138] sm:$0xff]
  %v68 = vld [vmem:[%s0 + $0x140] sm:$0xf]
  %v69 = vld [vmem:[%s0 + $0x144] sm:$0xff]
  %v70 = vld [vmem:[%s0 + $0x14c] sm:$0xff]
  %v71 = vld [vmem:[%s0 + $0x154] sm:$0xff]
  %v72 = vld [vmem:[%s0 + $0x15c] sm:$0xff]
  %v73 = vld [vmem:[%s0 + $0x164] sm:$0xf]
  %v74 = vld [vmem:[%s0 + $0x168] sm:$0xff]
  %v75 = vld [vmem:[%s0 + $0x170] sm:$0xff]
  %v76 = vld [vmem:[%s0 + $0x178] sm:$0xff]
  %v77 = vld [vmem:[%s0 + $0x180] sm:$0xff]
  %v78 = vld [vmem:[%s0 + $0x188] sm:$0xf]
  %v79 = vld [vmem:[%s0 + $0x18c] sm:$0xff]
  %v80 = vld [vmem:[%s0 + $0x194] sm:$0xff]
  %v81 = vld [vmem:[%s0 + $0x19c] sm:$0xff]
  %v82 = vld [vmem:[%s0 + $0x1a4] sm:$0xff]
  %v83 = vld [vmem:[%s0 + $0x1ac] sm:$0xf]
  %v84 = vld [vmem:[%s0 + $0x1b0] sm:$0xff]
  %v85 = vld [vmem:[%s0 + $0x1b8] sm:$0xff]
  %v86 = vld [vmem:[%s0 + $0x1c0] sm:$0xff]
  %v87 = vld [vmem:[%s0 + $0x1c8] sm:$0xff]
  %v88 = vld [vmem:[%s0 + $0x1d0] sm:$0xf]
  %v89 = vld [vmem:[%s1] sm:$0xf]
  %v90 = vld [vmem:[%s1 + $0x4] sm:$0xf]
  %v91 = vld [vmem:[%s1 + $0x8] sm:$0xf]
  %v92 = vld [vmem:[%s1 + $0xc] sm:$0xf]
  %v93 = vld [vmem:[%s1 + $0x10] sm:$0xf]
  %v94 = vld [vmem:[%s1 + $0x14] sm:$0xf]
  %v95 = vld [vmem:[%s1 + $0x18] sm:$0xf]
  %v96 = vld [vmem:[%s1 + $0x1c] sm:$0xf]
  %v97 = vld [vmem:[%s1 + $0x20] sm:$0xf]
  %v98 = vld [vmem:[%s1 + $0x24] sm:$0xf]
  %v99 = vld [vmem:[%s1 + $0x28] sm:$0xf]
  %v100 = vld [vmem:[%s1 + $0x2c] sm:$0xf]
  %v101 = vld [vmem:[%s1 + $0x30] sm:$0xf]
  %v102 = vld [vmem:[%s1 + $0x34] sm:$0xf]
  %v103 = vld [vmem:[%s1 + $0x38] sm:$0xf]
  %v104 = vld [vmem:[%s1 + $0x3c] sm:$0xf]
  %v105 = vld [vmem:[%s1 + $0x40] sm:$0xf]
  %v106 = vld [vmem:[%s1 + $0x44] sm:$0xf]
  %v107 = vld [vmem:[%s1 + $0x48] sm:$0xf]
  %v108 = vld [vmem:[%s1 + $0x4c] sm:$0xf]
  %v109 = vld [vmem:[%s1 + $0x50] sm:$0xf]
  %v110 = vld [vmem:[%s1 + $0x54] sm:$0xf]
  %v111 = vld [vmem:[%s1 + $0x58] sm:$0xf]
  %v112 = vld [vmem:[%s1 + $0x5c] sm:$0xf]
  %v113 = vld [vmem:[%s1 + $0x60] sm:$0xf]
  %v114 = vld [vmem:[%s1 + $0x64] sm:$0xf]
  %v115 = vld [vmem:[%s1 + $0x68] sm:$0xf]
  %v116 = vld [vmem:[%s1 + $0x6c] sm:$0xf]
  %v117 = vld [vmem:[%s1 + $0x70] sm:$0xf]
  %v118 = vld [vmem:[%s1 + $0x74] sm:$0xf]
  %v119 = vld [vmem:[%s1 + $0x78] sm:$0xf]
  %v120 = vld [vmem:[%s1 + $0x7c] sm:$0xf]
  %v121 = vld [vmem:[%s1 + $0x80] sm:$0xf]
  %v122 = vld [vmem:[%s1 + $0x84] sm:$0xf]
  %v123 = vld [vmem:[%s1 + $0x88] sm:$0xf]
  %v124 = vld [vmem:[%s1 + $0x8c] sm:$0xf]
  %v125 = vld [vmem:[%s1 + $0x90] sm:$0xf]
  %v126 = vld [vmem:[%s1 + $0x94] sm:$0xf]
  %v127 = vld [vmem:[%s1 + $0x98] sm:$0xf]
  %v128 = vld [vmem:[%s1 + $0x9c] sm:$0xf]
  %v129 = vld [vmem:[%s1 + $0xa0] sm:$0xf]
  %v130 = vld [vmem:[%s1 + $0xa4] sm:$0xf]
  %v131 = vld [vmem:[%s1 + $0xa8] sm:$0xf]
  %v132 = vld [vmem:[%s1 + $0xac] sm:$0xf]
  %v133 = vld [vmem:[%s1 + $0xb0] sm:$0xf]
  %v134 = vld [vmem:[%s1 + $0xb4] sm:$0xf]
  %v135 = vld [vmem:[%s1 + $0xb8] sm:$0xf]
  %v136 = vld [vmem:[%s1 + $0xbc] sm:$0xf]
  %v137 = vld [vmem:[%s1 + $0xc0] sm:$0xf]
  %v138 = vld [vmem:[%s1 + $0xc4] sm:$0xf]
  %v139 = vld [vmem:[%s1 + $0xc8] sm:$0xf]
  %v140 = vld [vmem:[%s1 + $0xcc] sm:$0xf]
  %v141 = vld [vmem:[%s1 + $0xd0] sm:$0xf]
  %v142 = vld [vmem:[%s1 + $0xd4] sm:$0xf]
  %v143 = vld [vmem:[%s1 + $0xd8] sm:$0xf]
  %v144 = vld [vmem:[%s1 + $0xdc] sm:$0xf]
  %v145 = vld [vmem:[%s1 + $0xe0] sm:$0xf]
  %v146 = vld [vmem:[%s1 + $0xe4] sm:$0xf]
  %v147 = vld [vmem:[%s1 + $0xe8] sm:$0xf]
  %v148 = vld [vmem:[%s1 + $0xec] sm:$0xf]
  %v149 = vld [vmem:[%s1 + $0xf0] sm:$0xf]
  %v150 = vld [vmem:[%s1 + $0xf4] sm:$0xf]
  %v151 = vld [vmem:[%s1 + $0xf8] sm:$0xf]
  %v152 = vld [vmem:[%s1 + $0xfc] sm:$0xf]
  %v153 = vld [vmem:[%s1 + $0x100] sm:$0xf]
  %v154 = vld [vmem:[%s1 + $0x104] sm:$0xf]
  %v155 = vld [vmem:[%s1 + $0x108] sm:$0xf]
  %v156 = vld [vmem:[%s1 + $0x10c] sm:$0xf]
  %v157 = vld [vmem:[%s1 + $0x110] sm:$0xf]
  %v158 = vld [vmem:[%s1 + $0x114] sm:$0xf]
  %v159 = vld [vmem:[%s1 + $0x118] sm:$0xf]
  %v160 = vld [vmem:[%s1 + $0x11c] sm:$0xf]
  %v161 = vld [vmem:[%s1 + $0x120] sm:$0xf]
  %v162 = vld [vmem:[%s1 + $0x124] sm:$0xf]
  %v163 = vld [vmem:[%s1 + $0x128] sm:$0xf]
  %v164 = vld [vmem:[%s1 + $0x12c] sm:$0xf]
  %v165 = vld [vmem:[%s1 + $0x130] sm:$0xf]
  %v166 = vld [vmem:[%s1 + $0x134] sm:$0xf]
  %v167 = vld [vmem:[%s1 + $0x138] sm:$0xf]
  %v168 = vld [vmem:[%s1 + $0x13c] sm:$0xf]
  %v169 = vld [vmem:[%s1 + $0x140] sm:$0xf]
  %v170 = vld [vmem:[%s1 + $0x144] sm:$0xf]
  %v171 = vld [vmem:[%s1 + $0x148] sm:$0xf]
  %v172 = vld [vmem:[%s1 + $0x14c] sm:$0xf]
  %v173 = vld [vmem:[%s1 + $0x150] sm:$0xf]
  %v174 = vld [vmem:[%s1 + $0x154] sm:$0xf]
  %v175 = vld [vmem:[%s1 + $0x158] sm:$0xf]
  %v176 = vld [vmem:[%s1 + $0x15c] sm:$0xf]
  %v177 = vld [vmem:[%s1 + $0x160] sm:$0xf]
  %v178 = vld [vmem:[%s1 + $0x164] sm:$0xf]
  %v179 = vld [vmem:[%s1 + $0x168] sm:$0xf]
  %v180 = vld [vmem:[%s1 + $0x16c] sm:$0xf]
  %v181 = vld [vmem:[%s1 + $0x170] sm:$0xf]
  %v182 = vld [vmem:[%s1 + $0x174] sm:$0xf]
  %v183 = vld [vmem:[%s1 + $0x178] sm:$0xf]
  %v184 = vld [vmem:[%s1 + $0x17c] sm:$0xf]
  %v185 = vld [vmem:[%s1 + $0x180] sm:$0xf]
  %v186 = vld [vmem:[%s1 + $0x184] sm:$0xf]
  %v187 = vld [vmem:[%s1 + $0x188] sm:$0xf]
  %v188 = vld [vmem:[%s1 + $0x18c] sm:$0xf]
  %v189 = vld [vmem:[%s1 + $0x190] sm:$0xf]
  %v190 = vld [vmem:[%s1 + $0x194] sm:$0xf]
  %v191 = vld [vmem:[%s1 + $0x198] sm:$0xf]
  %v192 = vld [vmem:[%s1 + $0x19c] sm:$0xf]
  %v193 = vld [vmem:[%s1 + $0x1a0] sm:$0xf]
  %v194 = vld [vmem:[%s1 + $0x1a4] sm:$0xf]
  %v195 = vld [vmem:[%s1 + $0x1a8] sm:$0xf]
  %v196 = vld [vmem:[%s1 + $0x1ac] sm:$0xf]
  %v197 = vld [vmem:[%s1 + $0x1b0] sm:$0xf]
  %v198 = vld [vmem:[%s1 + $0x1b4] sm:$0xf]
  %v199 = vld [vmem:[%s1 + $0x1b8] sm:$0xf]
  %v200 = vld [vmem:[%s1 + $0x1bc] sm:$0xf]
  %v201 = vld [vmem:[%s1 + $0x1c0] sm:$0xf]
  %v202 = vld [vmem:[%s1 + $0x1c4] sm:$0xf]
  %v203 = vld [vmem:[%s1 + $0x1c8] sm:$0xf]
  %v204 = vld [vmem:[%s1 + $0x1cc] sm:$0xf]
  %v205 = vld [vmem:[%s1 + $0x1d0] sm:$0xf]
  %v206 = vld [vmem:[%s1 + $0x1d4] sm:$0xf]
  %v207 = vld [vmem:[%s1 + $0x1d8] sm:$0xf]
  %v208 = vld [vmem:[%s1 + $0x1dc] sm:$0xf]
  %v209 = vld [vmem:[%s1 + $0x1e0] sm:$0xf]
  %v210 = vld [vmem:[%s1 + $0x1e4] sm:$0xf]
  %v211 = vld [vmem:[%s1 + $0x1e8] sm:$0xf]
  %v212 = vld [vmem:[%s1 + $0x1ec] sm:$0xf]
  %v213 = vld [vmem:[%s1 + $0x1f0] sm:$0xf]
  %v214 = vld [vmem:[%s1 + $0x1f4] sm:$0xf]
  %v215 = vld [vmem:[%s1 + $0x1f8] sm:$0xf]
  %v216 = vld [vmem:[%s1 + $0x1fc] sm:$0xf]
  %v217 = vld [vmem:[%s1 + $0x200] sm:$0xf]
  %v218 = vld [vmem:[%s1 + $0x204] sm:$0xf]
  %v219 = vld [vmem:[%s1 + $0x208] sm:$0xf]
  %v220 = vld [vmem:[%s1 + $0x20c] sm:$0xf]
  %v221 = vld [vmem:[%s1 + $0x210] sm:$0xf]
  %v222 = vld [vmem:[%s1 + $0x214] sm:$0xf]
  %v223 = vld [vmem:[%s1 + $0x218] sm:$0xf]
  %v224 = vld [vmem:[%s1 + $0x21c] sm:$0xf]
  %v225 = vld [vmem:[%s1 + $0x220] sm:$0xf]
  %v226 = vld [vmem:[%s1 + $0x224] sm:$0xf]
  %v227 = vld [vmem:[%s1 + $0x228] sm:$0xf]
  %v228 = vld [vmem:[%s1 + $0x22c] sm:$0xf]
  %v229 = vld [vmem:[%s1 + $0x230] sm:$0xf]
  %v230 = vld [vmem:[%s1 + $0x234] sm:$0xf]
  %v231 = vld [vmem:[%s1 + $0x238] sm:$0xf]
  %v232 = vld [vmem:[%s1 + $0x23c] sm:$0xf]
  %v233 = vld [vmem:[%s3] sm:$0xf]
  %v234 = vld [vmem:[%s3 + $0x4] sm:$0xf]
  %v235 = vld [vmem:[%s3 + $0x8] sm:$0xf]
  %v236 = vld [vmem:[%s3 + $0xc] sm:$0xf]
  %v237 = vld [vmem:[%s3 + $0x10] sm:$0xf]
  %v238 = vld [vmem:[%s3 + $0x14] sm:$0xf]
  %v239 = vld [vmem:[%s3 + $0x18] sm:$0xf]
  %v240 = vld [vmem:[%s3 + $0x1c] sm:$0xf]
  %v241 = vld [vmem:[%s3 + $0x20] sm:$0xf]
  %v242 = vld [vmem:[%s3 + $0x24] sm:$0xf]
  %v243 = vld [vmem:[%s3 + $0x28] sm:$0xf]
  %v244 = vld [vmem:[%s3 + $0x2c] sm:$0xf]
  %v245 = vld [vmem:[%s3 + $0x30] sm:$0xf]
  %v246 = vld [vmem:[%s4] sm:$0xf]
  %v247 = vld [vmem:[%s4 + $0x4] sm:$0xf]
  %v248 = vld [vmem:[%s4 + $0x8] sm:$0xf]
  %v249 = vld [vmem:[%s4 + $0xc] sm:$0xf]
  %v250 = vld [vmem:[%s4 + $0x10] sm:$0xf]
  %v251 = vld [vmem:[%s4 + $0x14] sm:$0xf]
  %v252 = vld [vmem:[%s4 + $0x18] sm:$0xf]
  %v253 = vld [vmem:[%s4 + $0x1c] sm:$0xf]
  %v267 = vunpack.c.l.b16 %v233
  %v268 = vunpack.c.l.b16 %v234
  %v269 = vunpack.c.l.b16 %v235
  %v270 = vunpack.c.l.b16 %v236
  %v271 = vunpack.c.l.b16 %v237
  %v272 = vunpack.c.l.b16 %v238
  %v273 = vunpack.c.l.b16 %v239
  %v274 = vunpack.c.l.b16 %v240
  %v275 = vunpack.c.l.b16 %v241
  %v276 = vunpack.c.l.b16 %v242
  %v277 = vunpack.c.l.b16 %v243
  %v278 = vunpack.c.l.b16 %v244
  %v279 = vunpack.c.l.b16 %v245
  %v280 = vpack.c.b16 %v268, %v267
  %v281 = vpack.c.b16 %v270, %v269
  %v282 = vpack.c.b16 %v272, %v271
  %v283 = vpack.c.b16 %v274, %v273
  %v284 = vpack.c.b16 %v276, %v275
  %v285 = vpack.c.b16 %v278, %v277
  %v286 = vpack.c.b16 %v279, %v279
  %v295 = vunpack.c.l.b16 %v246
  %v296 = vunpack.c.l.b16 %v247
  %v297 = vunpack.c.l.b16 %v248
  %v298 = vunpack.c.l.b16 %v249
  %v299 = vunpack.c.l.b16 %v250
  %v300 = vunpack.c.l.b16 %v251
  %v301 = vunpack.c.l.b16 %v252
  %v302 = vunpack.c.l.b16 %v253
  %v303 = vpack.c.b16 %v296, %v295
  %v304 = vpack.c.b16 %v298, %v297
  %v305 = vpack.c.b16 %v300, %v299
  %v306 = vpack.c.b16 %v302, %v301
  %vm311 = vcmask 523264
  %v313 = vsel %vm311, %v280, 0
  %v316 = vsel %vm311, %v281, 0
  %v319 = vsel %vm311, %v282, 0
  %v322 = vsel %vm311, %v283, 0
  %v325 = vsel %vm311, %v284, 0
  %v328 = vsel %vm311, %v285, 0
  %v331 = vsel %vm311, %v286, 0
  %333 = vmatpush.bf16.msra.mxu0 0
  %334 = vmatpush.bf16.msra.mxu0 0
  %335 = vmatpush.bf16.msra.mxu0 0
  %336 = vmatpush.bf16.msra.mxu0 0
  %337 = vmatpush.bf16.msra.mxu0 %v306
  %338 = vmatpush.bf16.msra.mxu0 %v305
  %339 = vmatpush.bf16.msra.mxu0 %v304
  %340 = vmatpush.bf16.msra.mxu0 %v303
  %341 = vmatmul.bf16.gmra.mxu0 %v313
  %v342 = vpop.f32.mrf.mxu0
  %v343 = vadd.f32 0.0, %v342
  %v344 = vpop.f32.mrf.mxu0
  %v345 = vadd.f32 0.0, %v344
  %346 = vmatmul.bf16.gmra.mxu0 %v316
  %v347 = vpop.f32.mrf.mxu0
  %v348 = vadd.f32 0.0, %v347
  %v349 = vpop.f32.mrf.mxu0
  %v350 = vadd.f32 0.0, %v349
  %351 = vmatmul.bf16.gmra.mxu0 %v319
  %v352 = vpop.f32.mrf.mxu0
  %v353 = vadd.f32 0.0, %v352
  %v354 = vpop.f32.mrf.mxu0
  %v355 = vadd.f32 0.0, %v354
  %356 = vmatmul.bf16.gmra.mxu0 %v322
  %v357 = vpop.f32.mrf.mxu0
  %v358 = vadd.f32 0.0, %v357
  %v359 = vpop.f32.mrf.mxu0
  %v360 = vadd.f32 0.0, %v359
  %361 = vmatmul.bf16.gmra.mxu0 %v325
  %v362 = vpop.f32.mrf.mxu0
  %v363 = vadd.f32 0.0, %v362
  %v364 = vpop.f32.mrf.mxu0
  %v365 = vadd.f32 0.0, %v364
  %366 = vmatmul.bf16.gmra.mxu0 %v328
  %v367 = vpop.f32.mrf.mxu0
  %v368 = vadd.f32 0.0, %v367
  %v369 = vpop.f32.mrf.mxu0
  %v370 = vadd.f32 0.0, %v369
  %371 = vmatmul.bf16.gmra.mxu0 %v331
  %v372 = vpop.f32.mrf.mxu0
  %v373 = vadd.f32 0.0, %v372
  %v374 = vpop.f32.mrf.mxu0
  %375 = vdwg.mxu0
  %v441 = vunpack.c.l.b16 %v24
  %v442 = vunpack.c.h.b16 %v24
  %v443 = vunpack.c.l.b16 %v25
  %v444 = vunpack.c.h.b16 %v25
  %v445 = vunpack.c.l.b16 %v26
  %v446 = vunpack.c.h.b16 %v26
  %v447 = vunpack.c.l.b16 %v27
  %v448 = vunpack.c.h.b16 %v27
  %v449 = vunpack.c.l.b16 %v28
  %v450 = vunpack.c.l.b16 %v29
  %v451 = vunpack.c.h.b16 %v29
  %v452 = vunpack.c.l.b16 %v30
  %v453 = vunpack.c.h.b16 %v30
  %v454 = vunpack.c.l.b16 %v31
  %v455 = vunpack.c.h.b16 %v31
  %v456 = vunpack.c.l.b16 %v32
  %v457 = vunpack.c.h.b16 %v32
  %v458 = vunpack.c.l.b16 %v33
  %v459 = vunpack.c.l.b16 %v34
  %v460 = vunpack.c.h.b16 %v34
  %v461 = vunpack.c.l.b16 %v35
  %v462 = vunpack.c.h.b16 %v35
  %v463 = vunpack.c.l.b16 %v36
  %v464 = vunpack.c.h.b16 %v36
  %v465 = vunpack.c.l.b16 %v37
  %v466 = vunpack.c.h.b16 %v37
  %v467 = vunpack.c.l.b16 %v38
  %v468 = vunpack.c.l.b16 %v39
  %v469 = vunpack.c.h.b16 %v39
  %v470 = vunpack.c.l.b16 %v40
  %v471 = vunpack.c.h.b16 %v40
  %v472 = vunpack.c.l.b16 %v41
  %v473 = vunpack.c.h.b16 %v41
  %v474 = vunpack.c.l.b16 %v42
  %v475 = vunpack.c.h.b16 %v42
  %v476 = vunpack.c.l.b16 %v43
  %v477 = vunpack.c.l.b16 %v44
  %v478 = vunpack.c.h.b16 %v44
  %v479 = vunpack.c.l.b16 %v45
  %v480 = vunpack.c.h.b16 %v45
  %v481 = vunpack.c.l.b16 %v46
  %v482 = vunpack.c.h.b16 %v46
  %v483 = vunpack.c.l.b16 %v47
  %v484 = vunpack.c.h.b16 %v47
  %v485 = vunpack.c.l.b16 %v48
  %v486 = vunpack.c.l.b16 %v49
  %v487 = vunpack.c.h.b16 %v49
  %v488 = vunpack.c.l.b16 %v50
  %v489 = vunpack.c.h.b16 %v50
  %v490 = vunpack.c.l.b16 %v51
  %v491 = vunpack.c.h.b16 %v51
  %v492 = vunpack.c.l.b16 %v52
  %v493 = vunpack.c.h.b16 %v52
  %v494 = vunpack.c.l.b16 %v53
  %v495 = vunpack.c.l.b16 %v54
  %v496 = vunpack.c.h.b16 %v54
  %v497 = vunpack.c.l.b16 %v55
  %v498 = vunpack.c.h.b16 %v55
  %v499 = vunpack.c.l.b16 %v56
  %v500 = vunpack.c.h.b16 %v56
  %v501 = vunpack.c.l.b16 %v57
  %v502 = vunpack.c.h.b16 %v57
  %v503 = vunpack.c.l.b16 %v58
  %v504 = vunpack.c.l.b16 %v59
  %v505 = vunpack.c.h.b16 %v59
  %v506 = vunpack.c.l.b16 %v60
  %v507 = vunpack.c.h.b16 %v60
  %v508 = vunpack.c.l.b16 %v61
  %v509 = vunpack.c.h.b16 %v61
  %v510 = vunpack.c.l.b16 %v62
  %v511 = vunpack.c.h.b16 %v62
  %v512 = vunpack.c.l.b16 %v63
  %v513 = vunpack.c.l.b16 %v64
  %v514 = vunpack.c.h.b16 %v64
  %v515 = vunpack.c.l.b16 %v65
  %v516 = vunpack.c.h.b16 %v65
  %v517 = vunpack.c.l.b16 %v66
  %v518 = vunpack.c.h.b16 %v66
  %v519 = vunpack.c.l.b16 %v67
  %v520 = vunpack.c.h.b16 %v67
  %v521 = vunpack.c.l.b16 %v68
  %v522 = vunpack.c.l.b16 %v69
  %v523 = vunpack.c.h.b16 %v69
  %v524 = vunpack.c.l.b16 %v70
  %v525 = vunpack.c.h.b16 %v70
  %v526 = vunpack.c.l.b16 %v71
  %v527 = vunpack.c.h.b16 %v71
  %v528 = vunpack.c.l.b16 %v72
  %v529 = vunpack.c.h.b16 %v72
  %v530 = vunpack.c.l.b16 %v73
  %v531 = vunpack.c.l.b16 %v74
  %v532 = vunpack.c.h.b16 %v74
  %v533 = vunpack.c.l.b16 %v75
  %v534 = vunpack.c.h.b16 %v75
  %v535 = vunpack.c.l.b16 %v76
  %v536 = vunpack.c.h.b16 %v76
  %v537 = vunpack.c.l.b16 %v77
  %v538 = vunpack.c.h.b16 %v77
  %v539 = vunpack.c.l.b16 %v78
  %v540 = vunpack.c.l.b16 %v79
  %v541 = vunpack.c.h.b16 %v79
  %v542 = vunpack.c.l.b16 %v80
  %v543 = vunpack.c.h.b16 %v80
  %v544 = vunpack.c.l.b16 %v81
  %v545 = vunpack.c.h.b16 %v81
  %v546 = vunpack.c.l.b16 %v82
  %v547 = vunpack.c.h.b16 %v82
  %v548 = vunpack.c.l.b16 %v83
  %v549 = vunpack.c.l.b16 %v84
  %v550 = vunpack.c.h.b16 %v84
  %v551 = vunpack.c.l.b16 %v85
  %v552 = vunpack.c.h.b16 %v85
  %v553 = vunpack.c.l.b16 %v86
  %v554 = vunpack.c.h.b16 %v86
  %v555 = vunpack.c.l.b16 %v87
  %v556 = vunpack.c.h.b16 %v87
  %v557 = vunpack.c.l.b16 %v88
  %v558 = vpack.c.b16 %v450, %v441
  %v559 = vpack.c.b16 %v451, %v442
  %v560 = vpack.c.b16 %v452, %v443
  %v561 = vpack.c.b16 %v453, %v444
  %v562 = vpack.c.b16 %v454, %v445
  %v563 = vpack.c.b16 %v455, %v446
  %v564 = vpack.c.b16 %v456, %v447
  %v565 = vpack.c.b16 %v457, %v448
  %v566 = vpack.c.b16 %v458, %v449
  %v567 = vpack.c.b16 %v468, %v459
  %v568 = vpack.c.b16 %v469, %v460
  %v569 = vpack.c.b16 %v470, %v461
  %v570 = vpack.c.b16 %v471, %v462
  %v571 = vpack.c.b16 %v472, %v463
  %v572 = vpack.c.b16 %v473, %v464
  %v573 = vpack.c.b16 %v474, %v465
  %v574 = vpack.c.b16 %v475, %v466
  %v575 = vpack.c.b16 %v476, %v467
  %v576 = vpack.c.b16 %v486, %v477
  %v577 = vpack.c.b16 %v487, %v478
  %v578 = vpack.c.b16 %v488, %v479
  %v579 = vpack.c.b16 %v489, %v480
  %v580 = vpack.c.b16 %v490, %v481
  %v581 = vpack.c.b16 %v491, %v482
  %v582 = vpack.c.b16 %v492, %v483
  %v583 = vpack.c.b16 %v493, %v484
  %v584 = vpack.c.b16 %v494, %v485
  %v585 = vpack.c.b16 %v504, %v495
  %v586 = vpack.c.b16 %v505, %v496
  %v587 = vpack.c.b16 %v506, %v497
  %v588 = vpack.c.b16 %v507, %v498
  %v589 = vpack.c.b16 %v508, %v499
  %v590 = vpack.c.b16 %v509, %v500
  %v591 = vpack.c.b16 %v510, %v501
  %v592 = vpack.c.b16 %v511, %v502
  %v593 = vpack.c.b16 %v512, %v503
  %v594 = vpack.c.b16 %v522, %v513
  %v595 = vpack.c.b16 %v523, %v514
  %v596 = vpack.c.b16 %v524, %v515
  %v597 = vpack.c.b16 %v525, %v516
  %v598 = vpack.c.b16 %v526, %v517
  %v599 = vpack.c.b16 %v527, %v518
  %v600 = vpack.c.b16 %v528, %v519
  %v601 = vpack.c.b16 %v529, %v520
  %v602 = vpack.c.b16 %v530, %v521
  %v603 = vpack.c.b16 %v540, %v531
  %v604 = vpack.c.b16 %v541, %v532
  %v605 = vpack.c.b16 %v542, %v533
  %v606 = vpack.c.b16 %v543, %v534
  %v607 = vpack.c.b16 %v544, %v535
  %v608 = vpack.c.b16 %v545, %v536
  %v609 = vpack.c.b16 %v546, %v537
  %v610 = vpack.c.b16 %v547, %v538
  %v611 = vpack.c.b16 %v548, %v539
  %v612 = vpack.c.b16 %v549, %v549
  %v613 = vpack.c.b16 %v550, %v550
  %v614 = vpack.c.b16 %v551, %v551
  %v615 = vpack.c.b16 %v552, %v552
  %v616 = vpack.c.b16 %v553, %v553
  %v617 = vpack.c.b16 %v554, %v554
  %v618 = vpack.c.b16 %v555, %v555
  %v619 = vpack.c.b16 %v556, %v556
  %v620 = vpack.c.b16 %v557, %v557
  %v828 = vunpack.c.l.b16 %v89
  %v829 = vunpack.c.l.b16 %v90
  %v830 = vunpack.c.l.b16 %v91
  %v831 = vunpack.c.l.b16 %v92
  %v832 = vunpack.c.l.b16 %v93
  %v833 = vunpack.c.l.b16 %v94
  %v834 = vunpack.c.l.b16 %v95
  %v835 = vunpack.c.l.b16 %v96
  %v836 = vunpack.c.l.b16 %v97
  %v837 = vunpack.c.l.b16 %v98
  %v838 = vunpack.c.l.b16 %v99
  %v839 = vunpack.c.l.b16 %v100
  %v840 = vunpack.c.l.b16 %v101
  %v841 = vunpack.c.l.b16 %v102
  %v842 = vunpack.c.l.b16 %v103
  %v843 = vunpack.c.l.b16 %v104
  %v844 = vunpack.c.l.b16 %v105
  %v845 = vunpack.c.l.b16 %v106
  %v846 = vunpack.c.l.b16 %v107
  %v847 = vunpack.c.l.b16 %v108
  %v848 = vunpack.c.l.b16 %v109
  %v849 = vunpack.c.l.b16 %v110
  %v850 = vunpack.c.l.b16 %v111
  %v851 = vunpack.c.l.b16 %v112
  %v852 = vunpack.c.l.b16 %v113
  %v853 = vunpack.c.l.b16 %v114
  %v854 = vunpack.c.l.b16 %v115
  %v855 = vunpack.c.l.b16 %v116
  %v856 = vunpack.c.l.b16 %v117
  %v857 = vunpack.c.l.b16 %v118
  %v858 = vunpack.c.l.b16 %v119
  %v859 = vunpack.c.l.b16 %v120
  %v860 = vunpack.c.l.b16 %v121
  %v861 = vunpack.c.l.b16 %v122
  %v862 = vunpack.c.l.b16 %v123
  %v863 = vunpack.c.l.b16 %v124
  %v864 = vunpack.c.l.b16 %v125
  %v865 = vunpack.c.l.b16 %v126
  %v866 = vunpack.c.l.b16 %v127
  %v867 = vunpack.c.l.b16 %v128
  %v868 = vunpack.c.l.b16 %v129
  %v869 = vunpack.c.l.b16 %v130
  %v870 = vunpack.c.l.b16 %v131
  %v871 = vunpack.c.l.b16 %v132
  %v872 = vunpack.c.l.b16 %v133
  %v873 = vunpack.c.l.b16 %v134
  %v874 = vunpack.c.l.b16 %v135
  %v875 = vunpack.c.l.b16 %v136
  %v876 = vunpack.c.l.b16 %v137
  %v877 = vunpack.c.l.b16 %v138
  %v878 = vunpack.c.l.b16 %v139
  %v879 = vunpack.c.l.b16 %v140
  %v880 = vunpack.c.l.b16 %v141
  %v881 = vunpack.c.l.b16 %v142
  %v882 = vunpack.c.l.b16 %v143
  %v883 = vunpack.c.l.b16 %v144
  %v884 = vunpack.c.l.b16 %v145
  %v885 = vunpack.c.l.b16 %v146
  %v886 = vunpack.c.l.b16 %v147
  %v887 = vunpack.c.l.b16 %v148
  %v888 = vunpack.c.l.b16 %v149
  %v889 = vunpack.c.l.b16 %v150
  %v890 = vunpack.c.l.b16 %v151
  %v891 = vunpack.c.l.b16 %v152
  %v892 = vunpack.c.l.b16 %v153
  %v893 = vunpack.c.l.b16 %v154
  %v894 = vunpack.c.l.b16 %v155
  %v895 = vunpack.c.l.b16 %v156
  %v896 = vunpack.c.l.b16 %v157
  %v897 = vunpack.c.l.b16 %v158
  %v898 = vunpack.c.l.b16 %v159
  %v899 = vunpack.c.l.b16 %v160
  %v900 = vunpack.c.l.b16 %v161
  %v901 = vunpack.c.l.b16 %v162
  %v902 = vunpack.c.l.b16 %v163
  %v903 = vunpack.c.l.b16 %v164
  %v904 = vunpack.c.l.b16 %v165
  %v905 = vunpack.c.l.b16 %v166
  %v906 = vunpack.c.l.b16 %v167
  %v907 = vunpack.c.l.b16 %v168
  %v908 = vunpack.c.l.b16 %v169
  %v909 = vunpack.c.l.b16 %v170
  %v910 = vunpack.c.l.b16 %v171
  %v911 = vunpack.c.l.b16 %v172
  %v912 = vunpack.c.l.b16 %v173
  %v913 = vunpack.c.l.b16 %v174
  %v914 = vunpack.c.l.b16 %v175
  %v915 = vunpack.c.l.b16 %v176
  %v916 = vunpack.c.l.b16 %v177
  %v917 = vunpack.c.l.b16 %v178
  %v918 = vunpack.c.l.b16 %v179
  %v919 = vunpack.c.l.b16 %v180
  %v920 = vunpack.c.l.b16 %v181
  %v921 = vunpack.c.l.b16 %v182
  %v922 = vunpack.c.l.b16 %v183
  %v923 = vunpack.c.l.b16 %v184
  %v924 = vunpack.c.l.b16 %v185
  %v925 = vunpack.c.l.b16 %v186
  %v926 = vunpack.c.l.b16 %v187
  %v927 = vunpack.c.l.b16 %v188
  %v928 = vunpack.c.l.b16 %v189
  %v929 = vunpack.c.l.b16 %v190
  %v930 = vunpack.c.l.b16 %v191
  %v931 = vunpack.c.l.b16 %v192
  %v932 = vunpack.c.l.b16 %v193
  %v933 = vunpack.c.l.b16 %v194
  %v934 = vunpack.c.l.b16 %v195
  %v935 = vunpack.c.l.b16 %v196
  %v936 = vunpack.c.l.b16 %v197
  %v937 = vunpack.c.l.b16 %v198
  %v938 = vunpack.c.l.b16 %v199
  %v939 = vunpack.c.l.b16 %v200
  %v940 = vunpack.c.l.b16 %v201
  %v941 = vunpack.c.l.b16 %v202
  %v942 = vunpack.c.l.b16 %v203
  %v943 = vunpack.c.l.b16 %v204
  %v944 = vunpack.c.l.b16 %v205
  %v945 = vunpack.c.l.b16 %v206
  %v946 = vunpack.c.l.b16 %v207
  %v947 = vunpack.c.l.b16 %v208
  %v948 = vunpack.c.l.b16 %v209
  %v949 = vunpack.c.l.b16 %v210
  %v950 = vunpack.c.l.b16 %v211
  %v951 = vunpack.c.l.b16 %v212
  %v952 = vunpack.c.l.b16 %v213
  %v953 = vunpack.c.l.b16 %v214
  %v954 = vunpack.c.l.b16 %v215
  %v955 = vunpack.c.l.b16 %v216
  %v956 = vunpack.c.l.b16 %v217
  %v957 = vunpack.c.l.b16 %v218
  %v958 = vunpack.c.l.b16 %v219
  %v959 = vunpack.c.l.b16 %v220
  %v960 = vunpack.c.l.b16 %v221
  %v961 = vunpack.c.l.b16 %v222
  %v962 = vunpack.c.l.b16 %v223
  %v963 = vunpack.c.l.b16 %v224
  %v964 = vunpack.c.l.b16 %v225
  %v965 = vunpack.c.l.b16 %v226
  %v966 = vunpack.c.l.b16 %v227
  %v967 = vunpack.c.l.b16 %v228
  %v968 = vunpack.c.l.b16 %v229
  %v969 = vunpack.c.l.b16 %v230
  %v970 = vunpack.c.l.b16 %v231
  %v971 = vunpack.c.l.b16 %v232
  %v972 = vpack.c.b16 %v829, %v828
  %v973 = vpack.c.b16 %v831, %v830
  %v974 = vpack.c.b16 %v833, %v832
  %v975 = vpack.c.b16 %v835, %v834
  %v976 = vpack.c.b16 %v837, %v836
  %v977 = vpack.c.b16 %v839, %v838
  %v978 = vpack.c.b16 %v841, %v840
  %v979 = vpack.c.b16 %v843, %v842
  %v980 = vpack.c.b16 %v845, %v844
  %v981 = vpack.c.b16 %v847, %v846
  %v982 = vpack.c.b16 %v849, %v848
  %v983 = vpack.c.b16 %v851, %v850
  %v984 = vpack.c.b16 %v853, %v852
  %v985 = vpack.c.b16 %v855, %v854
  %v986 = vpack.c.b16 %v857, %v856
  %v987 = vpack.c.b16 %v859, %v858
  %v988 = vpack.c.b16 %v861, %v860
  %v989 = vpack.c.b16 %v863, %v862
  %v990 = vpack.c.b16 %v865, %v864
  %v991 = vpack.c.b16 %v867, %v866
  %v992 = vpack.c.b16 %v869, %v868
  %v993 = vpack.c.b16 %v871, %v870
  %v994 = vpack.c.b16 %v873, %v872
  %v995 = vpack.c.b16 %v875, %v874
  %v996 = vpack.c.b16 %v877, %v876
  %v997 = vpack.c.b16 %v879, %v878
  %v998 = vpack.c.b16 %v881, %v880
  %v999 = vpack.c.b16 %v883, %v882
  %v1000 = vpack.c.b16 %v885, %v884
  %v1001 = vpack.c.b16 %v887, %v886
  %v1002 = vpack.c.b16 %v889, %v888
  %v1003 = vpack.c.b16 %v891, %v890
  %v1004 = vpack.c.b16 %v893, %v892
  %v1005 = vpack.c.b16 %v895, %v894
  %v1006 = vpack.c.b16 %v897, %v896
  %v1007 = vpack.c.b16 %v899, %v898
  %v1008 = vpack.c.b16 %v901, %v900
  %v1009 = vpack.c.b16 %v903, %v902
  %v1010 = vpack.c.b16 %v905, %v904
  %v1011 = vpack.c.b16 %v907, %v906
  %v1012 = vpack.c.b16 %v909, %v908
  %v1013 = vpack.c.b16 %v911, %v910
  %v1014 = vpack.c.b16 %v913, %v912
  %v1015 = vpack.c.b16 %v915, %v914
  %v1016 = vpack.c.b16 %v917, %v916
  %v1017 = vpack.c.b16 %v919, %v918
  %v1018 = vpack.c.b16 %v921, %v920
  %v1019 = vpack.c.b16 %v923, %v922
  %v1020 = vpack.c.b16 %v925, %v924
  %v1021 = vpack.c.b16 %v927, %v926
  %v1022 = vpack.c.b16 %v929, %v928
  %v1023 = vpack.c.b16 %v931, %v930
  %v1024 = vpack.c.b16 %v933, %v932
  %v1025 = vpack.c.b16 %v935, %v934
  %v1026 = vpack.c.b16 %v937, %v936
  %v1027 = vpack.c.b16 %v939, %v938
  %v1028 = vpack.c.b16 %v941, %v940
  %v1029 = vpack.c.b16 %v943, %v942
  %v1030 = vpack.c.b16 %v945, %v944
  %v1031 = vpack.c.b16 %v947, %v946
  %v1032 = vpack.c.b16 %v949, %v948
  %v1033 = vpack.c.b16 %v951, %v950
  %v1034 = vpack.c.b16 %v953, %v952
  %v1035 = vpack.c.b16 %v955, %v954
  %v1036 = vpack.c.b16 %v957, %v956
  %v1037 = vpack.c.b16 %v959, %v958
  %v1038 = vpack.c.b16 %v961, %v960
  %v1039 = vpack.c.b16 %v963, %v962
  %v1040 = vpack.c.b16 %v965, %v964
  %v1041 = vpack.c.b16 %v967, %v966
  %v1042 = vpack.c.b16 %v969, %v968
  %v1043 = vpack.c.b16 %v971, %v970
  %1116 = vmatpush.bf16.msra.mxu0 %v979
  %1117 = vmatpush.bf16.msra.mxu0 %v978
  %1118 = vmatpush.bf16.msra.mxu0 %v977
  %1119 = vmatpush.bf16.msra.mxu0 %v976
  %1120 = vmatpush.bf16.msra.mxu0 %v975
  %1121 = vmatpush.bf16.msra.mxu0 %v974
  %1122 = vmatpush.bf16.msra.mxu0 %v973
  %1123 = vmatpush.bf16.msra.mxu0 %v972
  %1124 = vmatmul.bf16.gmra.mxu0 %v558
  %v1125 = vpop.f32.mrf.mxu0
  %v1126 = vadd.f32 %v343, %v1125
  %v1127 = vpop.f32.mrf.mxu0
  %v1128 = vadd.f32 %v345, %v1127
  %1129 = vmatmul.bf16.gmra.mxu0 %v567
  %v1130 = vpop.f32.mrf.mxu0
  %v1131 = vadd.f32 %v348, %v1130
  %v1132 = vpop.f32.mrf.mxu0
  %v1133 = vadd.f32 %v350, %v1132
  %1134 = vmatmul.bf16.gmra.mxu0 %v576
  %v1135 = vpop.f32.mrf.mxu0
  %v1136 = vadd.f32 %v353, %v1135
  %v1137 = vpop.f32.mrf.mxu0
  %v1138 = vadd.f32 %v355, %v1137
  %1139 = vmatmul.bf16.gmra.mxu0 %v585
  %v1140 = vpop.f32.mrf.mxu0
  %v1141 = vadd.f32 %v358, %v1140
  %v1142 = vpop.f32.mrf.mxu0
  %v1143 = vadd.f32 %v360, %v1142
  %1144 = vmatmul.bf16.gmra.mxu0 %v594
  %v1145 = vpop.f32.mrf.mxu0
  %v1146 = vadd.f32 %v363, %v1145
  %v1147 = vpop.f32.mrf.mxu0
  %v1148 = vadd.f32 %v365, %v1147
  %1149 = vmatmul.bf16.gmra.mxu0 %v603
  %v1150 = vpop.f32.mrf.mxu0
  %v1151 = vadd.f32 %v368, %v1150
  %v1152 = vpop.f32.mrf.mxu0
  %v1153 = vadd.f32 %v370, %v1152
  %1154 = vmatmul.bf16.gmra.mxu0 %v612
  %v1155 = vpop.f32.mrf.mxu0
  %v1156 = vadd.f32 %v373, %v1155
  %v1157 = vpop.f32.mrf.mxu0
  %1158 = vdwg.mxu0
  %1159 = vmatpush.bf16.msra.mxu0 %v987
  %1160 = vmatpush.bf16.msra.mxu0 %v986
  %1161 = vmatpush.bf16.msra.mxu0 %v985
  %1162 = vmatpush.bf16.msra.mxu0 %v984
  %1163 = vmatpush.bf16.msra.mxu0 %v983
  %1164 = vmatpush.bf16.msra.mxu0 %v982
  %1165 = vmatpush.bf16.msra.mxu0 %v981
  %1166 = vmatpush.bf16.msra.mxu0 %v980
  %1167 = vmatmul.bf16.gmra.mxu0 %v559
  %v1168 = vpop.f32.mrf.mxu0
  %v1169 = vadd.f32 %v1126, %v1168
  %v1170 = vpop.f32.mrf.mxu0
  %v1171 = vadd.f32 %v1128, %v1170
  %1172 = vmatmul.bf16.gmra.mxu0 %v568
  %v1173 = vpop.f32.mrf.mxu0
  %v1174 = vadd.f32 %v1131, %v1173
  %v1175 = vpop.f32.mrf.mxu0
  %v1176 = vadd.f32 %v1133, %v1175
  %1177 = vmatmul.bf16.gmra.mxu0 %v577
  %v1178 = vpop.f32.mrf.mxu0
  %v1179 = vadd.f32 %v1136, %v1178
  %v1180 = vpop.f32.mrf.mxu0
  %v1181 = vadd.f32 %v1138, %v1180
  %1182 = vmatmul.bf16.gmra.mxu0 %v586
  %v1183 = vpop.f32.mrf.mxu0
  %v1184 = vadd.f32 %v1141, %v1183
  %v1185 = vpop.f32.mrf.mxu0
  %v1186 = vadd.f32 %v1143, %v1185
  %1187 = vmatmul.bf16.gmra.mxu0 %v595
  %v1188 = vpop.f32.mrf.mxu0
  %v1189 = vadd.f32 %v1146, %v1188
  %v1190 = vpop.f32.mrf.mxu0
  %v1191 = vadd.f32 %v1148, %v1190
  %1192 = vmatmul.bf16.gmra.mxu0 %v604
  %v1193 = vpop.f32.mrf.mxu0
  %v1194 = vadd.f32 %v1151, %v1193
  %v1195 = vpop.f32.mrf.mxu0
  %v1196 = vadd.f32 %v1153, %v1195
  %1197 = vmatmul.bf16.gmra.mxu0 %v613
  %v1198 = vpop.f32.mrf.mxu0
  %v1199 = vadd.f32 %v1156, %v1198
  %v1200 = vpop.f32.mrf.mxu0
  %1201 = vdwg.mxu0
  %1202 = vmatpush.bf16.msra.mxu0 %v995
  %1203 = vmatpush.bf16.msra.mxu0 %v994
  %1204 = vmatpush.bf16.msra.mxu0 %v993
  %1205 = vmatpush.bf16.msra.mxu0 %v992
  %1206 = vmatpush.bf16.msra.mxu0 %v991
  %1207 = vmatpush.bf16.msra.mxu0 %v990
  %1208 = vmatpush.bf16.msra.mxu0 %v989
  %1209 = vmatpush.bf16.msra.mxu0 %v988
  %1210 = vmatmul.bf16.gmra.mxu0 %v560
  %v1211 = vpop.f32.mrf.mxu0
  %v1212 = vadd.f32 %v1169, %v1211
  %v1213 = vpop.f32.mrf.mxu0
  %v1214 = vadd.f32 %v1171, %v1213
  %1215 = vmatmul.bf16.gmra.mxu0 %v569
  %v1216 = vpop.f32.mrf.mxu0
  %v1217 = vadd.f32 %v1174, %v1216
  %v1218 = vpop.f32.mrf.mxu0
  %v1219 = vadd.f32 %v1176, %v1218
  %1220 = vmatmul.bf16.gmra.mxu0 %v578
  %v1221 = vpop.f32.mrf.mxu0
  %v1222 = vadd.f32 %v1179, %v1221
  %v1223 = vpop.f32.mrf.mxu0
  %v1224 = vadd.f32 %v1181, %v1223
  %1225 = vmatmul.bf16.gmra.mxu0 %v587
  %v1226 = vpop.f32.mrf.mxu0
  %v1227 = vadd.f32 %v1184, %v1226
  %v1228 = vpop.f32.mrf.mxu0
  %v1229 = vadd.f32 %v1186, %v1228
  %1230 = vmatmul.bf16.gmra.mxu0 %v596
  %v1231 = vpop.f32.mrf.mxu0
  %v1232 = vadd.f32 %v1189, %v1231
  %v1233 = vpop.f32.mrf.mxu0
  %v1234 = vadd.f32 %v1191, %v1233
  %1235 = vmatmul.bf16.gmra.mxu0 %v605
  %v1236 = vpop.f32.mrf.mxu0
  %v1237 = vadd.f32 %v1194, %v1236
  %v1238 = vpop.f32.mrf.mxu0
  %v1239 = vadd.f32 %v1196, %v1238
  %1240 = vmatmul.bf16.gmra.mxu0 %v614
  %v1241 = vpop.f32.mrf.mxu0
  %v1242 = vadd.f32 %v1199, %v1241
  %v1243 = vpop.f32.mrf.mxu0
  %1244 = vdwg.mxu0
  %1245 = vmatpush.bf16.msra.mxu0 %v1003
  %1246 = vmatpush.bf16.msra.mxu0 %v1002
  %1247 = vmatpush.bf16.msra.mxu0 %v1001
  %1248 = vmatpush.bf16.msra.mxu0 %v1000
  %1249 = vmatpush.bf16.msra.mxu0 %v999
  %1250 = vmatpush.bf16.msra.mxu0 %v998
  %1251 = vmatpush.bf16.msra.mxu0 %v997
  %1252 = vmatpush.bf16.msra.mxu0 %v996
  %1253 = vmatmul.bf16.gmra.mxu0 %v561
  %v1254 = vpop.f32.mrf.mxu0
  %v1255 = vadd.f32 %v1212, %v1254
  %v1256 = vpop.f32.mrf.mxu0
  %v1257 = vadd.f32 %v1214, %v1256
  %1258 = vmatmul.bf16.gmra.mxu0 %v570
  %v1259 = vpop.f32.mrf.mxu0
  %v1260 = vadd.f32 %v1217, %v1259
  %v1261 = vpop.f32.mrf.mxu0
  %v1262 = vadd.f32 %v1219, %v1261
  %1263 = vmatmul.bf16.gmra.mxu0 %v579
  %v1264 = vpop.f32.mrf.mxu0
  %v1265 = vadd.f32 %v1222, %v1264
  %v1266 = vpop.f32.mrf.mxu0
  %v1267 = vadd.f32 %v1224, %v1266
  %1268 = vmatmul.bf16.gmra.mxu0 %v588
  %v1269 = vpop.f32.mrf.mxu0
  %v1270 = vadd.f32 %v1227, %v1269
  %v1271 = vpop.f32.mrf.mxu0
  %v1272 = vadd.f32 %v1229, %v1271
  %1273 = vmatmul.bf16.gmra.mxu0 %v597
  %v1274 = vpop.f32.mrf.mxu0
  %v1275 = vadd.f32 %v1232, %v1274
  %v1276 = vpop.f32.mrf.mxu0
  %v1277 = vadd.f32 %v1234, %v1276
  %1278 = vmatmul.bf16.gmra.mxu0 %v606
  %v1279 = vpop.f32.mrf.mxu0
  %v1280 = vadd.f32 %v1237, %v1279
  %v1281 = vpop.f32.mrf.mxu0
  %v1282 = vadd.f32 %v1239, %v1281
  %1283 = vmatmul.bf16.gmra.mxu0 %v615
  %v1284 = vpop.f32.mrf.mxu0
  %v1285 = vadd.f32 %v1242, %v1284
  %v1286 = vpop.f32.mrf.mxu0
  %1287 = vdwg.mxu0
  %1288 = vmatpush.bf16.msra.mxu0 %v1011
  %1289 = vmatpush.bf16.msra.mxu0 %v1010
  %1290 = vmatpush.bf16.msra.mxu0 %v1009
  %1291 = vmatpush.bf16.msra.mxu0 %v1008
  %1292 = vmatpush.bf16.msra.mxu0 %v1007
  %1293 = vmatpush.bf16.msra.mxu0 %v1006
  %1294 = vmatpush.bf16.msra.mxu0 %v1005
  %1295 = vmatpush.bf16.msra.mxu0 %v1004
  %1296 = vmatmul.bf16.gmra.mxu0 %v562
  %v1297 = vpop.f32.mrf.mxu0
  %v1298 = vadd.f32 %v1255, %v1297
  %v1299 = vpop.f32.mrf.mxu0
  %v1300 = vadd.f32 %v1257, %v1299
  %1301 = vmatmul.bf16.gmra.mxu0 %v571
  %v1302 = vpop.f32.mrf.mxu0
  %v1303 = vadd.f32 %v1260, %v1302
  %v1304 = vpop.f32.mrf.mxu0
  %v1305 = vadd.f32 %v1262, %v1304
  %1306 = vmatmul.bf16.gmra.mxu0 %v580
  %v1307 = vpop.f32.mrf.mxu0
  %v1308 = vadd.f32 %v1265, %v1307
  %v1309 = vpop.f32.mrf.mxu0
  %v1310 = vadd.f32 %v1267, %v1309
  %1311 = vmatmul.bf16.gmra.mxu0 %v589
  %v1312 = vpop.f32.mrf.mxu0
  %v1313 = vadd.f32 %v1270, %v1312
  %v1314 = vpop.f32.mrf.mxu0
  %v1315 = vadd.f32 %v1272, %v1314
  %1316 = vmatmul.bf16.gmra.mxu0 %v598
  %v1317 = vpop.f32.mrf.mxu0
  %v1318 = vadd.f32 %v1275, %v1317
  %v1319 = vpop.f32.mrf.mxu0
  %v1320 = vadd.f32 %v1277, %v1319
  %1321 = vmatmul.bf16.gmra.mxu0 %v607
  %v1322 = vpop.f32.mrf.mxu0
  %v1323 = vadd.f32 %v1280, %v1322
  %v1324 = vpop.f32.mrf.mxu0
  %v1325 = vadd.f32 %v1282, %v1324
  %1326 = vmatmul.bf16.gmra.mxu0 %v616
  %v1327 = vpop.f32.mrf.mxu0
  %v1328 = vadd.f32 %v1285, %v1327
  %v1329 = vpop.f32.mrf.mxu0
  %1330 = vdwg.mxu0
  %1331 = vmatpush.bf16.msra.mxu0 %v1019
  %1332 = vmatpush.bf16.msra.mxu0 %v1018
  %1333 = vmatpush.bf16.msra.mxu0 %v1017
  %1334 = vmatpush.bf16.msra.mxu0 %v1016
  %1335 = vmatpush.bf16.msra.mxu0 %v1015
  %1336 = vmatpush.bf16.msra.mxu0 %v1014
  %1337 = vmatpush.bf16.msra.mxu0 %v1013
  %1338 = vmatpush.bf16.msra.mxu0 %v1012
  %1339 = vmatmul.bf16.gmra.mxu0 %v563
  %v1340 = vpop.f32.mrf.mxu0
  %v1341 = vadd.f32 %v1298, %v1340
  %v1342 = vpop.f32.mrf.mxu0
  %v1343 = vadd.f32 %v1300, %v1342
  %1344 = vmatmul.bf16.gmra.mxu0 %v572
  %v1345 = vpop.f32.mrf.mxu0
  %v1346 = vadd.f32 %v1303, %v1345
  %v1347 = vpop.f32.mrf.mxu0
  %v1348 = vadd.f32 %v1305, %v1347
  %1349 = vmatmul.bf16.gmra.mxu0 %v581
  %v1350 = vpop.f32.mrf.mxu0
  %v1351 = vadd.f32 %v1308, %v1350
  %v1352 = vpop.f32.mrf.mxu0
  %v1353 = vadd.f32 %v1310, %v1352
  %1354 = vmatmul.bf16.gmra.mxu0 %v590
  %v1355 = vpop.f32.mrf.mxu0
  %v1356 = vadd.f32 %v1313, %v1355
  %v1357 = vpop.f32.mrf.mxu0
  %v1358 = vadd.f32 %v1315, %v1357
  %1359 = vmatmul.bf16.gmra.mxu0 %v599
  %v1360 = vpop.f32.mrf.mxu0
  %v1361 = vadd.f32 %v1318, %v1360
  %v1362 = vpop.f32.mrf.mxu0
  %v1363 = vadd.f32 %v1320, %v1362
  %1364 = vmatmul.bf16.gmra.mxu0 %v608
  %v1365 = vpop.f32.mrf.mxu0
  %v1366 = vadd.f32 %v1323, %v1365
  %v1367 = vpop.f32.mrf.mxu0
  %v1368 = vadd.f32 %v1325, %v1367
  %1369 = vmatmul.bf16.gmra.mxu0 %v617
  %v1370 = vpop.f32.mrf.mxu0
  %v1371 = vadd.f32 %v1328, %v1370
  %v1372 = vpop.f32.mrf.mxu0
  %1373 = vdwg.mxu0
  %1374 = vmatpush.bf16.msra.mxu0 %v1027
  %1375 = vmatpush.bf16.msra.mxu0 %v1026
  %1376 = vmatpush.bf16.msra.mxu0 %v1025
  %1377 = vmatpush.bf16.msra.mxu0 %v1024
  %1378 = vmatpush.bf16.msra.mxu0 %v1023
  %1379 = vmatpush.bf16.msra.mxu0 %v1022
  %1380 = vmatpush.bf16.msra.mxu0 %v1021
  %1381 = vmatpush.bf16.msra.mxu0 %v1020
  %1382 = vmatmul.bf16.gmra.mxu0 %v564
  %v1383 = vpop.f32.mrf.mxu0
  %v1384 = vadd.f32 %v1341, %v1383
  %v1385 = vpop.f32.mrf.mxu0
  %v1386 = vadd.f32 %v1343, %v1385
  %1387 = vmatmul.bf16.gmra.mxu0 %v573
  %v1388 = vpop.f32.mrf.mxu0
  %v1389 = vadd.f32 %v1346, %v1388
  %v1390 = vpop.f32.mrf.mxu0
  %v1391 = vadd.f32 %v1348, %v1390
  %1392 = vmatmul.bf16.gmra.mxu0 %v582
  %v1393 = vpop.f32.mrf.mxu0
  %v1394 = vadd.f32 %v1351, %v1393
  %v1395 = vpop.f32.mrf.mxu0
  %v1396 = vadd.f32 %v1353, %v1395
  %1397 = vmatmul.bf16.gmra.mxu0 %v591
  %v1398 = vpop.f32.mrf.mxu0
  %v1399 = vadd.f32 %v1356, %v1398
  %v1400 = vpop.f32.mrf.mxu0
  %v1401 = vadd.f32 %v1358, %v1400
  %1402 = vmatmul.bf16.gmra.mxu0 %v600
  %v1403 = vpop.f32.mrf.mxu0
  %v1404 = vadd.f32 %v1361, %v1403
  %v1405 = vpop.f32.mrf.mxu0
  %v1406 = vadd.f32 %v1363, %v1405
  %1407 = vmatmul.bf16.gmra.mxu0 %v609
  %v1408 = vpop.f32.mrf.mxu0
  %v1409 = vadd.f32 %v1366, %v1408
  %v1410 = vpop.f32.mrf.mxu0
  %v1411 = vadd.f32 %v1368, %v1410
  %1412 = vmatmul.bf16.gmra.mxu0 %v618
  %v1413 = vpop.f32.mrf.mxu0
  %v1414 = vadd.f32 %v1371, %v1413
  %v1415 = vpop.f32.mrf.mxu0
  %1416 = vdwg.mxu0
  %1417 = vmatpush.bf16.msra.mxu0 %v1035
  %1418 = vmatpush.bf16.msra.mxu0 %v1034
  %1419 = vmatpush.bf16.msra.mxu0 %v1033
  %1420 = vmatpush.bf16.msra.mxu0 %v1032
  %1421 = vmatpush.bf16.msra.mxu0 %v1031
  %1422 = vmatpush.bf16.msra.mxu0 %v1030
  %1423 = vmatpush.bf16.msra.mxu0 %v1029
  %1424 = vmatpush.bf16.msra.mxu0 %v1028
  %1425 = vmatmul.bf16.gmra.mxu0 %v565
  %v1426 = vpop.f32.mrf.mxu0
  %v1427 = vadd.f32 %v1384, %v1426
  %v1428 = vpop.f32.mrf.mxu0
  %v1429 = vadd.f32 %v1386, %v1428
  %1430 = vmatmul.bf16.gmra.mxu0 %v574
  %v1431 = vpop.f32.mrf.mxu0
  %v1432 = vadd.f32 %v1389, %v1431
  %v1433 = vpop.f32.mrf.mxu0
  %v1434 = vadd.f32 %v1391, %v1433
  %1435 = vmatmul.bf16.gmra.mxu0 %v583
  %v1436 = vpop.f32.mrf.mxu0
  %v1437 = vadd.f32 %v1394, %v1436
  %v1438 = vpop.f32.mrf.mxu0
  %v1439 = vadd.f32 %v1396, %v1438
  %1440 = vmatmul.bf16.gmra.mxu0 %v592
  %v1441 = vpop.f32.mrf.mxu0
  %v1442 = vadd.f32 %v1399, %v1441
  %v1443 = vpop.f32.mrf.mxu0
  %v1444 = vadd.f32 %v1401, %v1443
  %1445 = vmatmul.bf16.gmra.mxu0 %v601
  %v1446 = vpop.f32.mrf.mxu0
  %v1447 = vadd.f32 %v1404, %v1446
  %v1448 = vpop.f32.mrf.mxu0
  %v1449 = vadd.f32 %v1406, %v1448
  %1450 = vmatmul.bf16.gmra.mxu0 %v610
  %v1451 = vpop.f32.mrf.mxu0
  %v1452 = vadd.f32 %v1409, %v1451
  %v1453 = vpop.f32.mrf.mxu0
  %v1454 = vadd.f32 %v1411, %v1453
  %1455 = vmatmul.bf16.gmra.mxu0 %v619
  %v1456 = vpop.f32.mrf.mxu0
  %v1457 = vadd.f32 %v1414, %v1456
  %v1458 = vpop.f32.mrf.mxu0
  %1459 = vdwg.mxu0
  %1460 = vmatpush.bf16.msra.mxu0 %v1043
  %1461 = vmatpush.bf16.msra.mxu0 %v1042
  %1462 = vmatpush.bf16.msra.mxu0 %v1041
  %1463 = vmatpush.bf16.msra.mxu0 %v1040
  %1464 = vmatpush.bf16.msra.mxu0 %v1039
  %1465 = vmatpush.bf16.msra.mxu0 %v1038
  %1466 = vmatpush.bf16.msra.mxu0 %v1037
  %1467 = vmatpush.bf16.msra.mxu0 %v1036
  %1468 = vmatmul.bf16.gmra.mxu0 %v566
  %v1469 = vpop.f32.mrf.mxu0
  %v1470 = vadd.f32 %v1427, %v1469
  %v1471 = vpop.f32.mrf.mxu0
  %v1472 = vadd.f32 %v1429, %v1471
  %1473 = vmatmul.bf16.gmra.mxu0 %v575
  %v1474 = vpop.f32.mrf.mxu0
  %v1475 = vadd.f32 %v1432, %v1474
  %v1476 = vpop.f32.mrf.mxu0
  %v1477 = vadd.f32 %v1434, %v1476
  %1478 = vmatmul.bf16.gmra.mxu0 %v584
  %v1479 = vpop.f32.mrf.mxu0
  %v1480 = vadd.f32 %v1437, %v1479
  %v1481 = vpop.f32.mrf.mxu0
  %v1482 = vadd.f32 %v1439, %v1481
  %1483 = vmatmul.bf16.gmra.mxu0 %v593
  %v1484 = vpop.f32.mrf.mxu0
  %v1485 = vadd.f32 %v1442, %v1484
  %v1486 = vpop.f32.mrf.mxu0
  %v1487 = vadd.f32 %v1444, %v1486
  %1488 = vmatmul.bf16.gmra.mxu0 %v602
  %v1489 = vpop.f32.mrf.mxu0
  %v1490 = vadd.f32 %v1447, %v1489
  %v1491 = vpop.f32.mrf.mxu0
  %v1492 = vadd.f32 %v1449, %v1491
  %1493 = vmatmul.bf16.gmra.mxu0 %v611
  %v1494 = vpop.f32.mrf.mxu0
  %v1495 = vadd.f32 %v1452, %v1494
  %v1496 = vpop.f32.mrf.mxu0
  %v1497 = vadd.f32 %v1454, %v1496
  %1498 = vmatmul.bf16.gmra.mxu0 %v620
  %v1499 = vpop.f32.mrf.mxu0
  %v1500 = vadd.f32 %v1457, %v1499
  %v1501 = vpop.f32.mrf.mxu0
  %1502 = vdwg.mxu0
  %v1503 = vld [vmem:[%s2] sm:$0x1]
  %v1505 = vperm.slane %v1503, 0
  %v1507 = vadd.f32 %v1470, %v1505
  %v1508 = vadd.f32 %v1472, %v1505
  %v1509 = vadd.f32 %v1475, %v1505
  %v1510 = vadd.f32 %v1477, %v1505
  %v1511 = vadd.f32 %v1480, %v1505
  %v1512 = vadd.f32 %v1482, %v1505
  %v1513 = vadd.f32 %v1485, %v1505
  %v1514 = vadd.f32 %v1487, %v1505
  %v1515 = vadd.f32 %v1490, %v1505
  %v1516 = vadd.f32 %v1492, %v1505
  %v1517 = vadd.f32 %v1495, %v1505
  %v1518 = vadd.f32 %v1497, %v1505
  %v1519 = vadd.f32 %v1500, %v1505
  %v1520 = vld [vmem:[%s5] sm:$0x1]
  %v1522 = vperm.slane %v1520, 0
  %v1524 = vadd.f32 %v1507, %v1522
  %v1525 = vadd.f32 %v1508, %v1522
  %v1526 = vadd.f32 %v1509, %v1522
  %v1527 = vadd.f32 %v1510, %v1522
  %v1528 = vadd.f32 %v1511, %v1522
  %v1529 = vadd.f32 %v1512, %v1522
  %v1530 = vadd.f32 %v1513, %v1522
  %v1531 = vadd.f32 %v1514, %v1522
  %v1532 = vadd.f32 %v1515, %v1522
  %v1533 = vadd.f32 %v1516, %v1522
  %v1534 = vadd.f32 %v1517, %v1522
  %v1535 = vadd.f32 %v1518, %v1522
  %v1536 = vadd.f32 %v1519, %v1522
  %v1537 = vmax.f32 %v1524, 0.0
  %v1538 = vmax.f32 %v1525, 0.0
  %v1539 = vmax.f32 %v1526, 0.0
  %v1540 = vmax.f32 %v1527, 0.0
  %v1541 = vmax.f32 %v1528, 0.0
  %v1542 = vmax.f32 %v1529, 0.0
  %v1543 = vmax.f32 %v1530, 0.0
  %v1544 = vmax.f32 %v1531, 0.0
  %v1545 = vmax.f32 %v1532, 0.0
  %v1546 = vmax.f32 %v1533, 0.0
  %v1547 = vmax.f32 %v1534, 0.0
  %v1548 = vmax.f32 %v1535, 0.0
  %v1549 = vmax.f32 %v1536, 0.0
  %v1550 = vpack.c.bf16 %v1537, %v1537
  %v1551 = vpack.c.bf16 %v1538, %v1538
  %v1552 = vpack.c.bf16 %v1539, %v1539
  %v1553 = vpack.c.bf16 %v1540, %v1540
  %v1554 = vpack.c.bf16 %v1541, %v1541
  %v1555 = vpack.c.bf16 %v1542, %v1542
  %v1556 = vpack.c.bf16 %v1543, %v1543
  %v1557 = vpack.c.bf16 %v1544, %v1544
  %v1558 = vpack.c.bf16 %v1545, %v1545
  %v1559 = vpack.c.bf16 %v1546, %v1546
  %v1560 = vpack.c.bf16 %v1547, %v1547
  %v1561 = vpack.c.bf16 %v1548, %v1548
  %v1562 = vpack.c.bf16 %v1549, %v1549
  %1563 = vst [vmem:[%s6] sm:$0xf] %v1550
  %1564 = vst [vmem:[%s6 + $0x4] sm:$0xf] %v1551
  %1565 = vst [vmem:[%s6 + $0x8] sm:$0xf] %v1552
  %1566 = vst [vmem:[%s6 + $0xc] sm:$0xf] %v1553
  %1567 = vst [vmem:[%s6 + $0x10] sm:$0xf] %v1554
  %1568 = vst [vmem:[%s6 + $0x14] sm:$0xf] %v1555
  %1569 = vst [vmem:[%s6 + $0x18] sm:$0xf] %v1556
  %1570 = vst [vmem:[%s6 + $0x1c] sm:$0xf] %v1557
  %1571 = vst [vmem:[%s6 + $0x20] sm:$0xf] %v1558
  %1572 = vst [vmem:[%s6 + $0x24] sm:$0xf] %v1559
  %1573 = vst [vmem:[%s6 + $0x28] sm:$0xf] %v1560
  %1574 = vst [vmem:[%s6 + $0x2c] sm:$0xf] %v1561
  %1575 = vst [vmem:[%s6 + $0x30] sm:$0xf] %v1562
  // Predicated region
  $region26: #{domain_resnet_forward.10} parent=0 // pred_check
    _
  $region27: #{domain_resnet_forward.10} parent=0 // pred_check_branch
    %1577 = sbr.rel (0) target = $region29
  $region28: #{domain_resnet_forward.10} parent=0 // pred_region
    _
  $region29: #{domain_resnet_forward.10} parent=0 // pred_fallthru
    _
  // Predicated region
  $region30: #{domain_resnet_forward.10} parent=0 // pred_check
    _
  $region31: #{domain_resnet_forward.10} parent=0 // pred_check_branch
    %1579 = sbr.rel (0) target = $region33
  $region32: #{domain_resnet_forward.10} parent=0 // pred_region
    _
  $region33: #{domain_resnet_forward.10} parent=0 // pred_fallthru
    _

</llo_original>
